<compile_context>
chip_gen: v7x
topology: tpu7x:2x2x1
jax: 0.10.0
libtpu: 0.0.40
codegen_flags: <defaults>
</compile_context>

<pallas_src>
import jax
import jax.numpy as jnp
from jax import lax
from jax.experimental import pallas as pl
from jax.experimental.pallas import tpu as pltpu

# ----- model / example sizes (small, consistent with the module's forward) -----
B, T = 2, 8                # batch, caption length
VOCAB = 64                 # vocab_size
EMBED = 32                 # embed_size
HIDDEN = 32                # hidden_size
NUM_LAYERS = 2             # nn.LSTM num_layers (fixed to 2 here)
BP = 8                     # batch padded to a full sublane group inside the kernel


def caption_kernel(cap_ref,               # SMEM (B, T) int32 caption token ids
                   feat_ref,              # (B, E)   image features
                   wfeat_ref, bf0_ref,    # (E, 4H), (1, 4H): feature-side folded layer-0 input weights/bias
                   table_ref,             # (V, 4H): embedding folded through reduce_dim + wih0
                   whh0_ref,              # (H, 4H): layer-0 recurrent weights
                   wih1_ref, whh1_ref, b1_ref,   # (H, 4H), (H, 4H), (1, 4H): layer-1 weights/bias
                   wout_ref, bout_ref,    # (H, V), (1, V): output linear
                   out_ref,               # (B, T, V) logits
                   gin_ref):              # VMEM scratch (T*BP, 4H): hoisted layer-0 input gates
    H = HIDDEN
    f32 = jnp.float32

    # ---- prologue (off the recurrence critical path) -------------------------------
    # Feature-side gate contribution + all folded biases: one tiny matmul, reused by
    # every timestep (features are constant over time).
    feat_g = (jnp.dot(feat_ref[...], wfeat_ref[...], preferred_element_type=f32)
              + bf0_ref[...])                                          # (B, 4H)

    # Build layer-0 input-side gate pre-activations for ALL timesteps.
    # Row t*BP + b holds the gates for (timestep t, batch row b); padded rows stay 0,
    # so padded h/c stay exactly 0 through the whole recurrence.
    gin_ref[...] = jnp.zeros((T * BP, 4 * H), f32)
    for t in range(T):
        for b in range(B):
            tok = cap_ref[b, t]                                        # SMEM scalar read
            row = t * BP + b
            # in-kernel "embedding gather": one dynamic row load from the folded table
            gin_ref[row:row + 1, :] = (table_ref[pl.ds(tok, 1), :]
                                       + feat_g[b:b + 1, :])

    whh0 = whh0_ref[...]
    wih1 = wih1_ref[...]
    whh1 = whh1_ref[...]
    b1 = b1_ref[...]

    def cell(gates, c):
        # Activations at full 128-lane width (one sigmoid + one tanh EUP call),
        # then static lane slices in PyTorch gate order [i | f | g | o].
        sig = jax.nn.sigmoid(gates)
        th = jnp.tanh(gates)
        i_g = sig[:, 0 * H:1 * H]
        f_g = sig[:, 1 * H:2 * H]
        g_g = th[:, 2 * H:3 * H]
        o_g = sig[:, 3 * H:4 * H]
        c_new = f_g * c + i_g * g_g
        h_new = o_g * jnp.tanh(c_new)
        return h_new, c_new

    zeros = jnp.zeros((BP, H), f32)
    h0, c0, h1, c1 = zeros, zeros, zeros, zeros
    h1_steps = []

    # ---- sequential recurrence: statically unrolled, full-sublane (8-row) tiles ----
    for t in range(T):
        # layer 0: input part precomputed; only the recurrent dot is on the serial path
        g0 = gin_ref[t * BP:(t + 1) * BP, :] + jnp.dot(h0, whh0,
                                                       preferred_element_type=f32)
        h0, c0 = cell(g0, c0)
        # layer 1: two independent dots accumulated in f32 (no lane concat on the
        # critical path; on v7x this maps to MRB in-place accumulation)
        g1 = (jnp.dot(h0, wih1, preferred_element_type=f32)
              + jnp.dot(h1, whh1, preferred_element_type=f32) + b1)
        h1, c1 = cell(g1, c1)
        h1_steps.append(h1)            # register-resident; no per-step VMEM store

    # ---- epilogue: output projection directly in (B, T, V) order -------------------
    wout = wout_ref[...]
    bout = bout_ref[...]
    for b in range(B):
        h_b = jnp.concatenate([h1_steps[t][b:b + 1, :] for t in range(T)], axis=0)  # (T, H)
        out_ref[b, :, :] = (jnp.dot(h_b, wout, preferred_element_type=f32) + bout)


def prepare_kernel_params(p):
    """One-time weight folding (done at init, NOT per forward call)."""
    hp = lax.Precision.HIGHEST
    # Fold reduce_dim into layer-0 input weights: x @ (Wr @ Wih0) == (x @ Wr) @ Wih0,
    # then split the folded matrix into its feature half and embedding half.
    wf = jnp.dot(p["w_reduce"], p["wih0"], precision=hp)                 # (2E, 4H)
    return {
        "wfeat": wf[:EMBED, :],                                          # (E, 4H)
        # Fold the embedding table through the embedding half: the per-token
        # "embedding lookup" becomes a single row gather of layer-0 input gates.
        "table": jnp.dot(p["embed"], wf[EMBED:, :], precision=hp),       # (V, 4H)
        "bf0": jnp.dot(p["b_reduce"], p["wih0"], precision=hp) + p["b0"],  # (1, 4H)
        "whh0": p["whh0"],
        "wih1": p["wih1"],
        "whh1": p["whh1"],
        "b1": p["b1"],
        "wout": p["w_out"],
        "bout": p["b_out"],
    }


def caption_generator_forward(features, captions, kp):
    """features: (B, EMBED) f32, captions: (B, T) int32 -> logits (B, T, VOCAB).

    Single pallas_call; no surrounding HLO ops (gather/concat/transpose all in-kernel).
    Kept gridless on purpose: at B=2 a grid/second-TensorCore split is pure overhead;
    revisit only when B >= 16 (one full sublane group per core).
    """
    args = (captions, features, kp["wfeat"], kp["bf0"], kp["table"], kp["whh0"],
            kp["wih1"], kp["whh1"], kp["b1"], kp["wout"], kp["bout"])
    return pl.pallas_call(
        caption_kernel,
        out_shape=jax.ShapeDtypeStruct((B, T, VOCAB), jnp.float32),
        in_specs=[pl.BlockSpec(memory_space=pltpu.MemorySpace.SMEM)]      # captions
                 + [pl.BlockSpec(memory_space=pltpu.MemorySpace.VMEM)] * (len(args) - 1),
        out_specs=pl.BlockSpec(memory_space=pltpu.MemorySpace.VMEM),
        scratch_shapes=[pltpu.VMEM((T * BP, 4 * HIDDEN), jnp.float32)],
    )(*args)


def ref_forward(features, captions, p):
    """Pure-JAX reference mirroring the PyTorch forward exactly (unfused)."""
    emb = p["embed"][captions]
    feat = jnp.broadcast_to(features[:, None, :], emb.shape)
    x = jnp.concatenate([feat, emb], axis=-1)
    red = x @ p["w_reduce"] + p["b_reduce"][0]

    def lstm(inp, wih, whh, b):
        h = jnp.zeros((inp.shape[0], HIDDEN), jnp.float32)
        c = jnp.zeros((inp.shape[0], HIDDEN), jnp.float32)
        outs = []
        for t in range(inp.shape[1]):
            gates = inp[:, t] @ wih + h @ whh + b[0]
            i = jax.nn.sigmoid(gates[:, :HIDDEN])
            f = jax.nn.sigmoid(gates[:, HIDDEN:2 * HIDDEN])
            g = jnp.tanh(gates[:, 2 * HIDDEN:3 * HIDDEN])
            o = jax.nn.sigmoid(gates[:, 3 * HIDDEN:])
            c = f * c + i * g
            h = o * jnp.tanh(c)
            outs.append(h)
        return jnp.stack(outs, axis=1)

    h0 = lstm(red, p["wih0"], p["whh0"], p["b0"])
    h1 = lstm(h0, p["wih1"], p["whh1"], p["b1"])
    return h1 @ p["w_out"] + p["b_out"][0]


def init_params(key):
    """Deterministic synthetic weights in PyTorch shapes, stored pre-transposed for x @ W."""
    ks = jax.random.split(key, 13)
    s = 0.1
    p = {}
    p["embed"] = jax.random.normal(ks[0], (VOCAB, EMBED), jnp.float32) * s
    # nn.Linear(2E, E): weight (E, 2E), bias (E,)  -> store W.T = (2E, E)
    p["w_reduce"] = (jax.random.normal(ks[1], (EMBED, 2 * EMBED), jnp.float32) * s).T
    p["b_reduce"] = (jax.random.normal(ks[2], (EMBED,), jnp.float32) * s).reshape(1, EMBED)
    # nn.LSTM layer 0: weight_ih_l0 (4H, E), weight_hh_l0 (4H, H), bias_ih_l0 + bias_hh_l0 (4H,)
    p["wih0"] = (jax.random.normal(ks[3], (4 * HIDDEN, EMBED), jnp.float32) * s).T
    p["whh0"] = (jax.random.normal(ks[4], (4 * HIDDEN, HIDDEN), jnp.float32) * s).T
    p["b0"] = ((jax.random.normal(ks[5], (4 * HIDDEN,), jnp.float32) * s)
               + (jax.random.normal(ks[6], (4 * HIDDEN,), jnp.float32) * s)).reshape(1, -1)
    # nn.LSTM layer 1: weight_ih_l1 (4H, H), weight_hh_l1 (4H, H), biases (4H,)
    p["wih1"] = (jax.random.normal(ks[7], (4 * HIDDEN, HIDDEN), jnp.float32) * s).T
    p["whh1"] = (jax.random.normal(ks[8], (4 * HIDDEN, HIDDEN), jnp.float32) * s).T
    p["b1"] = ((jax.random.normal(ks[9], (4 * HIDDEN,), jnp.float32) * s)
               + (jax.random.normal(ks[10], (4 * HIDDEN,), jnp.float32) * s)).reshape(1, -1)
    # nn.Linear(H, V): weight (V, H), bias (V,) -> store W.T = (H, V)
    p["w_out"] = (jax.random.normal(ks[11], (VOCAB, HIDDEN), jnp.float32) * s).T
    p["b_out"] = (jax.random.normal(ks[12], (VOCAB,), jnp.float32) * s).reshape(1, VOCAB)
    return p


if __name__ == "__main__":
    key = jax.random.PRNGKey(0)
    k_par, k_feat, k_cap = jax.random.split(key, 3)

    params = init_params(k_par)
    kernel_params = prepare_kernel_params(params)     # folded once at init

    features = jax.random.normal(k_feat, (B, EMBED), jnp.float32)           # image features
    captions = jax.random.randint(k_cap, (B, T), 0, VOCAB, dtype=jnp.int32)

    out = caption_generator_forward(features, captions, kernel_params)
    out = jax.block_until_ready(out)
    assert out.shape == (B, T, VOCAB), out.shape

    ref = jax.block_until_ready(ref_forward(features, captions, params))
    assert jnp.allclose(out, ref, atol=1e-5, rtol=1e-5), float(jnp.max(jnp.abs(out - ref)))

    print("KERNEL_OK")
</pallas_src>

<mosaic_0001>
module attributes {stable_mosaic.version = 11 : i64} {
  func.func @caption_kernel(%arg0: memref<2x8xi32, #tpu.memory_space<smem>>, %arg1: memref<2x32xf32, #tpu.memory_space<vmem>>, %arg2: memref<32x128xf32, #tpu.memory_space<vmem>>, %arg3: memref<1x128xf32, #tpu.memory_space<vmem>>, %arg4: memref<64x128xf32, #tpu.memory_space<vmem>>, %arg5: memref<32x128xf32, #tpu.memory_space<vmem>>, %arg6: memref<32x128xf32, #tpu.memory_space<vmem>>, %arg7: memref<32x128xf32, #tpu.memory_space<vmem>>, %arg8: memref<1x128xf32, #tpu.memory_space<vmem>>, %arg9: memref<32x64xf32, #tpu.memory_space<vmem>>, %arg10: memref<1x64xf32, #tpu.memory_space<vmem>>, %arg11: memref<2x8x64xf32, #tpu.memory_space<vmem>>, %arg12: memref<64x128xf32, #tpu.memory_space<vmem>>) attributes {dimension_semantics = [], scalar_prefetch = 0 : i64, scratch_operands = 1 : i64, tpu.core_type = #tpu.core_type<tc>} {
    %c0 = arith.constant 0 : index
    %c0_0 = arith.constant 0 : index
    %0 = vector.load %arg1[%c0, %c0_0] : memref<2x32xf32, #tpu.memory_space<vmem>>, vector<2x32xf32>
    %c0_1 = arith.constant 0 : index
    %c0_2 = arith.constant 0 : index
    %1 = vector.load %arg2[%c0_1, %c0_2] : memref<32x128xf32, #tpu.memory_space<vmem>>, vector<32x128xf32>
    %cst = arith.constant dense<0.000000e+00> : vector<2x128xf32>
    %2 = tpu.matmul %0, %1, %cst {dimension_numbers = #tpu.dot_dimension_numbers<[1], [0], [0], [1], [0, 0, 1, 1], [], []>} : vector<2x32xf32>, vector<32x128xf32>, vector<2x128xf32> -> vector<2x128xf32>
    %c0_3 = arith.constant 0 : index
    %c0_4 = arith.constant 0 : index
    %3 = vector.load %arg3[%c0_3, %c0_4] : memref<1x128xf32, #tpu.memory_space<vmem>>, vector<1x128xf32>
    %4 = vector.broadcast %3 : vector<1x128xf32> to vector<2x128xf32>
    %5 = arith.addf %2, %4 : vector<2x128xf32>
    %cst_5 = arith.constant 0.000000e+00 : f32
    %6 = vector.broadcast %cst_5 : f32 to vector<64x128xf32>
    %c0_6 = arith.constant 0 : index
    %c0_7 = arith.constant 0 : index
    %7 = vector.load %arg12[%c0_6, %c0_7] : memref<64x128xf32, #tpu.memory_space<vmem>>, vector<64x128xf32>
    tpu.vector_store %arg12[%c0_6, %c0_7], %6 {strides = array<i32>} : memref<64x128xf32, #tpu.memory_space<vmem>>, vector<64x128xf32>,
    %c0_8 = arith.constant 0 : index
    %c0_9 = arith.constant 0 : index
    %8 = memref.load %arg0[%c0_8, %c0_9] : memref<2x8xi32, #tpu.memory_space<smem>>
    %9 = arith.index_cast %8 : i32 to index
    %c0_10 = arith.constant 0 : index
    %10 = vector.load %arg4[%9, %c0_10] : memref<64x128xf32, #tpu.memory_space<vmem>>, vector<1x128xf32>
    %11 = vector.extract_strided_slice %5 {offsets = [0, 0], sizes = [1, 128], strides = [1, 1]} : vector<2x128xf32> to vector<1x128xf32>
    %12 = arith.addf %10, %11 : vector<1x128xf32>
    %c0_11 = arith.constant 0 : index
    %c0_12 = arith.constant 0 : index
    %13 = vector.load %arg12[%c0_11, %c0_12] : memref<64x128xf32, #tpu.memory_space<vmem>>, vector<1x128xf32>
    tpu.vector_store %arg12[%c0_11, %c0_12], %12 {strides = array<i32>} : memref<64x128xf32, #tpu.memory_space<vmem>>, vector<1x128xf32>,
    %c1 = arith.constant 1 : index
    %c0_13 = arith.constant 0 : index
    %14 = memref.load %arg0[%c1, %c0_13] : memref<2x8xi32, #tpu.memory_space<smem>>
    %15 = arith.index_cast %14 : i32 to index
    %c0_14 = arith.constant 0 : index
    %16 = vector.load %arg4[%15, %c0_14] : memref<64x128xf32, #tpu.memory_space<vmem>>, vector<1x128xf32>
    %17 = vector.extract_strided_slice %5 {offsets = [1, 0], sizes = [1, 128], strides = [1, 1]} : vector<2x128xf32> to vector<1x128xf32>
    %18 = arith.addf %16, %17 : vector<1x128xf32>
    %c1_15 = arith.constant 1 : index
    %c0_16 = arith.constant 0 : index
    %19 = vector.load %arg12[%c1_15, %c0_16] : memref<64x128xf32, #tpu.memory_space<vmem>>, vector<1x128xf32>
    tpu.vector_store %arg12[%c1_15, %c0_16], %18 {strides = array<i32>} : memref<64x128xf32, #tpu.memory_space<vmem>>, vector<1x128xf32>,
    %c0_17 = arith.constant 0 : index
    %c1_18 = arith.constant 1 : index
    %20 = memref.load %arg0[%c0_17, %c1_18] : memref<2x8xi32, #tpu.memory_space<smem>>
    %21 = arith.index_cast %20 : i32 to index
    %c0_19 = arith.constant 0 : index
    %22 = vector.load %arg4[%21, %c0_19] : memref<64x128xf32, #tpu.memory_space<vmem>>, vector<1x128xf32>
    %23 = vector.extract_strided_slice %5 {offsets = [0, 0], sizes = [1, 128], strides = [1, 1]} : vector<2x128xf32> to vector<1x128xf32>
    %24 = arith.addf %22, %23 : vector<1x128xf32>
    %c8 = arith.constant 8 : index
    %c0_20 = arith.constant 0 : index
    %25 = vector.load %arg12[%c8, %c0_20] : memref<64x128xf32, #tpu.memory_space<vmem>>, vector<1x128xf32>
    tpu.vector_store %arg12[%c8, %c0_20], %24 {strides = array<i32>} : memref<64x128xf32, #tpu.memory_space<vmem>>, vector<1x128xf32>,
    %c1_21 = arith.constant 1 : index
    %c1_22 = arith.constant 1 : index
    %26 = memref.load %arg0[%c1_21, %c1_22] : memref<2x8xi32, #tpu.memory_space<smem>>
    %27 = arith.index_cast %26 : i32 to index
    %c0_23 = arith.constant 0 : index
    %28 = vector.load %arg4[%27, %c0_23] : memref<64x128xf32, #tpu.memory_space<vmem>>, vector<1x128xf32>
    %29 = vector.extract_strided_slice %5 {offsets = [1, 0], sizes = [1, 128], strides = [1, 1]} : vector<2x128xf32> to vector<1x128xf32>
    %30 = arith.addf %28, %29 : vector<1x128xf32>
    %c9 = arith.constant 9 : index
    %c0_24 = arith.constant 0 : index
    %31 = vector.load %arg12[%c9, %c0_24] : memref<64x128xf32, #tpu.memory_space<vmem>>, vector<1x128xf32>
    tpu.vector_store %arg12[%c9, %c0_24], %30 {strides = array<i32>} : memref<64x128xf32, #tpu.memory_space<vmem>>, vector<1x128xf32>,
    %c0_25 = arith.constant 0 : index
    %c2 = arith.constant 2 : index
    %32 = memref.load %arg0[%c0_25, %c2] : memref<2x8xi32, #tpu.memory_space<smem>>
    %33 = arith.index_cast %32 : i32 to index
    %c0_26 = arith.constant 0 : index
    %34 = vector.load %arg4[%33, %c0_26] : memref<64x128xf32, #tpu.memory_space<vmem>>, vector<1x128xf32>
    %35 = vector.extract_strided_slice %5 {offsets = [0, 0], sizes = [1, 128], strides = [1, 1]} : vector<2x128xf32> to vector<1x128xf32>
    %36 = arith.addf %34, %35 : vector<1x128xf32>
    %c16 = arith.constant 16 : index
    %c0_27 = arith.constant 0 : index
    %37 = vector.load %arg12[%c16, %c0_27] : memref<64x128xf32, #tpu.memory_space<vmem>>, vector<1x128xf32>
    tpu.vector_store %arg12[%c16, %c0_27], %36 {strides = array<i32>} : memref<64x128xf32, #tpu.memory_space<vmem>>, vector<1x128xf32>,
    %c1_28 = arith.constant 1 : index
    %c2_29 = arith.constant 2 : index
    %38 = memref.load %arg0[%c1_28, %c2_29] : memref<2x8xi32, #tpu.memory_space<smem>>
    %39 = arith.index_cast %38 : i32 to index
    %c0_30 = arith.constant 0 : index
    %40 = vector.load %arg4[%39, %c0_30] : memref<64x128xf32, #tpu.memory_space<vmem>>, vector<1x128xf32>
    %41 = vector.extract_strided_slice %5 {offsets = [1, 0], sizes = [1, 128], strides = [1, 1]} : vector<2x128xf32> to vector<1x128xf32>
    %42 = arith.addf %40, %41 : vector<1x128xf32>
    %c17 = arith.constant 17 : index
    %c0_31 = arith.constant 0 : index
    %43 = vector.load %arg12[%c17, %c0_31] : memref<64x128xf32, #tpu.memory_space<vmem>>, vector<1x128xf32>
    tpu.vector_store %arg12[%c17, %c0_31], %42 {strides = array<i32>} : memref<64x128xf32, #tpu.memory_space<vmem>>, vector<1x128xf32>,
    %c0_32 = arith.constant 0 : index
    %c3 = arith.constant 3 : index
    %44 = memref.load %arg0[%c0_32, %c3] : memref<2x8xi32, #tpu.memory_space<smem>>
    %45 = arith.index_cast %44 : i32 to index
    %c0_33 = arith.constant 0 : index
    %46 = vector.load %arg4[%45, %c0_33] : memref<64x128xf32, #tpu.memory_space<vmem>>, vector<1x128xf32>
    %47 = vector.extract_strided_slice %5 {offsets = [0, 0], sizes = [1, 128], strides = [1, 1]} : vector<2x128xf32> to vector<1x128xf32>
    %48 = arith.addf %46, %47 : vector<1x128xf32>
    %c24 = arith.constant 24 : index
    %c0_34 = arith.constant 0 : index
    %49 = vector.load %arg12[%c24, %c0_34] : memref<64x128xf32, #tpu.memory_space<vmem>>, vector<1x128xf32>
    tpu.vector_store %arg12[%c24, %c0_34], %48 {strides = array<i32>} : memref<64x128xf32, #tpu.memory_space<vmem>>, vector<1x128xf32>,
    %c1_35 = arith.constant 1 : index
    %c3_36 = arith.constant 3 : index
    %50 = memref.load %arg0[%c1_35, %c3_36] : memref<2x8xi32, #tpu.memory_space<smem>>
    %51 = arith.index_cast %50 : i32 to index
    %c0_37 = arith.constant 0 : index
    %52 = vector.load %arg4[%51, %c0_37] : memref<64x128xf32, #tpu.memory_space<vmem>>, vector<1x128xf32>
    %53 = vector.extract_strided_slice %5 {offsets = [1, 0], sizes = [1, 128], strides = [1, 1]} : vector<2x128xf32> to vector<1x128xf32>
    %54 = arith.addf %52, %53 : vector<1x128xf32>
    %c25 = arith.constant 25 : index
    %c0_38 = arith.constant 0 : index
    %55 = vector.load %arg12[%c25, %c0_38] : memref<64x128xf32, #tpu.memory_space<vmem>>, vector<1x128xf32>
    tpu.vector_store %arg12[%c25, %c0_38], %54 {strides = array<i32>} : memref<64x128xf32, #tpu.memory_space<vmem>>, vector<1x128xf32>,
    %c0_39 = arith.constant 0 : index
    %c4 = arith.constant 4 : index
    %56 = memref.load %arg0[%c0_39, %c4] : memref<2x8xi32, #tpu.memory_space<smem>>
    %57 = arith.index_cast %56 : i32 to index
    %c0_40 = arith.constant 0 : index
    %58 = vector.load %arg4[%57, %c0_40] : memref<64x128xf32, #tpu.memory_space<vmem>>, vector<1x128xf32>
    %59 = vector.extract_strided_slice %5 {offsets = [0, 0], sizes = [1, 128], strides = [1, 1]} : vector<2x128xf32> to vector<1x128xf32>
    %60 = arith.addf %58, %59 : vector<1x128xf32>
    %c32 = arith.constant 32 : index
    %c0_41 = arith.constant 0 : index
    %61 = vector.load %arg12[%c32, %c0_41] : memref<64x128xf32, #tpu.memory_space<vmem>>, vector<1x128xf32>
    tpu.vector_store %arg12[%c32, %c0_41], %60 {strides = array<i32>} : memref<64x128xf32, #tpu.memory_space<vmem>>, vector<1x128xf32>,
    %c1_42 = arith.constant 1 : index
    %c4_43 = arith.constant 4 : index
    %62 = memref.load %arg0[%c1_42, %c4_43] : memref<2x8xi32, #tpu.memory_space<smem>>
    %63 = arith.index_cast %62 : i32 to index
    %c0_44 = arith.constant 0 : index
    %64 = vector.load %arg4[%63, %c0_44] : memref<64x128xf32, #tpu.memory_space<vmem>>, vector<1x128xf32>
    %65 = vector.extract_strided_slice %5 {offsets = [1, 0], sizes = [1, 128], strides = [1, 1]} : vector<2x128xf32> to vector<1x128xf32>
    %66 = arith.addf %64, %65 : vector<1x128xf32>
    %c33 = arith.constant 33 : index
    %c0_45 = arith.constant 0 : index
    %67 = vector.load %arg12[%c33, %c0_45] : memref<64x128xf32, #tpu.memory_space<vmem>>, vector<1x128xf32>
    tpu.vector_store %arg12[%c33, %c0_45], %66 {strides = array<i32>} : memref<64x128xf32, #tpu.memory_space<vmem>>, vector<1x128xf32>,
    %c0_46 = arith.constant 0 : index
    %c5 = arith.constant 5 : index
    %68 = memref.load %arg0[%c0_46, %c5] : memref<2x8xi32, #tpu.memory_space<smem>>
    %69 = arith.index_cast %68 : i32 to index
    %c0_47 = arith.constant 0 : index
    %70 = vector.load %arg4[%69, %c0_47] : memref<64x128xf32, #tpu.memory_space<vmem>>, vector<1x128xf32>
    %71 = vector.extract_strided_slice %5 {offsets = [0, 0], sizes = [1, 128], strides = [1, 1]} : vector<2x128xf32> to vector<1x128xf32>
    %72 = arith.addf %70, %71 : vector<1x128xf32>
    %c40 = arith.constant 40 : index
    %c0_48 = arith.constant 0 : index
    %73 = vector.load %arg12[%c40, %c0_48] : memref<64x128xf32, #tpu.memory_space<vmem>>, vector<1x128xf32>
    tpu.vector_store %arg12[%c40, %c0_48], %72 {strides = array<i32>} : memref<64x128xf32, #tpu.memory_space<vmem>>, vector<1x128xf32>,
    %c1_49 = arith.constant 1 : index
    %c5_50 = arith.constant 5 : index
    %74 = memref.load %arg0[%c1_49, %c5_50] : memref<2x8xi32, #tpu.memory_space<smem>>
    %75 = arith.index_cast %74 : i32 to index
    %c0_51 = arith.constant 0 : index
    %76 = vector.load %arg4[%75, %c0_51] : memref<64x128xf32, #tpu.memory_space<vmem>>, vector<1x128xf32>
    %77 = vector.extract_strided_slice %5 {offsets = [1, 0], sizes = [1, 128], strides = [1, 1]} : vector<2x128xf32> to vector<1x128xf32>
    %78 = arith.addf %76, %77 : vector<1x128xf32>
    %c41 = arith.constant 41 : index
    %c0_52 = arith.constant 0 : index
    %79 = vector.load %arg12[%c41, %c0_52] : memref<64x128xf32, #tpu.memory_space<vmem>>, vector<1x128xf32>
    tpu.vector_store %arg12[%c41, %c0_52], %78 {strides = array<i32>} : memref<64x128xf32, #tpu.memory_space<vmem>>, vector<1x128xf32>,
    %c0_53 = arith.constant 0 : index
    %c6 = arith.constant 6 : index
    %80 = memref.load %arg0[%c0_53, %c6] : memref<2x8xi32, #tpu.memory_space<smem>>
    %81 = arith.index_cast %80 : i32 to index
    %c0_54 = arith.constant 0 : index
    %82 = vector.load %arg4[%81, %c0_54] : memref<64x128xf32, #tpu.memory_space<vmem>>, vector<1x128xf32>
    %83 = vector.extract_strided_slice %5 {offsets = [0, 0], sizes = [1, 128], strides = [1, 1]} : vector<2x128xf32> to vector<1x128xf32>
    %84 = arith.addf %82, %83 : vector<1x128xf32>
    %c48 = arith.constant 48 : index
    %c0_55 = arith.constant 0 : index
    %85 = vector.load %arg12[%c48, %c0_55] : memref<64x128xf32, #tpu.memory_space<vmem>>, vector<1x128xf32>
    tpu.vector_store %arg12[%c48, %c0_55], %84 {strides = array<i32>} : memref<64x128xf32, #tpu.memory_space<vmem>>, vector<1x128xf32>,
    %c1_56 = arith.constant 1 : index
    %c6_57 = arith.constant 6 : index
    %86 = memref.load %arg0[%c1_56, %c6_57] : memref<2x8xi32, #tpu.memory_space<smem>>
    %87 = arith.index_cast %86 : i32 to index
    %c0_58 = arith.constant 0 : index
    %88 = vector.load %arg4[%87, %c0_58] : memref<64x128xf32, #tpu.memory_space<vmem>>, vector<1x128xf32>
    %89 = vector.extract_strided_slice %5 {offsets = [1, 0], sizes = [1, 128], strides = [1, 1]} : vector<2x128xf32> to vector<1x128xf32>
    %90 = arith.addf %88, %89 : vector<1x128xf32>
    %c49 = arith.constant 49 : index
    %c0_59 = arith.constant 0 : index
    %91 = vector.load %arg12[%c49, %c0_59] : memref<64x128xf32, #tpu.memory_space<vmem>>, vector<1x128xf32>
    tpu.vector_store %arg12[%c49, %c0_59], %90 {strides = array<i32>} : memref<64x128xf32, #tpu.memory_space<vmem>>, vector<1x128xf32>,
    %c0_60 = arith.constant 0 : index
    %c7 = arith.constant 7 : index
    %92 = memref.load %arg0[%c0_60, %c7] : memref<2x8xi32, #tpu.memory_space<smem>>
    %93 = arith.index_cast %92 : i32 to index
    %c0_61 = arith.constant 0 : index
    %94 = vector.load %arg4[%93, %c0_61] : memref<64x128xf32, #tpu.memory_space<vmem>>, vector<1x128xf32>
    %95 = vector.extract_strided_slice %5 {offsets = [0, 0], sizes = [1, 128], strides = [1, 1]} : vector<2x128xf32> to vector<1x128xf32>
    %96 = arith.addf %94, %95 : vector<1x128xf32>
    %c56 = arith.constant 56 : index
    %c0_62 = arith.constant 0 : index
    %97 = vector.load %arg12[%c56, %c0_62] : memref<64x128xf32, #tpu.memory_space<vmem>>, vector<1x128xf32>
    tpu.vector_store %arg12[%c56, %c0_62], %96 {strides = array<i32>} : memref<64x128xf32, #tpu.memory_space<vmem>>, vector<1x128xf32>,
    %c1_63 = arith.constant 1 : index
    %c7_64 = arith.constant 7 : index
    %98 = memref.load %arg0[%c1_63, %c7_64] : memref<2x8xi32, #tpu.memory_space<smem>>
    %99 = arith.index_cast %98 : i32 to index
    %c0_65 = arith.constant 0 : index
    %100 = vector.load %arg4[%99, %c0_65] : memref<64x128xf32, #tpu.memory_space<vmem>>, vector<1x128xf32>
    %101 = vector.extract_strided_slice %5 {offsets = [1, 0], sizes = [1, 128], strides = [1, 1]} : vector<2x128xf32> to vector<1x128xf32>
    %102 = arith.addf %100, %101 : vector<1x128xf32>
    %c57 = arith.constant 57 : index
    %c0_66 = arith.constant 0 : index
    %103 = vector.load %arg12[%c57, %c0_66] : memref<64x128xf32, #tpu.memory_space<vmem>>, vector<1x128xf32>
    tpu.vector_store %arg12[%c57, %c0_66], %102 {strides = array<i32>} : memref<64x128xf32, #tpu.memory_space<vmem>>, vector<1x128xf32>,
    %c0_67 = arith.constant 0 : index
    %c0_68 = arith.constant 0 : index
    %104 = vector.load %arg5[%c0_67, %c0_68] : memref<32x128xf32, #tpu.memory_space<vmem>>, vector<32x128xf32>
    %c0_69 = arith.constant 0 : index
    %c0_70 = arith.constant 0 : index
    %105 = vector.load %arg6[%c0_69, %c0_70] : memref<32x128xf32, #tpu.memory_space<vmem>>, vector<32x128xf32>
    %c0_71 = arith.constant 0 : index
    %c0_72 = arith.constant 0 : index
    %106 = vector.load %arg7[%c0_71, %c0_72] : memref<32x128xf32, #tpu.memory_space<vmem>>, vector<32x128xf32>
    %c0_73 = arith.constant 0 : index
    %c0_74 = arith.constant 0 : index
    %107 = vector.load %arg8[%c0_73, %c0_74] : memref<1x128xf32, #tpu.memory_space<vmem>>, vector<1x128xf32>
    %cst_75 = arith.constant 0.000000e+00 : f32
    %108 = vector.broadcast %cst_75 : f32 to vector<8x32xf32>
    %c0_76 = arith.constant 0 : index
    %c0_77 = arith.constant 0 : index
    %109 = vector.load %arg12[%c0_76, %c0_77] : memref<64x128xf32, #tpu.memory_space<vmem>>, vector<8x128xf32>
    %cst_78 = arith.constant dense<0.000000e+00> : vector<8x128xf32>
    %110 = tpu.matmul %108, %104, %cst_78 {dimension_numbers = #tpu.dot_dimension_numbers<[1], [0], [0], [1], [0, 0, 1, 1], [], []>} : vector<8x32xf32>, vector<32x128xf32>, vector<8x128xf32> -> vector<8x128xf32>
    %111 = arith.addf %109, %110 : vector<8x128xf32>
    %112 = arith.negf %111 : vector<8x128xf32>
    %113 = math.exp %112 : vector<8x128xf32>
    %cst_79 = arith.constant 1.000000e+00 : f32
    %114 = vector.broadcast %cst_79 : f32 to vector<8x128xf32>
    %115 = arith.addf %114, %113 : vector<8x128xf32>
    %116 = arith.divf %114, %115 : vector<8x128xf32>
    %117 = math.tanh %111 : vector<8x128xf32>
    %118 = vector.extract_strided_slice %116 {offsets = [0, 0], sizes = [8, 32], strides = [1, 1]} : vector<8x128xf32> to vector<8x32xf32>
    %119 = vector.extract_strided_slice %116 {offsets = [0, 32], sizes = [8, 32], strides = [1, 1]} : vector<8x128xf32> to vector<8x32xf32>
    %120 = vector.extract_strided_slice %117 {offsets = [0, 64], sizes = [8, 32], strides = [1, 1]} : vector<8x128xf32> to vector<8x32xf32>
    %121 = vector.extract_strided_slice %116 {offsets = [0, 96], sizes = [8, 32], strides = [1, 1]} : vector<8x128xf32> to vector<8x32xf32>
    %122 = arith.mulf %119, %108 : vector<8x32xf32>
    %123 = arith.mulf %118, %120 : vector<8x32xf32>
    %124 = arith.addf %122, %123 : vector<8x32xf32>
    %125 = math.tanh %124 : vector<8x32xf32>
    %126 = arith.mulf %121, %125 : vector<8x32xf32>
    %cst_80 = arith.constant dense<0.000000e+00> : vector<8x128xf32>
    %127 = tpu.matmul %126, %105, %cst_80 {dimension_numbers = #tpu.dot_dimension_numbers<[1], [0], [0], [1], [0, 0, 1, 1], [], []>} : vector<8x32xf32>, vector<32x128xf32>, vector<8x128xf32> -> vector<8x128xf32>
    %cst_81 = arith.constant dense<0.000000e+00> : vector<8x128xf32>
    %128 = tpu.matmul %108, %106, %cst_81 {dimension_numbers = #tpu.dot_dimension_numbers<[1], [0], [0], [1], [0, 0, 1, 1], [], []>} : vector<8x32xf32>, vector<32x128xf32>, vector<8x128xf32> -> vector<8x128xf32>
    %129 = arith.addf %127, %128 : vector<8x128xf32>
    %130 = vector.broadcast %107 : vector<1x128xf32> to vector<8x128xf32>
    %131 = arith.addf %129, %130 : vector<8x128xf32>
    %132 = arith.negf %131 : vector<8x128xf32>
    %133 = math.exp %132 : vector<8x128xf32>
    %cst_82 = arith.constant 1.000000e+00 : f32
    %134 = vector.broadcast %cst_82 : f32 to vector<8x128xf32>
    %135 = arith.addf %134, %133 : vector<8x128xf32>
    %136 = arith.divf %134, %135 : vector<8x128xf32>
    %137 = math.tanh %131 : vector<8x128xf32>
    %138 = vector.extract_strided_slice %136 {offsets = [0, 0], sizes = [8, 32], strides = [1, 1]} : vector<8x128xf32> to vector<8x32xf32>
    %139 = vector.extract_strided_slice %136 {offsets = [0, 32], sizes = [8, 32], strides = [1, 1]} : vector<8x128xf32> to vector<8x32xf32>
    %140 = vector.extract_strided_slice %137 {offsets = [0, 64], sizes = [8, 32], strides = [1, 1]} : vector<8x128xf32> to vector<8x32xf32>
    %141 = vector.extract_strided_slice %136 {offsets = [0, 96], sizes = [8, 32], strides = [1, 1]} : vector<8x128xf32> to vector<8x32xf32>
    %142 = arith.mulf %139, %108 : vector<8x32xf32>
    %143 = arith.mulf %138, %140 : vector<8x32xf32>
    %144 = arith.addf %142, %143 : vector<8x32xf32>
    %145 = math.tanh %144 : vector<8x32xf32>
    %146 = arith.mulf %141, %145 : vector<8x32xf32>
    %c8_83 = arith.constant 8 : index
    %c0_84 = arith.constant 0 : index
    %147 = vector.load %arg12[%c8_83, %c0_84] : memref<64x128xf32, #tpu.memory_space<vmem>>, vector<8x128xf32>
    %cst_85 = arith.constant dense<0.000000e+00> : vector<8x128xf32>
    %148 = tpu.matmul %126, %104, %cst_85 {dimension_numbers = #tpu.dot_dimension_numbers<[1], [0], [0], [1], [0, 0, 1, 1], [], []>} : vector<8x32xf32>, vector<32x128xf32>, vector<8x128xf32> -> vector<8x128xf32>
    %149 = arith.addf %147, %148 : vector<8x128xf32>
    %150 = arith.negf %149 : vector<8x128xf32>
    %151 = math.exp %150 : vector<8x128xf32>
    %cst_86 = arith.constant 1.000000e+00 : f32
    %152 = vector.broadcast %cst_86 : f32 to vector<8x128xf32>
    %153 = arith.addf %152, %151 : vector<8x128xf32>
    %154 = arith.divf %152, %153 : vector<8x128xf32>
    %155 = math.tanh %149 : vector<8x128xf32>
    %156 = vector.extract_strided_slice %154 {offsets = [0, 0], sizes = [8, 32], strides = [1, 1]} : vector<8x128xf32> to vector<8x32xf32>
    %157 = vector.extract_strided_slice %154 {offsets = [0, 32], sizes = [8, 32], strides = [1, 1]} : vector<8x128xf32> to vector<8x32xf32>
    %158 = vector.extract_strided_slice %155 {offsets = [0, 64], sizes = [8, 32], strides = [1, 1]} : vector<8x128xf32> to vector<8x32xf32>
    %159 = vector.extract_strided_slice %154 {offsets = [0, 96], sizes = [8, 32], strides = [1, 1]} : vector<8x128xf32> to vector<8x32xf32>
    %160 = arith.mulf %157, %124 : vector<8x32xf32>
    %161 = arith.mulf %156, %158 : vector<8x32xf32>
    %162 = arith.addf %160, %161 : vector<8x32xf32>
    %163 = math.tanh %162 : vector<8x32xf32>
    %164 = arith.mulf %159, %163 : vector<8x32xf32>
    %cst_87 = arith.constant dense<0.000000e+00> : vector<8x128xf32>
    %165 = tpu.matmul %164, %105, %cst_87 {dimension_numbers = #tpu.dot_dimension_numbers<[1], [0], [0], [1], [0, 0, 1, 1], [], []>} : vector<8x32xf32>, vector<32x128xf32>, vector<8x128xf32> -> vector<8x128xf32>
    %cst_88 = arith.constant dense<0.000000e+00> : vector<8x128xf32>
    %166 = tpu.matmul %146, %106, %cst_88 {dimension_numbers = #tpu.dot_dimension_numbers<[1], [0], [0], [1], [0, 0, 1, 1], [], []>} : vector<8x32xf32>, vector<32x128xf32>, vector<8x128xf32> -> vector<8x128xf32>
    %167 = arith.addf %165, %166 : vector<8x128xf32>
    %168 = vector.broadcast %107 : vector<1x128xf32> to vector<8x128xf32>
    %169 = arith.addf %167, %168 : vector<8x128xf32>
    %170 = arith.negf %169 : vector<8x128xf32>
    %171 = math.exp %170 : vector<8x128xf32>
    %cst_89 = arith.constant 1.000000e+00 : f32
    %172 = vector.broadcast %cst_89 : f32 to vector<8x128xf32>
    %173 = arith.addf %172, %171 : vector<8x128xf32>
    %174 = arith.divf %172, %173 : vector<8x128xf32>
    %175 = math.tanh %169 : vector<8x128xf32>
    %176 = vector.extract_strided_slice %174 {offsets = [0, 0], sizes = [8, 32], strides = [1, 1]} : vector<8x128xf32> to vector<8x32xf32>
    %177 = vector.extract_strided_slice %174 {offsets = [0, 32], sizes = [8, 32], strides = [1, 1]} : vector<8x128xf32> to vector<8x32xf32>
    %178 = vector.extract_strided_slice %175 {offsets = [0, 64], sizes = [8, 32], strides = [1, 1]} : vector<8x128xf32> to vector<8x32xf32>
    %179 = vector.extract_strided_slice %174 {offsets = [0, 96], sizes = [8, 32], strides = [1, 1]} : vector<8x128xf32> to vector<8x32xf32>
    %180 = arith.mulf %177, %144 : vector<8x32xf32>
    %181 = arith.mulf %176, %178 : vector<8x32xf32>
    %182 = arith.addf %180, %181 : vector<8x32xf32>
    %183 = math.tanh %182 : vector<8x32xf32>
    %184 = arith.mulf %179, %183 : vector<8x32xf32>
    %c16_90 = arith.constant 16 : index
    %c0_91 = arith.constant 0 : index
    %185 = vector.load %arg12[%c16_90, %c0_91] : memref<64x128xf32, #tpu.memory_space<vmem>>, vector<8x128xf32>
    %cst_92 = arith.constant dense<0.000000e+00> : vector<8x128xf32>
    %186 = tpu.matmul %164, %104, %cst_92 {dimension_numbers = #tpu.dot_dimension_numbers<[1], [0], [0], [1], [0, 0, 1, 1], [], []>} : vector<8x32xf32>, vector<32x128xf32>, vector<8x128xf32> -> vector<8x128xf32>
    %187 = arith.addf %185, %186 : vector<8x128xf32>
    %188 = arith.negf %187 : vector<8x128xf32>
    %189 = math.exp %188 : vector<8x128xf32>
    %cst_93 = arith.constant 1.000000e+00 : f32
    %190 = vector.broadcast %cst_93 : f32 to vector<8x128xf32>
    %191 = arith.addf %190, %189 : vector<8x128xf32>
    %192 = arith.divf %190, %191 : vector<8x128xf32>
    %193 = math.tanh %187 : vector<8x128xf32>
    %194 = vector.extract_strided_slice %192 {offsets = [0, 0], sizes = [8, 32], strides = [1, 1]} : vector<8x128xf32> to vector<8x32xf32>
    %195 = vector.extract_strided_slice %192 {offsets = [0, 32], sizes = [8, 32], strides = [1, 1]} : vector<8x128xf32> to vector<8x32xf32>
    %196 = vector.extract_strided_slice %193 {offsets = [0, 64], sizes = [8, 32], strides = [1, 1]} : vector<8x128xf32> to vector<8x32xf32>
    %197 = vector.extract_strided_slice %192 {offsets = [0, 96], sizes = [8, 32], strides = [1, 1]} : vector<8x128xf32> to vector<8x32xf32>
    %198 = arith.mulf %195, %162 : vector<8x32xf32>
    %199 = arith.mulf %194, %196 : vector<8x32xf32>
    %200 = arith.addf %198, %199 : vector<8x32xf32>
    %201 = math.tanh %200 : vector<8x32xf32>
    %202 = arith.mulf %197, %201 : vector<8x32xf32>
    %cst_94 = arith.constant dense<0.000000e+00> : vector<8x128xf32>
    %203 = tpu.matmul %202, %105, %cst_94 {dimension_numbers = #tpu.dot_dimension_numbers<[1], [0], [0], [1], [0, 0, 1, 1], [], []>} : vector<8x32xf32>, vector<32x128xf32>, vector<8x128xf32> -> vector<8x128xf32>
    %cst_95 = arith.constant dense<0.000000e+00> : vector<8x128xf32>
    %204 = tpu.matmul %184, %106, %cst_95 {dimension_numbers = #tpu.dot_dimension_numbers<[1], [0], [0], [1], [0, 0, 1, 1], [], []>} : vector<8x32xf32>, vector<32x128xf32>, vector<8x128xf32> -> vector<8x128xf32>
    %205 = arith.addf %203, %204 : vector<8x128xf32>
    %206 = vector.broadcast %107 : vector<1x128xf32> to vector<8x128xf32>
    %207 = arith.addf %205, %206 : vector<8x128xf32>
    %208 = arith.negf %207 : vector<8x128xf32>
    %209 = math.exp %208 : vector<8x128xf32>
    %cst_96 = arith.constant 1.000000e+00 : f32
    %210 = vector.broadcast %cst_96 : f32 to vector<8x128xf32>
    %211 = arith.addf %210, %209 : vector<8x128xf32>
    %212 = arith.divf %210, %211 : vector<8x128xf32>
    %213 = math.tanh %207 : vector<8x128xf32>
    %214 = vector.extract_strided_slice %212 {offsets = [0, 0], sizes = [8, 32], strides = [1, 1]} : vector<8x128xf32> to vector<8x32xf32>
    %215 = vector.extract_strided_slice %212 {offsets = [0, 32], sizes = [8, 32], strides = [1, 1]} : vector<8x128xf32> to vector<8x32xf32>
    %216 = vector.extract_strided_slice %213 {offsets = [0, 64], sizes = [8, 32], strides = [1, 1]} : vector<8x128xf32> to vector<8x32xf32>
    %217 = vector.extract_strided_slice %212 {offsets = [0, 96], sizes = [8, 32], strides = [1, 1]} : vector<8x128xf32> to vector<8x32xf32>
    %218 = arith.mulf %215, %182 : vector<8x32xf32>
    %219 = arith.mulf %214, %216 : vector<8x32xf32>
    %220 = arith.addf %218, %219 : vector<8x32xf32>
    %221 = math.tanh %220 : vector<8x32xf32>
    %222 = arith.mulf %217, %221 : vector<8x32xf32>
    %c24_97 = arith.constant 24 : index
    %c0_98 = arith.constant 0 : index
    %223 = vector.load %arg12[%c24_97, %c0_98] : memref<64x128xf32, #tpu.memory_space<vmem>>, vector<8x128xf32>
    %cst_99 = arith.constant dense<0.000000e+00> : vector<8x128xf32>
    %224 = tpu.matmul %202, %104, %cst_99 {dimension_numbers = #tpu.dot_dimension_numbers<[1], [0], [0], [1], [0, 0, 1, 1], [], []>} : vector<8x32xf32>, vector<32x128xf32>, vector<8x128xf32> -> vector<8x128xf32>
    %225 = arith.addf %223, %224 : vector<8x128xf32>
    %226 = arith.negf %225 : vector<8x128xf32>
    %227 = math.exp %226 : vector<8x128xf32>
    %cst_100 = arith.constant 1.000000e+00 : f32
    %228 = vector.broadcast %cst_100 : f32 to vector<8x128xf32>
    %229 = arith.addf %228, %227 : vector<8x128xf32>
    %230 = arith.divf %228, %229 : vector<8x128xf32>
    %231 = math.tanh %225 : vector<8x128xf32>
    %232 = vector.extract_strided_slice %230 {offsets = [0, 0], sizes = [8, 32], strides = [1, 1]} : vector<8x128xf32> to vector<8x32xf32>
    %233 = vector.extract_strided_slice %230 {offsets = [0, 32], sizes = [8, 32], strides = [1, 1]} : vector<8x128xf32> to vector<8x32xf32>
    %234 = vector.extract_strided_slice %231 {offsets = [0, 64], sizes = [8, 32], strides = [1, 1]} : vector<8x128xf32> to vector<8x32xf32>
    %235 = vector.extract_strided_slice %230 {offsets = [0, 96], sizes = [8, 32], strides = [1, 1]} : vector<8x128xf32> to vector<8x32xf32>
    %236 = arith.mulf %233, %200 : vector<8x32xf32>
    %237 = arith.mulf %232, %234 : vector<8x32xf32>
    %238 = arith.addf %236, %237 : vector<8x32xf32>
    %239 = math.tanh %238 : vector<8x32xf32>
    %240 = arith.mulf %235, %239 : vector<8x32xf32>
    %cst_101 = arith.constant dense<0.000000e+00> : vector<8x128xf32>
    %241 = tpu.matmul %240, %105, %cst_101 {dimension_numbers = #tpu.dot_dimension_numbers<[1], [0], [0], [1], [0, 0, 1, 1], [], []>} : vector<8x32xf32>, vector<32x128xf32>, vector<8x128xf32> -> vector<8x128xf32>
    %cst_102 = arith.constant dense<0.000000e+00> : vector<8x128xf32>
    %242 = tpu.matmul %222, %106, %cst_102 {dimension_numbers = #tpu.dot_dimension_numbers<[1], [0], [0], [1], [0, 0, 1, 1], [], []>} : vector<8x32xf32>, vector<32x128xf32>, vector<8x128xf32> -> vector<8x128xf32>
    %243 = arith.addf %241, %242 : vector<8x128xf32>
    %244 = vector.broadcast %107 : vector<1x128xf32> to vector<8x128xf32>
    %245 = arith.addf %243, %244 : vector<8x128xf32>
    %246 = arith.negf %245 : vector<8x128xf32>
    %247 = math.exp %246 : vector<8x128xf32>
    %cst_103 = arith.constant 1.000000e+00 : f32
    %248 = vector.broadcast %cst_103 : f32 to vector<8x128xf32>
    %249 = arith.addf %248, %247 : vector<8x128xf32>
    %250 = arith.divf %248, %249 : vector<8x128xf32>
    %251 = math.tanh %245 : vector<8x128xf32>
    %252 = vector.extract_strided_slice %250 {offsets = [0, 0], sizes = [8, 32], strides = [1, 1]} : vector<8x128xf32> to vector<8x32xf32>
    %253 = vector.extract_strided_slice %250 {offsets = [0, 32], sizes = [8, 32], strides = [1, 1]} : vector<8x128xf32> to vector<8x32xf32>
    %254 = vector.extract_strided_slice %251 {offsets = [0, 64], sizes = [8, 32], strides = [1, 1]} : vector<8x128xf32> to vector<8x32xf32>
    %255 = vector.extract_strided_slice %250 {offsets = [0, 96], sizes = [8, 32], strides = [1, 1]} : vector<8x128xf32> to vector<8x32xf32>
    %256 = arith.mulf %253, %220 : vector<8x32xf32>
    %257 = arith.mulf %252, %254 : vector<8x32xf32>
    %258 = arith.addf %256, %257 : vector<8x32xf32>
    %259 = math.tanh %258 : vector<8x32xf32>
    %260 = arith.mulf %255, %259 : vector<8x32xf32>
    %c32_104 = arith.constant 32 : index
    %c0_105 = arith.constant 0 : index
    %261 = vector.load %arg12[%c32_104, %c0_105] : memref<64x128xf32, #tpu.memory_space<vmem>>, vector<8x128xf32>
    %cst_106 = arith.constant dense<0.000000e+00> : vector<8x128xf32>
    %262 = tpu.matmul %240, %104, %cst_106 {dimension_numbers = #tpu.dot_dimension_numbers<[1], [0], [0], [1], [0, 0, 1, 1], [], []>} : vector<8x32xf32>, vector<32x128xf32>, vector<8x128xf32> -> vector<8x128xf32>
    %263 = arith.addf %261, %262 : vector<8x128xf32>
    %264 = arith.negf %263 : vector<8x128xf32>
    %265 = math.exp %264 : vector<8x128xf32>
    %cst_107 = arith.constant 1.000000e+00 : f32
    %266 = vector.broadcast %cst_107 : f32 to vector<8x128xf32>
    %267 = arith.addf %266, %265 : vector<8x128xf32>
    %268 = arith.divf %266, %267 : vector<8x128xf32>
    %269 = math.tanh %263 : vector<8x128xf32>
    %270 = vector.extract_strided_slice %268 {offsets = [0, 0], sizes = [8, 32], strides = [1, 1]} : vector<8x128xf32> to vector<8x32xf32>
    %271 = vector.extract_strided_slice %268 {offsets = [0, 32], sizes = [8, 32], strides = [1, 1]} : vector<8x128xf32> to vector<8x32xf32>
    %272 = vector.extract_strided_slice %269 {offsets = [0, 64], sizes = [8, 32], strides = [1, 1]} : vector<8x128xf32> to vector<8x32xf32>
    %273 = vector.extract_strided_slice %268 {offsets = [0, 96], sizes = [8, 32], strides = [1, 1]} : vector<8x128xf32> to vector<8x32xf32>
    %274 = arith.mulf %271, %238 : vector<8x32xf32>
    %275 = arith.mulf %270, %272 : vector<8x32xf32>
    %276 = arith.addf %274, %275 : vector<8x32xf32>
    %277 = math.tanh %276 : vector<8x32xf32>
    %278 = arith.mulf %273, %277 : vector<8x32xf32>
    %cst_108 = arith.constant dense<0.000000e+00> : vector<8x128xf32>
    %279 = tpu.matmul %278, %105, %cst_108 {dimension_numbers = #tpu.dot_dimension_numbers<[1], [0], [0], [1], [0, 0, 1, 1], [], []>} : vector<8x32xf32>, vector<32x128xf32>, vector<8x128xf32> -> vector<8x128xf32>
    %cst_109 = arith.constant dense<0.000000e+00> : vector<8x128xf32>
    %280 = tpu.matmul %260, %106, %cst_109 {dimension_numbers = #tpu.dot_dimension_numbers<[1], [0], [0], [1], [0, 0, 1, 1], [], []>} : vector<8x32xf32>, vector<32x128xf32>, vector<8x128xf32> -> vector<8x128xf32>
    %281 = arith.addf %279, %280 : vector<8x128xf32>
    %282 = vector.broadcast %107 : vector<1x128xf32> to vector<8x128xf32>
    %283 = arith.addf %281, %282 : vector<8x128xf32>
    %284 = arith.negf %283 : vector<8x128xf32>
    %285 = math.exp %284 : vector<8x128xf32>
    %cst_110 = arith.constant 1.000000e+00 : f32
    %286 = vector.broadcast %cst_110 : f32 to vector<8x128xf32>
    %287 = arith.addf %286, %285 : vector<8x128xf32>
    %288 = arith.divf %286, %287 : vector<8x128xf32>
    %289 = math.tanh %283 : vector<8x128xf32>
    %290 = vector.extract_strided_slice %288 {offsets = [0, 0], sizes = [8, 32], strides = [1, 1]} : vector<8x128xf32> to vector<8x32xf32>
    %291 = vector.extract_strided_slice %288 {offsets = [0, 32], sizes = [8, 32], strides = [1, 1]} : vector<8x128xf32> to vector<8x32xf32>
    %292 = vector.extract_strided_slice %289 {offsets = [0, 64], sizes = [8, 32], strides = [1, 1]} : vector<8x128xf32> to vector<8x32xf32>
    %293 = vector.extract_strided_slice %288 {offsets = [0, 96], sizes = [8, 32], strides = [1, 1]} : vector<8x128xf32> to vector<8x32xf32>
    %294 = arith.mulf %291, %258 : vector<8x32xf32>
    %295 = arith.mulf %290, %292 : vector<8x32xf32>
    %296 = arith.addf %294, %295 : vector<8x32xf32>
    %297 = math.tanh %296 : vector<8x32xf32>
    %298 = arith.mulf %293, %297 : vector<8x32xf32>
    %c40_111 = arith.constant 40 : index
    %c0_112 = arith.constant 0 : index
    %299 = vector.load %arg12[%c40_111, %c0_112] : memref<64x128xf32, #tpu.memory_space<vmem>>, vector<8x128xf32>
    %cst_113 = arith.constant dense<0.000000e+00> : vector<8x128xf32>
    %300 = tpu.matmul %278, %104, %cst_113 {dimension_numbers = #tpu.dot_dimension_numbers<[1], [0], [0], [1], [0, 0, 1, 1], [], []>} : vector<8x32xf32>, vector<32x128xf32>, vector<8x128xf32> -> vector<8x128xf32>
    %301 = arith.addf %299, %300 : vector<8x128xf32>
    %302 = arith.negf %301 : vector<8x128xf32>
    %303 = math.exp %302 : vector<8x128xf32>
    %cst_114 = arith.constant 1.000000e+00 : f32
    %304 = vector.broadcast %cst_114 : f32 to vector<8x128xf32>
    %305 = arith.addf %304, %303 : vector<8x128xf32>
    %306 = arith.divf %304, %305 : vector<8x128xf32>
    %307 = math.tanh %301 : vector<8x128xf32>
    %308 = vector.extract_strided_slice %306 {offsets = [0, 0], sizes = [8, 32], strides = [1, 1]} : vector<8x128xf32> to vector<8x32xf32>
    %309 = vector.extract_strided_slice %306 {offsets = [0, 32], sizes = [8, 32], strides = [1, 1]} : vector<8x128xf32> to vector<8x32xf32>
    %310 = vector.extract_strided_slice %307 {offsets = [0, 64], sizes = [8, 32], strides = [1, 1]} : vector<8x128xf32> to vector<8x32xf32>
    %311 = vector.extract_strided_slice %306 {offsets = [0, 96], sizes = [8, 32], strides = [1, 1]} : vector<8x128xf32> to vector<8x32xf32>
    %312 = arith.mulf %309, %276 : vector<8x32xf32>
    %313 = arith.mulf %308, %310 : vector<8x32xf32>
    %314 = arith.addf %312, %313 : vector<8x32xf32>
    %315 = math.tanh %314 : vector<8x32xf32>
    %316 = arith.mulf %311, %315 : vector<8x32xf32>
    %cst_115 = arith.constant dense<0.000000e+00> : vector<8x128xf32>
    %317 = tpu.matmul %316, %105, %cst_115 {dimension_numbers = #tpu.dot_dimension_numbers<[1], [0], [0], [1], [0, 0, 1, 1], [], []>} : vector<8x32xf32>, vector<32x128xf32>, vector<8x128xf32> -> vector<8x128xf32>
    %cst_116 = arith.constant dense<0.000000e+00> : vector<8x128xf32>
    %318 = tpu.matmul %298, %106, %cst_116 {dimension_numbers = #tpu.dot_dimension_numbers<[1], [0], [0], [1], [0, 0, 1, 1], [], []>} : vector<8x32xf32>, vector<32x128xf32>, vector<8x128xf32> -> vector<8x128xf32>
    %319 = arith.addf %317, %318 : vector<8x128xf32>
    %320 = vector.broadcast %107 : vector<1x128xf32> to vector<8x128xf32>
    %321 = arith.addf %319, %320 : vector<8x128xf32>
    %322 = arith.negf %321 : vector<8x128xf32>
    %323 = math.exp %322 : vector<8x128xf32>
    %cst_117 = arith.constant 1.000000e+00 : f32
    %324 = vector.broadcast %cst_117 : f32 to vector<8x128xf32>
    %325 = arith.addf %324, %323 : vector<8x128xf32>
    %326 = arith.divf %324, %325 : vector<8x128xf32>
    %327 = math.tanh %321 : vector<8x128xf32>
    %328 = vector.extract_strided_slice %326 {offsets = [0, 0], sizes = [8, 32], strides = [1, 1]} : vector<8x128xf32> to vector<8x32xf32>
    %329 = vector.extract_strided_slice %326 {offsets = [0, 32], sizes = [8, 32], strides = [1, 1]} : vector<8x128xf32> to vector<8x32xf32>
    %330 = vector.extract_strided_slice %327 {offsets = [0, 64], sizes = [8, 32], strides = [1, 1]} : vector<8x128xf32> to vector<8x32xf32>
    %331 = vector.extract_strided_slice %326 {offsets = [0, 96], sizes = [8, 32], strides = [1, 1]} : vector<8x128xf32> to vector<8x32xf32>
    %332 = arith.mulf %329, %296 : vector<8x32xf32>
    %333 = arith.mulf %328, %330 : vector<8x32xf32>
    %334 = arith.addf %332, %333 : vector<8x32xf32>
    %335 = math.tanh %334 : vector<8x32xf32>
    %336 = arith.mulf %331, %335 : vector<8x32xf32>
    %c48_118 = arith.constant 48 : index
    %c0_119 = arith.constant 0 : index
    %337 = vector.load %arg12[%c48_118, %c0_119] : memref<64x128xf32, #tpu.memory_space<vmem>>, vector<8x128xf32>
    %cst_120 = arith.constant dense<0.000000e+00> : vector<8x128xf32>
    %338 = tpu.matmul %316, %104, %cst_120 {dimension_numbers = #tpu.dot_dimension_numbers<[1], [0], [0], [1], [0, 0, 1, 1], [], []>} : vector<8x32xf32>, vector<32x128xf32>, vector<8x128xf32> -> vector<8x128xf32>
    %339 = arith.addf %337, %338 : vector<8x128xf32>
    %340 = arith.negf %339 : vector<8x128xf32>
    %341 = math.exp %340 : vector<8x128xf32>
    %cst_121 = arith.constant 1.000000e+00 : f32
    %342 = vector.broadcast %cst_121 : f32 to vector<8x128xf32>
    %343 = arith.addf %342, %341 : vector<8x128xf32>
    %344 = arith.divf %342, %343 : vector<8x128xf32>
    %345 = math.tanh %339 : vector<8x128xf32>
    %346 = vector.extract_strided_slice %344 {offsets = [0, 0], sizes = [8, 32], strides = [1, 1]} : vector<8x128xf32> to vector<8x32xf32>
    %347 = vector.extract_strided_slice %344 {offsets = [0, 32], sizes = [8, 32], strides = [1, 1]} : vector<8x128xf32> to vector<8x32xf32>
    %348 = vector.extract_strided_slice %345 {offsets = [0, 64], sizes = [8, 32], strides = [1, 1]} : vector<8x128xf32> to vector<8x32xf32>
    %349 = vector.extract_strided_slice %344 {offsets = [0, 96], sizes = [8, 32], strides = [1, 1]} : vector<8x128xf32> to vector<8x32xf32>
    %350 = arith.mulf %347, %314 : vector<8x32xf32>
    %351 = arith.mulf %346, %348 : vector<8x32xf32>
    %352 = arith.addf %350, %351 : vector<8x32xf32>
    %353 = math.tanh %352 : vector<8x32xf32>
    %354 = arith.mulf %349, %353 : vector<8x32xf32>
    %cst_122 = arith.constant dense<0.000000e+00> : vector<8x128xf32>
    %355 = tpu.matmul %354, %105, %cst_122 {dimension_numbers = #tpu.dot_dimension_numbers<[1], [0], [0], [1], [0, 0, 1, 1], [], []>} : vector<8x32xf32>, vector<32x128xf32>, vector<8x128xf32> -> vector<8x128xf32>
    %cst_123 = arith.constant dense<0.000000e+00> : vector<8x128xf32>
    %356 = tpu.matmul %336, %106, %cst_123 {dimension_numbers = #tpu.dot_dimension_numbers<[1], [0], [0], [1], [0, 0, 1, 1], [], []>} : vector<8x32xf32>, vector<32x128xf32>, vector<8x128xf32> -> vector<8x128xf32>
    %357 = arith.addf %355, %356 : vector<8x128xf32>
    %358 = vector.broadcast %107 : vector<1x128xf32> to vector<8x128xf32>
    %359 = arith.addf %357, %358 : vector<8x128xf32>
    %360 = arith.negf %359 : vector<8x128xf32>
    %361 = math.exp %360 : vector<8x128xf32>
    %cst_124 = arith.constant 1.000000e+00 : f32
    %362 = vector.broadcast %cst_124 : f32 to vector<8x128xf32>
    %363 = arith.addf %362, %361 : vector<8x128xf32>
    %364 = arith.divf %362, %363 : vector<8x128xf32>
    %365 = math.tanh %359 : vector<8x128xf32>
    %366 = vector.extract_strided_slice %364 {offsets = [0, 0], sizes = [8, 32], strides = [1, 1]} : vector<8x128xf32> to vector<8x32xf32>
    %367 = vector.extract_strided_slice %364 {offsets = [0, 32], sizes = [8, 32], strides = [1, 1]} : vector<8x128xf32> to vector<8x32xf32>
    %368 = vector.extract_strided_slice %365 {offsets = [0, 64], sizes = [8, 32], strides = [1, 1]} : vector<8x128xf32> to vector<8x32xf32>
    %369 = vector.extract_strided_slice %364 {offsets = [0, 96], sizes = [8, 32], strides = [1, 1]} : vector<8x128xf32> to vector<8x32xf32>
    %370 = arith.mulf %367, %334 : vector<8x32xf32>
    %371 = arith.mulf %366, %368 : vector<8x32xf32>
    %372 = arith.addf %370, %371 : vector<8x32xf32>
    %373 = math.tanh %372 : vector<8x32xf32>
    %374 = arith.mulf %369, %373 : vector<8x32xf32>
    %c56_125 = arith.constant 56 : index
    %c0_126 = arith.constant 0 : index
    %375 = vector.load %arg12[%c56_125, %c0_126] : memref<64x128xf32, #tpu.memory_space<vmem>>, vector<8x128xf32>
    %cst_127 = arith.constant dense<0.000000e+00> : vector<8x128xf32>
    %376 = tpu.matmul %354, %104, %cst_127 {dimension_numbers = #tpu.dot_dimension_numbers<[1], [0], [0], [1], [0, 0, 1, 1], [], []>} : vector<8x32xf32>, vector<32x128xf32>, vector<8x128xf32> -> vector<8x128xf32>
    %377 = arith.addf %375, %376 : vector<8x128xf32>
    %378 = arith.negf %377 : vector<8x128xf32>
    %379 = math.exp %378 : vector<8x128xf32>
    %cst_128 = arith.constant 1.000000e+00 : f32
    %380 = vector.broadcast %cst_128 : f32 to vector<8x128xf32>
    %381 = arith.addf %380, %379 : vector<8x128xf32>
    %382 = arith.divf %380, %381 : vector<8x128xf32>
    %383 = math.tanh %377 : vector<8x128xf32>
    %384 = vector.extract_strided_slice %382 {offsets = [0, 0], sizes = [8, 32], strides = [1, 1]} : vector<8x128xf32> to vector<8x32xf32>
    %385 = vector.extract_strided_slice %382 {offsets = [0, 32], sizes = [8, 32], strides = [1, 1]} : vector<8x128xf32> to vector<8x32xf32>
    %386 = vector.extract_strided_slice %383 {offsets = [0, 64], sizes = [8, 32], strides = [1, 1]} : vector<8x128xf32> to vector<8x32xf32>
    %387 = vector.extract_strided_slice %382 {offsets = [0, 96], sizes = [8, 32], strides = [1, 1]} : vector<8x128xf32> to vector<8x32xf32>
    %388 = arith.mulf %385, %352 : vector<8x32xf32>
    %389 = arith.mulf %384, %386 : vector<8x32xf32>
    %390 = arith.addf %388, %389 : vector<8x32xf32>
    %391 = math.tanh %390 : vector<8x32xf32>
    %392 = arith.mulf %387, %391 : vector<8x32xf32>
    %cst_129 = arith.constant dense<0.000000e+00> : vector<8x128xf32>
    %393 = tpu.matmul %392, %105, %cst_129 {dimension_numbers = #tpu.dot_dimension_numbers<[1], [0], [0], [1], [0, 0, 1, 1], [], []>} : vector<8x32xf32>, vector<32x128xf32>, vector<8x128xf32> -> vector<8x128xf32>
    %cst_130 = arith.constant dense<0.000000e+00> : vector<8x128xf32>
    %394 = tpu.matmul %374, %106, %cst_130 {dimension_numbers = #tpu.dot_dimension_numbers<[1], [0], [0], [1], [0, 0, 1, 1], [], []>} : vector<8x32xf32>, vector<32x128xf32>, vector<8x128xf32> -> vector<8x128xf32>
    %395 = arith.addf %393, %394 : vector<8x128xf32>
    %396 = vector.broadcast %107 : vector<1x128xf32> to vector<8x128xf32>
    %397 = arith.addf %395, %396 : vector<8x128xf32>
    %398 = arith.negf %397 : vector<8x128xf32>
    %399 = math.exp %398 : vector<8x128xf32>
    %cst_131 = arith.constant 1.000000e+00 : f32
    %400 = vector.broadcast %cst_131 : f32 to vector<8x128xf32>
    %401 = arith.addf %400, %399 : vector<8x128xf32>
    %402 = arith.divf %400, %401 : vector<8x128xf32>
    %403 = math.tanh %397 : vector<8x128xf32>
    %404 = vector.extract_strided_slice %402 {offsets = [0, 0], sizes = [8, 32], strides = [1, 1]} : vector<8x128xf32> to vector<8x32xf32>
    %405 = vector.extract_strided_slice %402 {offsets = [0, 32], sizes = [8, 32], strides = [1, 1]} : vector<8x128xf32> to vector<8x32xf32>
    %406 = vector.extract_strided_slice %403 {offsets = [0, 64], sizes = [8, 32], strides = [1, 1]} : vector<8x128xf32> to vector<8x32xf32>
    %407 = vector.extract_strided_slice %402 {offsets = [0, 96], sizes = [8, 32], strides = [1, 1]} : vector<8x128xf32> to vector<8x32xf32>
    %408 = arith.mulf %405, %372 : vector<8x32xf32>
    %409 = arith.mulf %404, %406 : vector<8x32xf32>
    %410 = arith.addf %408, %409 : vector<8x32xf32>
    %411 = math.tanh %410 : vector<8x32xf32>
    %412 = arith.mulf %407, %411 : vector<8x32xf32>
    %c0_132 = arith.constant 0 : index
    %c0_133 = arith.constant 0 : index
    %413 = vector.load %arg9[%c0_132, %c0_133] : memref<32x64xf32, #tpu.memory_space<vmem>>, vector<32x64xf32>
    %c0_134 = arith.constant 0 : index
    %c0_135 = arith.constant 0 : index
    %414 = vector.load %arg10[%c0_134, %c0_135] : memref<1x64xf32, #tpu.memory_space<vmem>>, vector<1x64xf32>
    %415 = vector.extract_strided_slice %146 {offsets = [0, 0], sizes = [1, 32], strides = [1, 1]} : vector<8x32xf32> to vector<1x32xf32>
    %416 = vector.extract_strided_slice %184 {offsets = [0, 0], sizes = [1, 32], strides = [1, 1]} : vector<8x32xf32> to vector<1x32xf32>
    %417 = vector.extract_strided_slice %222 {offsets = [0, 0], sizes = [1, 32], strides = [1, 1]} : vector<8x32xf32> to vector<1x32xf32>
    %418 = vector.extract_strided_slice %260 {offsets = [0, 0], sizes = [1, 32], strides = [1, 1]} : vector<8x32xf32> to vector<1x32xf32>
    %419 = vector.extract_strided_slice %298 {offsets = [0, 0], sizes = [1, 32], strides = [1, 1]} : vector<8x32xf32> to vector<1x32xf32>
    %420 = vector.extract_strided_slice %336 {offsets = [0, 0], sizes = [1, 32], strides = [1, 1]} : vector<8x32xf32> to vector<1x32xf32>
    %421 = vector.extract_strided_slice %374 {offsets = [0, 0], sizes = [1, 32], strides = [1, 1]} : vector<8x32xf32> to vector<1x32xf32>
    %422 = vector.extract_strided_slice %412 {offsets = [0, 0], sizes = [1, 32], strides = [1, 1]} : vector<8x32xf32> to vector<1x32xf32>
    %423 = tpu.concatenate %415, %416, %417, %418, %419, %420, %421, %422 in 0 : vector<1x32xf32>, vector<1x32xf32>, vector<1x32xf32>, vector<1x32xf32>, vector<1x32xf32>, vector<1x32xf32>, vector<1x32xf32>, vector<1x32xf32> -> vector<8x32xf32>
    %cst_136 = arith.constant dense<0.000000e+00> : vector<8x64xf32>
    %424 = tpu.matmul %423, %413, %cst_136 {dimension_numbers = #tpu.dot_dimension_numbers<[1], [0], [0], [1], [0, 0, 1, 1], [], []>} : vector<8x32xf32>, vector<32x64xf32>, vector<8x64xf32> -> vector<8x64xf32>
    %425 = vector.broadcast %414 : vector<1x64xf32> to vector<8x64xf32>
    %426 = arith.addf %424, %425 : vector<8x64xf32>
    %c0_137 = arith.constant 0 : index
    %c0_138 = arith.constant 0 : index
    %c0_139 = arith.constant 0 : index
    %427 = vector.load %arg11[%c0_137, %c0_138, %c0_139] : memref<2x8x64xf32, #tpu.memory_space<vmem>>, vector<1x8x64xf32>
    %428 = vector.shape_cast %427 : vector<1x8x64xf32> to vector<8x64xf32>
    %429 = vector.shape_cast %426 : vector<8x64xf32> to vector<1x8x64xf32>
    tpu.vector_store %arg11[%c0_137, %c0_138, %c0_139], %429 {strides = array<i32>} : memref<2x8x64xf32, #tpu.memory_space<vmem>>, vector<1x8x64xf32>,
    %430 = vector.extract_strided_slice %146 {offsets = [1, 0], sizes = [1, 32], strides = [1, 1]} : vector<8x32xf32> to vector<1x32xf32>
    %431 = vector.extract_strided_slice %184 {offsets = [1, 0], sizes = [1, 32], strides = [1, 1]} : vector<8x32xf32> to vector<1x32xf32>
    %432 = vector.extract_strided_slice %222 {offsets = [1, 0], sizes = [1, 32], strides = [1, 1]} : vector<8x32xf32> to vector<1x32xf32>
    %433 = vector.extract_strided_slice %260 {offsets = [1, 0], sizes = [1, 32], strides = [1, 1]} : vector<8x32xf32> to vector<1x32xf32>
    %434 = vector.extract_strided_slice %298 {offsets = [1, 0], sizes = [1, 32], strides = [1, 1]} : vector<8x32xf32> to vector<1x32xf32>
    %435 = vector.extract_strided_slice %336 {offsets = [1, 0], sizes = [1, 32], strides = [1, 1]} : vector<8x32xf32> to vector<1x32xf32>
    %436 = vector.extract_strided_slice %374 {offsets = [1, 0], sizes = [1, 32], strides = [1, 1]} : vector<8x32xf32> to vector<1x32xf32>
    %437 = vector.extract_strided_slice %412 {offsets = [1, 0], sizes = [1, 32], strides = [1, 1]} : vector<8x32xf32> to vector<1x32xf32>
    %438 = tpu.concatenate %430, %431, %432, %433, %434, %435, %436, %437 in 0 : vector<1x32xf32>, vector<1x32xf32>, vector<1x32xf32>, vector<1x32xf32>, vector<1x32xf32>, vector<1x32xf32>, vector<1x32xf32>, vector<1x32xf32> -> vector<8x32xf32>
    %cst_140 = arith.constant dense<0.000000e+00> : vector<8x64xf32>
    %439 = tpu.matmul %438, %413, %cst_140 {dimension_numbers = #tpu.dot_dimension_numbers<[1], [0], [0], [1], [0, 0, 1, 1], [], []>} : vector<8x32xf32>, vector<32x64xf32>, vector<8x64xf32> -> vector<8x64xf32>
    %440 = vector.broadcast %414 : vector<1x64xf32> to vector<8x64xf32>
    %441 = arith.addf %439, %440 : vector<8x64xf32>
    %c1_141 = arith.constant 1 : index
    %c0_142 = arith.constant 0 : index
    %c0_143 = arith.constant 0 : index
    %442 = vector.load %arg11[%c1_141, %c0_142, %c0_143] : memref<2x8x64xf32, #tpu.memory_space<vmem>>, vector<1x8x64xf32>
    %443 = vector.shape_cast %442 : vector<1x8x64xf32> to vector<8x64xf32>
    %444 = vector.shape_cast %441 : vector<8x64xf32> to vector<1x8x64xf32>
    tpu.vector_store %arg11[%c1_141, %c0_142, %c0_143], %444 {strides = array<i32>} : memref<2x8x64xf32, #tpu.memory_space<vmem>>, vector<1x8x64xf32>,
    return
  }
}

</mosaic_0001>

<llo_original>
// kernel: tpu_custom_call.1
$region0: #{tpu_custom_call.1}
  #allocation0 [shape = 'u32[]', space=smem, size = 0x4, offset = 0x4, fixed_abs, tag = 'smem constant byte address 0x4 - core index']
  #allocation1 [shape = 'u32[144,128]{1,0:T(1,128)}', space=vmem, size = 0x12000, scoped, tag = 'internal scratch']
  #allocation2 [shape = 'f32[64,128]{1,0:T(8,128)}', space=vmem, size = 0x8000, scoped, tag = 'scratch operand']
  %s0 = inlined_call_operand.hbm [shape: s32[2,8], index: 0, kind: input, shape index: {}]
  %s1 = inlined_call_operand.vmem [shape: f32[2,32], index: 1, kind: input, shape index: {}]
  %s2 = inlined_call_operand.hbm [shape: f32[32,128], index: 2, kind: input, shape index: {}]
  %s3 = inlined_call_operand.hbm [shape: f32[1,128], index: 3, kind: input, shape index: {}]
  %s4 = inlined_call_operand.hbm [shape: f32[64,128], index: 4, kind: input, shape index: {}]
  %s5 = inlined_call_operand.hbm [shape: f32[32,128], index: 5, kind: input, shape index: {}]
  %s6 = inlined_call_operand.hbm [shape: f32[32,128], index: 6, kind: input, shape index: {}]
  %s7 = inlined_call_operand.hbm [shape: f32[32,128], index: 7, kind: input, shape index: {}]
  %s8 = inlined_call_operand.hbm [shape: f32[1,128], index: 8, kind: input, shape index: {}]
  %s9 = inlined_call_operand.vmem [shape: f32[32,64], index: 9, kind: input, shape index: {}]
  %s10 = inlined_call_operand.vmem [shape: f32[1,64], index: 10, kind: input, shape index: {}]
  %s11 = inlined_call_operand.hbm [shape: f32[2,8,64], index: 11, kind: output, shape index: {}]
  %s12 = sld [smem:[#allocation0]]
  $region86: #{tpu_custom_call.1} parent=0
    _
  %s14 = ssub.s32 1, %s12
  %s15 = scalar_select 0, %s14, %s12
  $region1: #{tpu_custom_call.1} parent=0
    #allocation3 [shape = 'u8[1024]{0}', space=smem, size = 0x400, scoped, tag = 'input window, operand 0, single buffered']
    #allocation4 [shape = 's32[1]{0}', space=sflag, size = 0x4, scoped, tag = 'scoped memory for tpu_custom_call.1']
    #allocation5 [shape = 's32[1]{0}', space=sflag, size = 0x4, scoped, tag = 'scoped memory for tpu_custom_call.1']
    #allocation6 [shape = 's32[1]{0}', space=sflag, size = 0x4, scoped, tag = 'scoped memory for tpu_custom_call.1']
    #allocation7 [shape = 'u8[16384]{0}', space=vmem, size = 0x4000, scoped, tag = 'input window, operand 2, single buffered']
    #allocation8 [shape = 'u8[512]{0}', space=vmem, size = 0x400, scoped, tag = 'input window, operand 3, single buffered']
    #allocation9 [shape = 's32[1]{0}', space=sflag, size = 0x4, scoped, tag = 'scoped memory for tpu_custom_call.1']
    #allocation10 [shape = 'u8[32768]{0}', space=vmem, size = 0x8000, scoped, tag = 'input window, operand 4, single buffered']
    #allocation11 [shape = 'u8[16384]{0}', space=vmem, size = 0x4000, scoped, tag = 'input window, operand 5, single buffered']
    #allocation12 [shape = 's32[1]{0}', space=sflag, size = 0x4, scoped, tag = 'scoped memory for tpu_custom_call.1']
    #allocation13 [shape = 'u8[16384]{0}', space=vmem, size = 0x4000, scoped, tag = 'input window, operand 6, single buffered']
    #allocation14 [shape = 'u8[16384]{0}', space=vmem, size = 0x4000, scoped, tag = 'input window, operand 7, single buffered']
    #allocation15 [shape = 's32[1]{0}', space=sflag, size = 0x4, scoped, tag = 'scoped memory for tpu_custom_call.1']
    #allocation16 [shape = 'u8[512]{0}', space=vmem, size = 0x400, scoped, tag = 'input window, operand 8, single buffered']
    #allocation17 [shape = 'u8[8192]{0}', space=vmem, size = 0x2000, scoped, tag = 'output window, operand 0, single buffered']
    %16 = vsyncpa [#allocation6], 0
    %17 = vsyncpa [#allocation4], 0
    %18 = vsyncpa [#allocation9], 0
    %19 = vsyncpa [#allocation12], 0
    %20 = vsyncpa [#allocation15], 0
    %21 = vsyncpa [#allocation5], 0
    // Predicated region
    $region2: #{tpu_custom_call.1} parent=1 // pred_check
      _
    $region3: #{tpu_custom_call.1} parent=1 // pred_check_branch
      %23 = sbr.rel (0) target = $region5
    $region4: #{tpu_custom_call.1} parent=1 // pred_region
      %s25 = ssub.s32 32, 32
      %26 = vsyncadd [#allocation6], %s25
      %29 = dma.hbm_to_smem %s0, 32, [#allocation3], [#allocation6]
    $region5: #{tpu_custom_call.1} parent=1 // pred_fallthru
      _
    // Predicated region
    $region6: #{tpu_custom_call.1} parent=1 // pred_check
      _
    $region7: #{tpu_custom_call.1} parent=1 // pred_check_branch
      %31 = sbr.rel (0) target = $region9
    $region8: #{tpu_custom_call.1} parent=1 // pred_region
      _
    $region9: #{tpu_custom_call.1} parent=1 // pred_fallthru
      _
    // Predicated region
    $region10: #{tpu_custom_call.1} parent=1 // pred_check
      _
    $region11: #{tpu_custom_call.1} parent=1 // pred_check_branch
      %33 = sbr.rel (0) target = $region13
    $region12: #{tpu_custom_call.1} parent=1 // pred_region
      %s35 = ssub.s32 512, 512
      %36 = vsyncadd [#allocation4], %s35
      %s37 = sshll.u32 [#allocation7], 4
      %s38 = int_to_ptr.vmem [resolvable:$true] %s37
      %43 = dma.hbm_to_vmem [thread:$0]  %s2, 512, %s38, [#allocation4], 128, 128, 8
    $region13: #{tpu_custom_call.1} parent=1 // pred_fallthru
      _
    // Predicated region
    $region14: #{tpu_custom_call.1} parent=1 // pred_check
      _
    $region15: #{tpu_custom_call.1} parent=1 // pred_check_branch
      %45 = sbr.rel (0) target = $region17
    $region16: #{tpu_custom_call.1} parent=1 // pred_region
      %s47 = ssub.s32 16, 16
      %48 = vsyncadd [#allocation9], %s47
      %s50 = sshll.u32 [#allocation8], 4
      %s51 = int_to_ptr.vmem [resolvable:$true] %s50
      %53 = dma.hbm_to_vmem [thread:$0]  %s3, 16, %s51, [#allocation9]
    $region17: #{tpu_custom_call.1} parent=1 // pred_fallthru
      _
    // Predicated region
    $region18: #{tpu_custom_call.1} parent=1 // pred_check
      _
    $region19: #{tpu_custom_call.1} parent=1 // pred_check_branch
      %55 = sbr.rel (0) target = $region21
    $region20: #{tpu_custom_call.1} parent=1 // pred_region
      %s57 = ssub.s32 1024, 1024
      %58 = vsyncadd [#allocation9], %s57
      %s59 = sshll.u32 [#allocation10], 4
      %s60 = int_to_ptr.vmem [resolvable:$true] %s59
      %65 = dma.hbm_to_vmem [thread:$0]  %s4, 1024, %s60, [#allocation9], 128, 128, 8
    $region21: #{tpu_custom_call.1} parent=1 // pred_fallthru
      _
    // Predicated region
    $region22: #{tpu_custom_call.1} parent=1 // pred_check
      _
    $region23: #{tpu_custom_call.1} parent=1 // pred_check_branch
      %67 = sbr.rel (0) target = $region25
    $region24: #{tpu_custom_call.1} parent=1 // pred_region
      %s69 = ssub.s32 512, 512
      %70 = vsyncadd [#allocation12], %s69
      %s71 = sshll.u32 [#allocation11], 4
      %s72 = int_to_ptr.vmem [resolvable:$true] %s71
      %77 = dma.hbm_to_vmem [thread:$0]  %s5, 512, %s72, [#allocation12], 128, 128, 8
    $region25: #{tpu_custom_call.1} parent=1 // pred_fallthru
      _
    // Predicated region
    $region26: #{tpu_custom_call.1} parent=1 // pred_check
      _
    $region27: #{tpu_custom_call.1} parent=1 // pred_check_branch
      %79 = sbr.rel (0) target = $region29
    $region28: #{tpu_custom_call.1} parent=1 // pred_region
      %s81 = ssub.s32 512, 512
      %82 = vsyncadd [#allocation12], %s81
      %s83 = sshll.u32 [#allocation13], 4
      %s84 = int_to_ptr.vmem [resolvable:$true] %s83
      %89 = dma.hbm_to_vmem [thread:$0]  %s6, 512, %s84, [#allocation12], 128, 128, 8
    $region29: #{tpu_custom_call.1} parent=1 // pred_fallthru
      _
    // Predicated region
    $region30: #{tpu_custom_call.1} parent=1 // pred_check
      _
    $region31: #{tpu_custom_call.1} parent=1 // pred_check_branch
      %91 = sbr.rel (0) target = $region33
    $region32: #{tpu_custom_call.1} parent=1 // pred_region
      %s93 = ssub.s32 512, 512
      %94 = vsyncadd [#allocation15], %s93
      %s95 = sshll.u32 [#allocation14], 4
      %s96 = int_to_ptr.vmem [resolvable:$true] %s95
      %101 = dma.hbm_to_vmem [thread:$0]  %s7, 512, %s96, [#allocation15], 128, 128, 8
    $region33: #{tpu_custom_call.1} parent=1 // pred_fallthru
      _
    // Predicated region
    $region34: #{tpu_custom_call.1} parent=1 // pred_check
      _
    $region35: #{tpu_custom_call.1} parent=1 // pred_check_branch
      %103 = sbr.rel (0) target = $region37
    $region36: #{tpu_custom_call.1} parent=1 // pred_region
      %s105 = ssub.s32 16, 16
      %106 = vsyncadd [#allocation15], %s105
      %s108 = sshll.u32 [#allocation16], 4
      %s109 = int_to_ptr.vmem [resolvable:$true] %s108
      %111 = dma.hbm_to_vmem [thread:$0]  %s8, 16, %s109, [#allocation15]
    $region37: #{tpu_custom_call.1} parent=1 // pred_fallthru
      _
    // Predicated region
    $region38: #{tpu_custom_call.1} parent=1 // pred_check
      _
    $region39: #{tpu_custom_call.1} parent=1 // pred_check_branch
      %113 = sbr.rel (0) target = $region41
    $region40: #{tpu_custom_call.1} parent=1 // pred_region
      _
    $region41: #{tpu_custom_call.1} parent=1 // pred_fallthru
      _
    // Predicated region
    $region42: #{tpu_custom_call.1} parent=1 // pred_check
      _
    $region43: #{tpu_custom_call.1} parent=1 // pred_check_branch
      %115 = sbr.rel (0) target = $region45
    $region44: #{tpu_custom_call.1} parent=1 // pred_region
      _
    $region45: #{tpu_custom_call.1} parent=1 // pred_fallthru
      _
    // Predicated region
    $region46: #{tpu_custom_call.1} parent=1 // pred_check
      _
    $region47: #{tpu_custom_call.1} parent=1 // pred_check_branch
      %117 = sbr.rel (0) target = $region49
    $region48: #{tpu_custom_call.1} parent=1 // pred_region
      %118 = dma.done [#allocation6], 32
    $region49: #{tpu_custom_call.1} parent=1 // pred_fallthru
      _
    // Predicated region
    $region50: #{tpu_custom_call.1} parent=1 // pred_check
      _
    $region51: #{tpu_custom_call.1} parent=1 // pred_check_branch
      %120 = sbr.rel (0) target = $region53
    $region52: #{tpu_custom_call.1} parent=1 // pred_region
      %121 = dma.done [#allocation4], 512
    $region53: #{tpu_custom_call.1} parent=1 // pred_fallthru
      _
    // Predicated region
    $region54: #{tpu_custom_call.1} parent=1 // pred_check
      _
    $region55: #{tpu_custom_call.1} parent=1 // pred_check_branch
      %123 = sbr.rel (0) target = $region57
    $region56: #{tpu_custom_call.1} parent=1 // pred_region
      %124 = dma.done [#allocation9], 16
    $region57: #{tpu_custom_call.1} parent=1 // pred_fallthru
      _
    // Predicated region
    $region58: #{tpu_custom_call.1} parent=1 // pred_check
      _
    $region59: #{tpu_custom_call.1} parent=1 // pred_check_branch
      %126 = sbr.rel (0) target = $region61
    $region60: #{tpu_custom_call.1} parent=1 // pred_region
      %127 = dma.done [#allocation9], 1024
    $region61: #{tpu_custom_call.1} parent=1 // pred_fallthru
      _
    // Predicated region
    $region62: #{tpu_custom_call.1} parent=1 // pred_check
      _
    $region63: #{tpu_custom_call.1} parent=1 // pred_check_branch
      %129 = sbr.rel (0) target = $region65
    $region64: #{tpu_custom_call.1} parent=1 // pred_region
      %130 = dma.done [#allocation12], 512
    $region65: #{tpu_custom_call.1} parent=1 // pred_fallthru
      _
    // Predicated region
    $region66: #{tpu_custom_call.1} parent=1 // pred_check
      _
    $region67: #{tpu_custom_call.1} parent=1 // pred_check_branch
      %132 = sbr.rel (0) target = $region69
    $region68: #{tpu_custom_call.1} parent=1 // pred_region
      %133 = dma.done [#allocation12], 512
    $region69: #{tpu_custom_call.1} parent=1 // pred_fallthru
      _
    // Predicated region
    $region70: #{tpu_custom_call.1} parent=1 // pred_check
      _
    $region71: #{tpu_custom_call.1} parent=1 // pred_check_branch
      %135 = sbr.rel (0) target = $region73
    $region72: #{tpu_custom_call.1} parent=1 // pred_region
      %136 = dma.done [#allocation15], 512
    $region73: #{tpu_custom_call.1} parent=1 // pred_fallthru
      _
    // Predicated region
    $region74: #{tpu_custom_call.1} parent=1 // pred_check
      _
    $region75: #{tpu_custom_call.1} parent=1 // pred_check_branch
      %138 = sbr.rel (0) target = $region77
    $region76: #{tpu_custom_call.1} parent=1 // pred_region
      %139 = dma.done [#allocation15], 16
    $region77: #{tpu_custom_call.1} parent=1 // pred_fallthru
      _
    %140 = sfence
    %v141 = vld [vmem:[%s1] sm:$0x3]
    %v142 = vld [vmem:[#allocation7] sm:$0xff]
    %v143 = vld [vmem:[#allocation7 + $0x8] sm:$0xff]
    %v144 = vld [vmem:[#allocation7 + $0x10] sm:$0xff]
    %v145 = vld [vmem:[#allocation7 + $0x18] sm:$0xff]
    %v146 = vld [vmem:[#allocation8] sm:$0x1]
    %v148 = vlaneseq
    %v149 = vshrl.u32 %v148, 7
    %v150 = vsub.s32 0, %v149
    %v151 = vrot.slane %v146, %v150
    %vm153 = vcmask 261120
    %v155 = vsel %vm153, %v141, 0
    %157 = vmatprep.subr.mxu0 0.0
    %158 = vmatpush1.msra.mxu0 %v142
    %159 = vmatprep.subr.mxu0 0.0
    %160 = vmatpush1.msra.mxu0 %v143
    %161 = vmatprep.subr.mxu0 0.0
    %162 = vmatpush1.msra.mxu0 %v144
    %163 = vmatprep.subr.mxu0 0.0
    %164 = vmatpush1.msra.mxu0 %v145
    %165 = vmatprep.subr.mxu0 0.0
    %166 = vmatpush1.msra.mxu0 0.0
    %167 = vmatprep.subr.mxu0 0.0
    %168 = vmatpush1.msra.mxu0 0.0
    %169 = vmatprep.subr.mxu0 0.0
    %170 = vmatpush1.msra.mxu0 0.0
    %171 = vmatprep.subr.mxu0 0.0
    %172 = vmatpush1.msra.mxu0 0.0
    %173 = vmatprep.subr.mxu0 0.0
    %174 = vmatpush1.msra.mxu0 0.0
    %175 = vmatprep.subr.mxu0 0.0
    %176 = vmatpush1.msra.mxu0 0.0
    %177 = vmatprep.subr.mxu0 0.0
    %178 = vmatpush1.msra.mxu0 0.0
    %179 = vmatprep.subr.mxu0 0.0
    %180 = vmatpush1.msra.mxu0 0.0
    %181 = vmatprep.subr.mxu0 0.0
    %182 = vmatpush1.msra.mxu0 0.0
    %183 = vmatprep.subr.mxu0 0.0
    %184 = vmatpush1.msra.mxu0 0.0
    %185 = vmatprep.subr.mxu0 0.0
    %186 = vmatpush1.msra.mxu0 0.0
    %187 = vmatprep.subr.mxu0 0.0
    %188 = vmatpush1.msra.mxu0 0.0
    %189 = vmatprep.subr.mxu0 0.0
    %190 = vmatpush1.msra.mxu0 0.0
    %191 = vmatprep.subr.mxu0 0.0
    %192 = vmatpush1.msra.mxu0 0.0
    %193 = vmatprep.subr.mxu0 0.0
    %194 = vmatpush1.msra.mxu0 0.0
    %195 = vmatprep.subr.mxu0 0.0
    %196 = vmatpush1.msra.mxu0 0.0
    %197 = vmatprep.subr.mxu0 0.0
    %198 = vmatpush1.msra.mxu0 0.0
    %199 = vmatprep.subr.mxu0 0.0
    %200 = vmatpush1.msra.mxu0 0.0
    %201 = vmatprep.subr.mxu0 0.0
    %202 = vmatpush1.msra.mxu0 0.0
    %203 = vmatprep.subr.mxu0 0.0
    %204 = vmatpush1.msra.mxu0 0.0
    %205 = vmatprep.subr.mxu0 0.0
    %206 = vmatpush1.msra.mxu0 0.0
    %207 = vmatprep.subr.mxu0 0.0
    %208 = vmatpush1.msra.mxu0 0.0
    %209 = vmatprep.subr.mxu0 0.0
    %210 = vmatpush1.msra.mxu0 0.0
    %211 = vmatprep.subr.mxu0 0.0
    %212 = vmatpush1.msra.mxu0 0.0
    %213 = vmatprep.subr.mxu0 0.0
    %214 = vmatpush1.msra.mxu0 0.0
    %215 = vmatprep.subr.mxu0 0.0
    %216 = vmatpush1.msra.mxu0 0.0
    %217 = vmatprep.subr.mxu0 0.0
    %218 = vmatpush1.msra.mxu0 0.0
    %219 = vmatprep.subr.mxu0 0.0
    %220 = vmatpush1.msra.mxu0 0.0
    %221 = vmatprep.mubr.f32.mxu0 0.0
    %222 = vmatmul.mubr.f32.gmra.mrb[0].mxu0 %v155
    %v223 = vpop.f32.mrb[0].mxu0
    %v224 = vadd.f32 %v151, %v223
    %v225 = vpop.f32.mrb[0].mxu0
    %226 = vdwg.mxu0
    %227 = vst [vmem:[#allocation2] sm:$0xff] 0.0
    %228 = vst [vmem:[#allocation2 + $0x8] sm:$0xff] 0.0
    %229 = vst [vmem:[#allocation2 + $0x10] sm:$0xff] 0.0
    %230 = vst [vmem:[#allocation2 + $0x18] sm:$0xff] 0.0
    %231 = vst [vmem:[#allocation2 + $0x20] sm:$0xff] 0.0
    %232 = vst [vmem:[#allocation2 + $0x28] sm:$0xff] 0.0
    %233 = vst [vmem:[#allocation2 + $0x30] sm:$0xff] 0.0
    %234 = vst [vmem:[#allocation2 + $0x38] sm:$0xff] 0.0
    %s235 = sld [smem:[#allocation3]]
    %s236 = scalar_lea.vmem [#allocation10], %s235
    %v237 = vld [vmem:[%s236] sm:$0x1]
    %v238 = vadd.f32 %v237, %v224
    %239 = vst [vmem:[#allocation2] sm:$0x1] %v238
    %s240 = sld [smem:[#allocation3 + $0x80]]
    %s241 = scalar_lea.vmem [#allocation10], %s240
    %v242 = vld [vmem:[%s241] sm:$0x1]
    %v244 = vrot.slane %v224, 1
    %v246 = vadd.f32 %v242, %v244
    %247 = vst [vmem:[#allocation2 + $0x1] sm:$0x1] %v246
    %s248 = sld [smem:[#allocation3 + $0x1]]
    %s249 = scalar_lea.vmem [#allocation10], %s248
    %v250 = vld [vmem:[%s249] sm:$0x1]
    %v251 = vadd.f32 %v250, %v224
    %252 = vst [vmem:[#allocation2 + $0x8] sm:$0x1] %v251
    %s253 = sld [smem:[#allocation3 + $0x81]]
    %s254 = scalar_lea.vmem [#allocation10], %s253
    %v255 = vld [vmem:[%s254] sm:$0x1]
    %v256 = vadd.f32 %v255, %v244
    %257 = vst [vmem:[#allocation2 + $0x9] sm:$0x1] %v256
    %s258 = sld [smem:[#allocation3 + $0x2]]
    %s259 = scalar_lea.vmem [#allocation10], %s258
    %v260 = vld [vmem:[%s259] sm:$0x1]
    %v261 = vadd.f32 %v260, %v224
    %262 = vst [vmem:[#allocation2 + $0x10] sm:$0x1] %v261
    %s263 = sld [smem:[#allocation3 + $0x82]]
    %s264 = scalar_lea.vmem [#allocation10], %s263
    %v265 = vld [vmem:[%s264] sm:$0x1]
    %v266 = vadd.f32 %v265, %v244
    %267 = vst [vmem:[#allocation2 + $0x11] sm:$0x1] %v266
    %s268 = sld [smem:[#allocation3 + $0x3]]
    %s269 = scalar_lea.vmem [#allocation10], %s268
    %v270 = vld [vmem:[%s269] sm:$0x1]
    %v271 = vadd.f32 %v270, %v224
    %272 = vst [vmem:[#allocation2 + $0x18] sm:$0x1] %v271
    %s273 = sld [smem:[#allocation3 + $0x83]]
    %s274 = scalar_lea.vmem [#allocation10], %s273
    %v275 = vld [vmem:[%s274] sm:$0x1]
    %v276 = vadd.f32 %v275, %v244
    %277 = vst [vmem:[#allocation2 + $0x19] sm:$0x1] %v276
    %s278 = sld [smem:[#allocation3 + $0x4]]
    %s279 = scalar_lea.vmem [#allocation10], %s278
    %v280 = vld [vmem:[%s279] sm:$0x1]
    %v281 = vadd.f32 %v280, %v224
    %282 = vst [vmem:[#allocation2 + $0x20] sm:$0x1] %v281
    %s283 = sld [smem:[#allocation3 + $0x84]]
    %s284 = scalar_lea.vmem [#allocation10], %s283
    %v285 = vld [vmem:[%s284] sm:$0x1]
    %v286 = vadd.f32 %v285, %v244
    %287 = vst [vmem:[#allocation2 + $0x21] sm:$0x1] %v286
    %s288 = sld [smem:[#allocation3 + $0x5]]
    %s289 = scalar_lea.vmem [#allocation10], %s288
    %v290 = vld [vmem:[%s289] sm:$0x1]
    %v291 = vadd.f32 %v290, %v224
    %292 = vst [vmem:[#allocation2 + $0x28] sm:$0x1] %v291
    %s293 = sld [smem:[#allocation3 + $0x85]]
    %s294 = scalar_lea.vmem [#allocation10], %s293
    %v295 = vld [vmem:[%s294] sm:$0x1]
    %v296 = vadd.f32 %v295, %v244
    %297 = vst [vmem:[#allocation2 + $0x29] sm:$0x1] %v296
    %s298 = sld [smem:[#allocation3 + $0x6]]
    %s299 = scalar_lea.vmem [#allocation10], %s298
    %v300 = vld [vmem:[%s299] sm:$0x1]
    %v301 = vadd.f32 %v300, %v224
    %302 = vst [vmem:[#allocation2 + $0x30] sm:$0x1] %v301
    %s303 = sld [smem:[#allocation3 + $0x86]]
    %s304 = scalar_lea.vmem [#allocation10], %s303
    %v305 = vld [vmem:[%s304] sm:$0x1]
    %v306 = vadd.f32 %v305, %v244
    %307 = vst [vmem:[#allocation2 + $0x31] sm:$0x1] %v306
    %s308 = sld [smem:[#allocation3 + $0x7]]
    %s309 = scalar_lea.vmem [#allocation10], %s308
    %v310 = vld [vmem:[%s309] sm:$0x1]
    %v311 = vadd.f32 %v310, %v224
    %312 = vst [vmem:[#allocation2 + $0x38] sm:$0x1] %v311
    %s313 = sld [smem:[#allocation3 + $0x87]]
    %s314 = scalar_lea.vmem [#allocation10], %s313
    %v315 = vld [vmem:[%s314] sm:$0x1]
    %v316 = vadd.f32 %v315, %v244
    %317 = vst [vmem:[#allocation2 + $0x39] sm:$0x1] %v316
    %v318 = vld [vmem:[#allocation11] sm:$0xff]
    %v319 = vld [vmem:[#allocation11 + $0x8] sm:$0xff]
    %v320 = vld [vmem:[#allocation11 + $0x10] sm:$0xff]
    %v321 = vld [vmem:[#allocation11 + $0x18] sm:$0xff]
    %v322 = vld [vmem:[#allocation13] sm:$0xff]
    %v323 = vld [vmem:[#allocation13 + $0x8] sm:$0xff]
    %v324 = vld [vmem:[#allocation13 + $0x10] sm:$0xff]
    %v325 = vld [vmem:[#allocation13 + $0x18] sm:$0xff]
    %v326 = vld [vmem:[#allocation14] sm:$0xff]
    %v327 = vld [vmem:[#allocation14 + $0x8] sm:$0xff]
    %v328 = vld [vmem:[#allocation14 + $0x10] sm:$0xff]
    %v329 = vld [vmem:[#allocation14 + $0x18] sm:$0xff]
    %v330 = vld [vmem:[#allocation16] sm:$0x1]
    %v331 = vld [vmem:[#allocation2] sm:$0xff]
    %v333 = vsel %vm153, 0.0, 0
    %335 = vmatprep.subr.mxu0 0.0
    %336 = vmatpush1.msra.mxu0 %v318
    %337 = vmatprep.subr.mxu0 0.0
    %338 = vmatpush1.msra.mxu0 %v319
    %339 = vmatprep.subr.mxu0 0.0
    %340 = vmatpush1.msra.mxu0 %v320
    %341 = vmatprep.subr.mxu0 0.0
    %342 = vmatpush1.msra.mxu0 %v321
    %343 = vmatprep.subr.mxu0 0.0
    %344 = vmatpush1.msra.mxu0 0.0
    %345 = vmatprep.subr.mxu0 0.0
    %346 = vmatpush1.msra.mxu0 0.0
    %347 = vmatprep.subr.mxu0 0.0
    %348 = vmatpush1.msra.mxu0 0.0
    %349 = vmatprep.subr.mxu0 0.0
    %350 = vmatpush1.msra.mxu0 0.0
    %351 = vmatprep.subr.mxu0 0.0
    %352 = vmatpush1.msra.mxu0 0.0
    %353 = vmatprep.subr.mxu0 0.0
    %354 = vmatpush1.msra.mxu0 0.0
    %355 = vmatprep.subr.mxu0 0.0
    %356 = vmatpush1.msra.mxu0 0.0
    %357 = vmatprep.subr.mxu0 0.0
    %358 = vmatpush1.msra.mxu0 0.0
    %359 = vmatprep.subr.mxu0 0.0
    %360 = vmatpush1.msra.mxu0 0.0
    %361 = vmatprep.subr.mxu0 0.0
    %362 = vmatpush1.msra.mxu0 0.0
    %363 = vmatprep.subr.mxu0 0.0
    %364 = vmatpush1.msra.mxu0 0.0
    %365 = vmatprep.subr.mxu0 0.0
    %366 = vmatpush1.msra.mxu0 0.0
    %367 = vmatprep.subr.mxu0 0.0
    %368 = vmatpush1.msra.mxu0 0.0
    %369 = vmatprep.subr.mxu0 0.0
    %370 = vmatpush1.msra.mxu0 0.0
    %371 = vmatprep.subr.mxu0 0.0
    %372 = vmatpush1.msra.mxu0 0.0
    %373 = vmatprep.subr.mxu0 0.0
    %374 = vmatpush1.msra.mxu0 0.0
    %375 = vmatprep.subr.mxu0 0.0
    %376 = vmatpush1.msra.mxu0 0.0
    %377 = vmatprep.subr.mxu0 0.0
    %378 = vmatpush1.msra.mxu0 0.0
    %379 = vmatprep.subr.mxu0 0.0
    %380 = vmatpush1.msra.mxu0 0.0
    %381 = vmatprep.subr.mxu0 0.0
    %382 = vmatpush1.msra.mxu0 0.0
    %383 = vmatprep.subr.mxu0 0.0
    %384 = vmatpush1.msra.mxu0 0.0
    %385 = vmatprep.subr.mxu0 0.0
    %386 = vmatpush1.msra.mxu0 0.0
    %387 = vmatprep.subr.mxu0 0.0
    %388 = vmatpush1.msra.mxu0 0.0
    %389 = vmatprep.subr.mxu0 0.0
    %390 = vmatpush1.msra.mxu0 0.0
    %391 = vmatprep.subr.mxu0 0.0
    %392 = vmatpush1.msra.mxu0 0.0
    %393 = vmatprep.subr.mxu0 0.0
    %394 = vmatpush1.msra.mxu0 0.0
    %395 = vmatprep.subr.mxu0 0.0
    %396 = vmatpush1.msra.mxu0 0.0
    %397 = vmatprep.subr.mxu0 0.0
    %398 = vmatpush1.msra.mxu0 0.0
    %399 = vmatprep.mubr.f32.mxu0 0.0
    %400 = vmatmul.mubr.f32.gmra.mrb[0].mxu0 %v333
    %v401 = vpop.f32.mrb[0].mxu0
    %v402 = vadd.f32 0.0, %v401
    %v403 = vpop.f32.mrb[0].mxu0
    %404 = vdwg.mxu0
    %v405 = vadd.f32 %v331, %v402
    %v406 = vxor.u32 %v405, 2147483648
    %v407 = vmul.f32 %v406, 1.442695
    %v408 = vpow.pop %v407
    %v409 = vadd.f32 %v408, 1.0
    %v410 = vrcp.pop %v409
    %v411 = vmul.f32 1.0, %v410
    %v412 = vtanh.pop %v405
    %v413 = vmul.f32 %v411, 0.0
    %415 = vrot.lane.b32.xlu0 %v412, 64
    %v416 = vpop.permute.xlu0 %415
    %v418 = vmul.f32 %v411, %v416
    %420 = vrot.lane.b32.xlu0 %v418, 32
    %v421 = vpop.permute.xlu0 %420
    %v423 = vadd.f32 %v413, %v421
    %v424 = vtanh.pop %v423
    %426 = vrot.lane.b32.xlu0 %v424, 64
    %v427 = vpop.permute.xlu0 %426
    %v429 = vmul.f32 %v411, %v427
    %430 = vmatprep.subr.mxu0 0.0
    %431 = vmatpush1.msra.mxu0 %v326
    %432 = vmatprep.subr.mxu0 0.0
    %433 = vmatpush1.msra.mxu0 %v327
    %434 = vmatprep.subr.mxu0 0.0
    %435 = vmatpush1.msra.mxu0 %v328
    %436 = vmatprep.subr.mxu0 0.0
    %437 = vmatpush1.msra.mxu0 %v329
    %438 = vmatprep.subr.mxu0 0.0
    %439 = vmatpush1.msra.mxu0 0.0
    %440 = vmatprep.subr.mxu0 0.0
    %441 = vmatpush1.msra.mxu0 0.0
    %442 = vmatprep.subr.mxu0 0.0
    %443 = vmatpush1.msra.mxu0 0.0
    %444 = vmatprep.subr.mxu0 0.0
    %445 = vmatpush1.msra.mxu0 0.0
    %446 = vmatprep.subr.mxu0 0.0
    %447 = vmatpush1.msra.mxu0 0.0
    %448 = vmatprep.subr.mxu0 0.0
    %449 = vmatpush1.msra.mxu0 0.0
    %450 = vmatprep.subr.mxu0 0.0
    %451 = vmatpush1.msra.mxu0 0.0
    %452 = vmatprep.subr.mxu0 0.0
    %453 = vmatpush1.msra.mxu0 0.0
    %454 = vmatprep.subr.mxu0 0.0
    %455 = vmatpush1.msra.mxu0 0.0
    %456 = vmatprep.subr.mxu0 0.0
    %457 = vmatpush1.msra.mxu0 0.0
    %458 = vmatprep.subr.mxu0 0.0
    %459 = vmatpush1.msra.mxu0 0.0
    %460 = vmatprep.subr.mxu0 0.0
    %461 = vmatpush1.msra.mxu0 0.0
    %462 = vmatprep.subr.mxu0 0.0
    %463 = vmatpush1.msra.mxu0 0.0
    %464 = vmatprep.subr.mxu0 0.0
    %465 = vmatpush1.msra.mxu0 0.0
    %466 = vmatprep.subr.mxu0 0.0
    %467 = vmatpush1.msra.mxu0 0.0
    %468 = vmatprep.subr.mxu0 0.0
    %469 = vmatpush1.msra.mxu0 0.0
    %470 = vmatprep.subr.mxu0 0.0
    %471 = vmatpush1.msra.mxu0 0.0
    %472 = vmatprep.subr.mxu0 0.0
    %473 = vmatpush1.msra.mxu0 0.0
    %474 = vmatprep.subr.mxu0 0.0
    %475 = vmatpush1.msra.mxu0 0.0
    %476 = vmatprep.subr.mxu0 0.0
    %477 = vmatpush1.msra.mxu0 0.0
    %478 = vmatprep.subr.mxu0 0.0
    %479 = vmatpush1.msra.mxu0 0.0
    %480 = vmatprep.subr.mxu0 0.0
    %481 = vmatpush1.msra.mxu0 0.0
    %482 = vmatprep.subr.mxu0 0.0
    %483 = vmatpush1.msra.mxu0 0.0
    %484 = vmatprep.subr.mxu0 0.0
    %485 = vmatpush1.msra.mxu0 0.0
    %486 = vmatprep.subr.mxu0 0.0
    %487 = vmatpush1.msra.mxu0 0.0
    %488 = vmatprep.subr.mxu0 0.0
    %489 = vmatpush1.msra.mxu0 0.0
    %490 = vmatprep.subr.mxu0 0.0
    %491 = vmatpush1.msra.mxu0 0.0
    %492 = vmatprep.subr.mxu0 0.0
    %493 = vmatpush1.msra.mxu0 0.0
    %494 = vmatprep.mubr.f32.mxu0 0.0
    %495 = vmatmul.mubr.f32.gmra.mrb[0].mxu0 %v333
    %v496 = vpop.f32.mrb[0].mxu0
    %v497 = vadd.f32 0.0, %v496
    %v498 = vpop.f32.mrb[0].mxu0
    %499 = vdwg.mxu0
    %501 = vrot.lane.b32.xlu0 %v429, 32
    %v502 = vpop.permute.xlu0 %501
    %v503 = vsel %vm153, %v502, 0
    %505 = vmatprep.subr.mxu0 0.0
    %506 = vmatpush1.msra.mxu0 %v322
    %507 = vmatprep.subr.mxu0 0.0
    %508 = vmatpush1.msra.mxu0 %v323
    %509 = vmatprep.subr.mxu0 0.0
    %510 = vmatpush1.msra.mxu0 %v324
    %511 = vmatprep.subr.mxu0 0.0
    %512 = vmatpush1.msra.mxu0 %v325
    %513 = vmatprep.subr.mxu0 0.0
    %514 = vmatpush1.msra.mxu0 0.0
    %515 = vmatprep.subr.mxu0 0.0
    %516 = vmatpush1.msra.mxu0 0.0
    %517 = vmatprep.subr.mxu0 0.0
    %518 = vmatpush1.msra.mxu0 0.0
    %519 = vmatprep.subr.mxu0 0.0
    %520 = vmatpush1.msra.mxu0 0.0
    %521 = vmatprep.subr.mxu0 0.0
    %522 = vmatpush1.msra.mxu0 0.0
    %523 = vmatprep.subr.mxu0 0.0
    %524 = vmatpush1.msra.mxu0 0.0
    %525 = vmatprep.subr.mxu0 0.0
    %526 = vmatpush1.msra.mxu0 0.0
    %527 = vmatprep.subr.mxu0 0.0
    %528 = vmatpush1.msra.mxu0 0.0
    %529 = vmatprep.subr.mxu0 0.0
    %530 = vmatpush1.msra.mxu0 0.0
    %531 = vmatprep.subr.mxu0 0.0
    %532 = vmatpush1.msra.mxu0 0.0
    %533 = vmatprep.subr.mxu0 0.0
    %534 = vmatpush1.msra.mxu0 0.0
    %535 = vmatprep.subr.mxu0 0.0
    %536 = vmatpush1.msra.mxu0 0.0
    %537 = vmatprep.subr.mxu0 0.0
    %538 = vmatpush1.msra.mxu0 0.0
    %539 = vmatprep.subr.mxu0 0.0
    %540 = vmatpush1.msra.mxu0 0.0
    %541 = vmatprep.subr.mxu0 0.0
    %542 = vmatpush1.msra.mxu0 0.0
    %543 = vmatprep.subr.mxu0 0.0
    %544 = vmatpush1.msra.mxu0 0.0
    %545 = vmatprep.subr.mxu0 0.0
    %546 = vmatpush1.msra.mxu0 0.0
    %547 = vmatprep.subr.mxu0 0.0
    %548 = vmatpush1.msra.mxu0 0.0
    %549 = vmatprep.subr.mxu0 0.0
    %550 = vmatpush1.msra.mxu0 0.0
    %551 = vmatprep.subr.mxu0 0.0
    %552 = vmatpush1.msra.mxu0 0.0
    %553 = vmatprep.subr.mxu0 0.0
    %554 = vmatpush1.msra.mxu0 0.0
    %555 = vmatprep.subr.mxu0 0.0
    %556 = vmatpush1.msra.mxu0 0.0
    %557 = vmatprep.subr.mxu0 0.0
    %558 = vmatpush1.msra.mxu0 0.0
    %559 = vmatprep.subr.mxu0 0.0
    %560 = vmatpush1.msra.mxu0 0.0
    %561 = vmatprep.subr.mxu0 0.0
    %562 = vmatpush1.msra.mxu0 0.0
    %563 = vmatprep.subr.mxu0 0.0
    %564 = vmatpush1.msra.mxu0 0.0
    %565 = vmatprep.subr.mxu0 0.0
    %566 = vmatpush1.msra.mxu0 0.0
    %567 = vmatprep.subr.mxu0 0.0
    %568 = vmatpush1.msra.mxu0 0.0
    %569 = vmatprep.mubr.f32.mxu0 0.0
    %570 = vmatmul.mubr.f32.gmra.mrb[0].mxu0 %v503
    %v571 = vpop.f32.mrb[0].mxu0
    %v572 = vadd.f32 %v497, %v571
    %v573 = vpop.f32.mrb[0].mxu0
    %574 = vdwg.mxu0
    %v576 = vlaneseq
    %v577 = vshrl.u32 %v576, 7
    %v578 = vsub.s32 0, %v577
    %v579 = vrot.slane %v330, %v578
    %v581 = vadd.f32 %v572, %v579
    %v582 = vxor.u32 %v581, 2147483648
    %v583 = vmul.f32 %v582, 1.442695
    %v584 = vpow.pop %v583
    %v585 = vadd.f32 %v584, 1.0
    %v586 = vrcp.pop %v585
    %v587 = vmul.f32 1.0, %v586
    %v588 = vtanh.pop %v581
    %v589 = vmul.f32 %v587, 0.0
    %591 = vrot.lane.b32.xlu0 %v588, 64
    %v592 = vpop.permute.xlu0 %591
    %v594 = vmul.f32 %v587, %v592
    %596 = vrot.lane.b32.xlu0 %v594, 32
    %v597 = vpop.permute.xlu0 %596
    %v599 = vadd.f32 %v589, %v597
    %v600 = vtanh.pop %v599
    %602 = vrot.lane.b32.xlu0 %v600, 64
    %v603 = vpop.permute.xlu0 %602
    %v605 = vmul.f32 %v587, %v603
    %v606 = vld [vmem:[#allocation2 + $0x8] sm:$0xff]
    %607 = vmatprep.subr.mxu0 0.0
    %608 = vmatpush1.msra.mxu0 %v318
    %609 = vmatprep.subr.mxu0 0.0
    %610 = vmatpush1.msra.mxu0 %v319
    %611 = vmatprep.subr.mxu0 0.0
    %612 = vmatpush1.msra.mxu0 %v320
    %613 = vmatprep.subr.mxu0 0.0
    %614 = vmatpush1.msra.mxu0 %v321
    %615 = vmatprep.subr.mxu0 0.0
    %616 = vmatpush1.msra.mxu0 0.0
    %617 = vmatprep.subr.mxu0 0.0
    %618 = vmatpush1.msra.mxu0 0.0
    %619 = vmatprep.subr.mxu0 0.0
    %620 = vmatpush1.msra.mxu0 0.0
    %621 = vmatprep.subr.mxu0 0.0
    %622 = vmatpush1.msra.mxu0 0.0
    %623 = vmatprep.subr.mxu0 0.0
    %624 = vmatpush1.msra.mxu0 0.0
    %625 = vmatprep.subr.mxu0 0.0
    %626 = vmatpush1.msra.mxu0 0.0
    %627 = vmatprep.subr.mxu0 0.0
    %628 = vmatpush1.msra.mxu0 0.0
    %629 = vmatprep.subr.mxu0 0.0
    %630 = vmatpush1.msra.mxu0 0.0
    %631 = vmatprep.subr.mxu0 0.0
    %632 = vmatpush1.msra.mxu0 0.0
    %633 = vmatprep.subr.mxu0 0.0
    %634 = vmatpush1.msra.mxu0 0.0
    %635 = vmatprep.subr.mxu0 0.0
    %636 = vmatpush1.msra.mxu0 0.0
    %637 = vmatprep.subr.mxu0 0.0
    %638 = vmatpush1.msra.mxu0 0.0
    %639 = vmatprep.subr.mxu0 0.0
    %640 = vmatpush1.msra.mxu0 0.0
    %641 = vmatprep.subr.mxu0 0.0
    %642 = vmatpush1.msra.mxu0 0.0
    %643 = vmatprep.subr.mxu0 0.0
    %644 = vmatpush1.msra.mxu0 0.0
    %645 = vmatprep.subr.mxu0 0.0
    %646 = vmatpush1.msra.mxu0 0.0
    %647 = vmatprep.subr.mxu0 0.0
    %648 = vmatpush1.msra.mxu0 0.0
    %649 = vmatprep.subr.mxu0 0.0
    %650 = vmatpush1.msra.mxu0 0.0
    %651 = vmatprep.subr.mxu0 0.0
    %652 = vmatpush1.msra.mxu0 0.0
    %653 = vmatprep.subr.mxu0 0.0
    %654 = vmatpush1.msra.mxu0 0.0
    %655 = vmatprep.subr.mxu0 0.0
    %656 = vmatpush1.msra.mxu0 0.0
    %657 = vmatprep.subr.mxu0 0.0
    %658 = vmatpush1.msra.mxu0 0.0
    %659 = vmatprep.subr.mxu0 0.0
    %660 = vmatpush1.msra.mxu0 0.0
    %661 = vmatprep.subr.mxu0 0.0
    %662 = vmatpush1.msra.mxu0 0.0
    %663 = vmatprep.subr.mxu0 0.0
    %664 = vmatpush1.msra.mxu0 0.0
    %665 = vmatprep.subr.mxu0 0.0
    %666 = vmatpush1.msra.mxu0 0.0
    %667 = vmatprep.subr.mxu0 0.0
    %668 = vmatpush1.msra.mxu0 0.0
    %669 = vmatprep.subr.mxu0 0.0
    %670 = vmatpush1.msra.mxu0 0.0
    %671 = vmatprep.mubr.f32.mxu0 0.0
    %672 = vmatmul.mubr.f32.gmra.mrb[0].mxu0 %v503
    %v673 = vpop.f32.mrb[0].mxu0
    %v674 = vadd.f32 0.0, %v673
    %v675 = vpop.f32.mrb[0].mxu0
    %676 = vdwg.mxu0
    %v677 = vadd.f32 %v606, %v674
    %v678 = vxor.u32 %v677, 2147483648
    %v679 = vmul.f32 %v678, 1.442695
    %v680 = vpow.pop %v679
    %v681 = vadd.f32 %v680, 1.0
    %v682 = vrcp.pop %v681
    %v683 = vmul.f32 1.0, %v682
    %v684 = vtanh.pop %v677
    %v685 = vmul.f32 %v683, %v423
    %687 = vrot.lane.b32.xlu0 %v684, 64
    %v688 = vpop.permute.xlu0 %687
    %v690 = vmul.f32 %v683, %v688
    %692 = vrot.lane.b32.xlu0 %v690, 32
    %v693 = vpop.permute.xlu0 %692
    %v695 = vadd.f32 %v685, %v693
    %v696 = vtanh.pop %v695
    %698 = vrot.lane.b32.xlu0 %v696, 64
    %v699 = vpop.permute.xlu0 %698
    %v701 = vmul.f32 %v683, %v699
    %703 = vrot.lane.b32.xlu0 %v605, 32
    %v704 = vpop.permute.xlu0 %703
    %v705 = vsel %vm153, %v704, 0
    %707 = vmatprep.subr.mxu0 0.0
    %708 = vmatpush1.msra.mxu0 %v326
    %709 = vmatprep.subr.mxu0 0.0
    %710 = vmatpush1.msra.mxu0 %v327
    %711 = vmatprep.subr.mxu0 0.0
    %712 = vmatpush1.msra.mxu0 %v328
    %713 = vmatprep.subr.mxu0 0.0
    %714 = vmatpush1.msra.mxu0 %v329
    %715 = vmatprep.subr.mxu0 0.0
    %716 = vmatpush1.msra.mxu0 0.0
    %717 = vmatprep.subr.mxu0 0.0
    %718 = vmatpush1.msra.mxu0 0.0
    %719 = vmatprep.subr.mxu0 0.0
    %720 = vmatpush1.msra.mxu0 0.0
    %721 = vmatprep.subr.mxu0 0.0
    %722 = vmatpush1.msra.mxu0 0.0
    %723 = vmatprep.subr.mxu0 0.0
    %724 = vmatpush1.msra.mxu0 0.0
    %725 = vmatprep.subr.mxu0 0.0
    %726 = vmatpush1.msra.mxu0 0.0
    %727 = vmatprep.subr.mxu0 0.0
    %728 = vmatpush1.msra.mxu0 0.0
    %729 = vmatprep.subr.mxu0 0.0
    %730 = vmatpush1.msra.mxu0 0.0
    %731 = vmatprep.subr.mxu0 0.0
    %732 = vmatpush1.msra.mxu0 0.0
    %733 = vmatprep.subr.mxu0 0.0
    %734 = vmatpush1.msra.mxu0 0.0
    %735 = vmatprep.subr.mxu0 0.0
    %736 = vmatpush1.msra.mxu0 0.0
    %737 = vmatprep.subr.mxu0 0.0
    %738 = vmatpush1.msra.mxu0 0.0
    %739 = vmatprep.subr.mxu0 0.0
    %740 = vmatpush1.msra.mxu0 0.0
    %741 = vmatprep.subr.mxu0 0.0
    %742 = vmatpush1.msra.mxu0 0.0
    %743 = vmatprep.subr.mxu0 0.0
    %744 = vmatpush1.msra.mxu0 0.0
    %745 = vmatprep.subr.mxu0 0.0
    %746 = vmatpush1.msra.mxu0 0.0
    %747 = vmatprep.subr.mxu0 0.0
    %748 = vmatpush1.msra.mxu0 0.0
    %749 = vmatprep.subr.mxu0 0.0
    %750 = vmatpush1.msra.mxu0 0.0
    %751 = vmatprep.subr.mxu0 0.0
    %752 = vmatpush1.msra.mxu0 0.0
    %753 = vmatprep.subr.mxu0 0.0
    %754 = vmatpush1.msra.mxu0 0.0
    %755 = vmatprep.subr.mxu0 0.0
    %756 = vmatpush1.msra.mxu0 0.0
    %757 = vmatprep.subr.mxu0 0.0
    %758 = vmatpush1.msra.mxu0 0.0
    %759 = vmatprep.subr.mxu0 0.0
    %760 = vmatpush1.msra.mxu0 0.0
    %761 = vmatprep.subr.mxu0 0.0
    %762 = vmatpush1.msra.mxu0 0.0
    %763 = vmatprep.subr.mxu0 0.0
    %764 = vmatpush1.msra.mxu0 0.0
    %765 = vmatprep.subr.mxu0 0.0
    %766 = vmatpush1.msra.mxu0 0.0
    %767 = vmatprep.subr.mxu0 0.0
    %768 = vmatpush1.msra.mxu0 0.0
    %769 = vmatprep.subr.mxu0 0.0
    %770 = vmatpush1.msra.mxu0 0.0
    %771 = vmatprep.mubr.f32.mxu0 0.0
    %772 = vmatmul.mubr.f32.gmra.mrb[0].mxu0 %v705
    %v773 = vpop.f32.mrb[0].mxu0
    %v774 = vadd.f32 0.0, %v773
    %v775 = vpop.f32.mrb[0].mxu0
    %776 = vdwg.mxu0
    %778 = vrot.lane.b32.xlu0 %v701, 32
    %v779 = vpop.permute.xlu0 %778
    %v780 = vsel %vm153, %v779, 0
    %782 = vmatprep.subr.mxu0 0.0
    %783 = vmatpush1.msra.mxu0 %v322
    %784 = vmatprep.subr.mxu0 0.0
    %785 = vmatpush1.msra.mxu0 %v323
    %786 = vmatprep.subr.mxu0 0.0
    %787 = vmatpush1.msra.mxu0 %v324
    %788 = vmatprep.subr.mxu0 0.0
    %789 = vmatpush1.msra.mxu0 %v325
    %790 = vmatprep.subr.mxu0 0.0
    %791 = vmatpush1.msra.mxu0 0.0
    %792 = vmatprep.subr.mxu0 0.0
    %793 = vmatpush1.msra.mxu0 0.0
    %794 = vmatprep.subr.mxu0 0.0
    %795 = vmatpush1.msra.mxu0 0.0
    %796 = vmatprep.subr.mxu0 0.0
    %797 = vmatpush1.msra.mxu0 0.0
    %798 = vmatprep.subr.mxu0 0.0
    %799 = vmatpush1.msra.mxu0 0.0
    %800 = vmatprep.subr.mxu0 0.0
    %801 = vmatpush1.msra.mxu0 0.0
    %802 = vmatprep.subr.mxu0 0.0
    %803 = vmatpush1.msra.mxu0 0.0
    %804 = vmatprep.subr.mxu0 0.0
    %805 = vmatpush1.msra.mxu0 0.0
    %806 = vmatprep.subr.mxu0 0.0
    %807 = vmatpush1.msra.mxu0 0.0
    %808 = vmatprep.subr.mxu0 0.0
    %809 = vmatpush1.msra.mxu0 0.0
    %810 = vmatprep.subr.mxu0 0.0
    %811 = vmatpush1.msra.mxu0 0.0
    %812 = vmatprep.subr.mxu0 0.0
    %813 = vmatpush1.msra.mxu0 0.0
    %814 = vmatprep.subr.mxu0 0.0
    %815 = vmatpush1.msra.mxu0 0.0
    %816 = vmatprep.subr.mxu0 0.0
    %817 = vmatpush1.msra.mxu0 0.0
    %818 = vmatprep.subr.mxu0 0.0
    %819 = vmatpush1.msra.mxu0 0.0
    %820 = vmatprep.subr.mxu0 0.0
    %821 = vmatpush1.msra.mxu0 0.0
    %822 = vmatprep.subr.mxu0 0.0
    %823 = vmatpush1.msra.mxu0 0.0
    %824 = vmatprep.subr.mxu0 0.0
    %825 = vmatpush1.msra.mxu0 0.0
    %826 = vmatprep.subr.mxu0 0.0
    %827 = vmatpush1.msra.mxu0 0.0
    %828 = vmatprep.subr.mxu0 0.0
    %829 = vmatpush1.msra.mxu0 0.0
    %830 = vmatprep.subr.mxu0 0.0
    %831 = vmatpush1.msra.mxu0 0.0
    %832 = vmatprep.subr.mxu0 0.0
    %833 = vmatpush1.msra.mxu0 0.0
    %834 = vmatprep.subr.mxu0 0.0
    %835 = vmatpush1.msra.mxu0 0.0
    %836 = vmatprep.subr.mxu0 0.0
    %837 = vmatpush1.msra.mxu0 0.0
    %838 = vmatprep.subr.mxu0 0.0
    %839 = vmatpush1.msra.mxu0 0.0
    %840 = vmatprep.subr.mxu0 0.0
    %841 = vmatpush1.msra.mxu0 0.0
    %842 = vmatprep.subr.mxu0 0.0
    %843 = vmatpush1.msra.mxu0 0.0
    %844 = vmatprep.subr.mxu0 0.0
    %845 = vmatpush1.msra.mxu0 0.0
    %846 = vmatprep.mubr.f32.mxu0 0.0
    %847 = vmatmul.mubr.f32.gmra.mrb[0].mxu0 %v780
    %v848 = vpop.f32.mrb[0].mxu0
    %v849 = vadd.f32 %v774, %v848
    %v850 = vpop.f32.mrb[0].mxu0
    %851 = vdwg.mxu0
    %v852 = vadd.f32 %v849, %v579
    %v853 = vxor.u32 %v852, 2147483648
    %v854 = vmul.f32 %v853, 1.442695
    %v855 = vpow.pop %v854
    %v856 = vadd.f32 %v855, 1.0
    %v857 = vrcp.pop %v856
    %v858 = vmul.f32 1.0, %v857
    %v859 = vtanh.pop %v852
    %v860 = vmul.f32 %v858, %v599
    %862 = vrot.lane.b32.xlu0 %v859, 64
    %v863 = vpop.permute.xlu0 %862
    %v865 = vmul.f32 %v858, %v863
    %867 = vrot.lane.b32.xlu0 %v865, 32
    %v868 = vpop.permute.xlu0 %867
    %v870 = vadd.f32 %v860, %v868
    %v871 = vtanh.pop %v870
    %873 = vrot.lane.b32.xlu0 %v871, 64
    %v874 = vpop.permute.xlu0 %873
    %v876 = vmul.f32 %v858, %v874
    %v877 = vld [vmem:[#allocation2 + $0x10] sm:$0xff]
    %878 = vmatprep.subr.mxu0 0.0
    %879 = vmatpush1.msra.mxu0 %v318
    %880 = vmatprep.subr.mxu0 0.0
    %881 = vmatpush1.msra.mxu0 %v319
    %882 = vmatprep.subr.mxu0 0.0
    %883 = vmatpush1.msra.mxu0 %v320
    %884 = vmatprep.subr.mxu0 0.0
    %885 = vmatpush1.msra.mxu0 %v321
    %886 = vmatprep.subr.mxu0 0.0
    %887 = vmatpush1.msra.mxu0 0.0
    %888 = vmatprep.subr.mxu0 0.0
    %889 = vmatpush1.msra.mxu0 0.0
    %890 = vmatprep.subr.mxu0 0.0
    %891 = vmatpush1.msra.mxu0 0.0
    %892 = vmatprep.subr.mxu0 0.0
    %893 = vmatpush1.msra.mxu0 0.0
    %894 = vmatprep.subr.mxu0 0.0
    %895 = vmatpush1.msra.mxu0 0.0
    %896 = vmatprep.subr.mxu0 0.0
    %897 = vmatpush1.msra.mxu0 0.0
    %898 = vmatprep.subr.mxu0 0.0
    %899 = vmatpush1.msra.mxu0 0.0
    %900 = vmatprep.subr.mxu0 0.0
    %901 = vmatpush1.msra.mxu0 0.0
    %902 = vmatprep.subr.mxu0 0.0
    %903 = vmatpush1.msra.mxu0 0.0
    %904 = vmatprep.subr.mxu0 0.0
    %905 = vmatpush1.msra.mxu0 0.0
    %906 = vmatprep.subr.mxu0 0.0
    %907 = vmatpush1.msra.mxu0 0.0
    %908 = vmatprep.subr.mxu0 0.0
    %909 = vmatpush1.msra.mxu0 0.0
    %910 = vmatprep.subr.mxu0 0.0
    %911 = vmatpush1.msra.mxu0 0.0
    %912 = vmatprep.subr.mxu0 0.0
    %913 = vmatpush1.msra.mxu0 0.0
    %914 = vmatprep.subr.mxu0 0.0
    %915 = vmatpush1.msra.mxu0 0.0
    %916 = vmatprep.subr.mxu0 0.0
    %917 = vmatpush1.msra.mxu0 0.0
    %918 = vmatprep.subr.mxu0 0.0
    %919 = vmatpush1.msra.mxu0 0.0
    %920 = vmatprep.subr.mxu0 0.0
    %921 = vmatpush1.msra.mxu0 0.0
    %922 = vmatprep.subr.mxu0 0.0
    %923 = vmatpush1.msra.mxu0 0.0
    %924 = vmatprep.subr.mxu0 0.0
    %925 = vmatpush1.msra.mxu0 0.0
    %926 = vmatprep.subr.mxu0 0.0
    %927 = vmatpush1.msra.mxu0 0.0
    %928 = vmatprep.subr.mxu0 0.0
    %929 = vmatpush1.msra.mxu0 0.0
    %930 = vmatprep.subr.mxu0 0.0
    %931 = vmatpush1.msra.mxu0 0.0
    %932 = vmatprep.subr.mxu0 0.0
    %933 = vmatpush1.msra.mxu0 0.0
    %934 = vmatprep.subr.mxu0 0.0
    %935 = vmatpush1.msra.mxu0 0.0
    %936 = vmatprep.subr.mxu0 0.0
    %937 = vmatpush1.msra.mxu0 0.0
    %938 = vmatprep.subr.mxu0 0.0
    %939 = vmatpush1.msra.mxu0 0.0
    %940 = vmatprep.subr.mxu0 0.0
    %941 = vmatpush1.msra.mxu0 0.0
    %942 = vmatprep.mubr.f32.mxu0 0.0
    %943 = vmatmul.mubr.f32.gmra.mrb[0].mxu0 %v780
    %v944 = vpop.f32.mrb[0].mxu0
    %v945 = vadd.f32 0.0, %v944
    %v946 = vpop.f32.mrb[0].mxu0
    %947 = vdwg.mxu0
    %v948 = vadd.f32 %v877, %v945
    %v949 = vxor.u32 %v948, 2147483648
    %v950 = vmul.f32 %v949, 1.442695
    %v951 = vpow.pop %v950
    %v952 = vadd.f32 %v951, 1.0
    %v953 = vrcp.pop %v952
    %v954 = vmul.f32 1.0, %v953
    %v955 = vtanh.pop %v948
    %v956 = vmul.f32 %v954, %v695
    %958 = vrot.lane.b32.xlu0 %v955, 64
    %v959 = vpop.permute.xlu0 %958
    %v961 = vmul.f32 %v954, %v959
    %963 = vrot.lane.b32.xlu0 %v961, 32
    %v964 = vpop.permute.xlu0 %963
    %v966 = vadd.f32 %v956, %v964
    %v967 = vtanh.pop %v966
    %969 = vrot.lane.b32.xlu0 %v967, 64
    %v970 = vpop.permute.xlu0 %969
    %v972 = vmul.f32 %v954, %v970
    %974 = vrot.lane.b32.xlu0 %v876, 32
    %v975 = vpop.permute.xlu0 %974
    %v976 = vsel %vm153, %v975, 0
    %978 = vmatprep.subr.mxu0 0.0
    %979 = vmatpush1.msra.mxu0 %v326
    %980 = vmatprep.subr.mxu0 0.0
    %981 = vmatpush1.msra.mxu0 %v327
    %982 = vmatprep.subr.mxu0 0.0
    %983 = vmatpush1.msra.mxu0 %v328
    %984 = vmatprep.subr.mxu0 0.0
    %985 = vmatpush1.msra.mxu0 %v329
    %986 = vmatprep.subr.mxu0 0.0
    %987 = vmatpush1.msra.mxu0 0.0
    %988 = vmatprep.subr.mxu0 0.0
    %989 = vmatpush1.msra.mxu0 0.0
    %990 = vmatprep.subr.mxu0 0.0
    %991 = vmatpush1.msra.mxu0 0.0
    %992 = vmatprep.subr.mxu0 0.0
    %993 = vmatpush1.msra.mxu0 0.0
    %994 = vmatprep.subr.mxu0 0.0
    %995 = vmatpush1.msra.mxu0 0.0
    %996 = vmatprep.subr.mxu0 0.0
    %997 = vmatpush1.msra.mxu0 0.0
    %998 = vmatprep.subr.mxu0 0.0
    %999 = vmatpush1.msra.mxu0 0.0
    %1000 = vmatprep.subr.mxu0 0.0
    %1001 = vmatpush1.msra.mxu0 0.0
    %1002 = vmatprep.subr.mxu0 0.0
    %1003 = vmatpush1.msra.mxu0 0.0
    %1004 = vmatprep.subr.mxu0 0.0
    %1005 = vmatpush1.msra.mxu0 0.0
    %1006 = vmatprep.subr.mxu0 0.0
    %1007 = vmatpush1.msra.mxu0 0.0
    %1008 = vmatprep.subr.mxu0 0.0
    %1009 = vmatpush1.msra.mxu0 0.0
    %1010 = vmatprep.subr.mxu0 0.0
    %1011 = vmatpush1.msra.mxu0 0.0
    %1012 = vmatprep.subr.mxu0 0.0
    %1013 = vmatpush1.msra.mxu0 0.0
    %1014 = vmatprep.subr.mxu0 0.0
    %1015 = vmatpush1.msra.mxu0 0.0
    %1016 = vmatprep.subr.mxu0 0.0
    %1017 = vmatpush1.msra.mxu0 0.0
    %1018 = vmatprep.subr.mxu0 0.0
    %1019 = vmatpush1.msra.mxu0 0.0
    %1020 = vmatprep.subr.mxu0 0.0
    %1021 = vmatpush1.msra.mxu0 0.0
    %1022 = vmatprep.subr.mxu0 0.0
    %1023 = vmatpush1.msra.mxu0 0.0
    %1024 = vmatprep.subr.mxu0 0.0
    %1025 = vmatpush1.msra.mxu0 0.0
    %1026 = vmatprep.subr.mxu0 0.0
    %1027 = vmatpush1.msra.mxu0 0.0
    %1028 = vmatprep.subr.mxu0 0.0
    %1029 = vmatpush1.msra.mxu0 0.0
    %1030 = vmatprep.subr.mxu0 0.0
    %1031 = vmatpush1.msra.mxu0 0.0
    %1032 = vmatprep.subr.mxu0 0.0
    %1033 = vmatpush1.msra.mxu0 0.0
    %1034 = vmatprep.subr.mxu0 0.0
    %1035 = vmatpush1.msra.mxu0 0.0
    %1036 = vmatprep.subr.mxu0 0.0
    %1037 = vmatpush1.msra.mxu0 0.0
    %1038 = vmatprep.subr.mxu0 0.0
    %1039 = vmatpush1.msra.mxu0 0.0
    %1040 = vmatprep.subr.mxu0 0.0
    %1041 = vmatpush1.msra.mxu0 0.0
    %1042 = vmatprep.mubr.f32.mxu0 0.0
    %1043 = vmatmul.mubr.f32.gmra.mrb[0].mxu0 %v976
    %v1044 = vpop.f32.mrb[0].mxu0
    %v1045 = vadd.f32 0.0, %v1044
    %v1046 = vpop.f32.mrb[0].mxu0
    %1047 = vdwg.mxu0
    %1049 = vrot.lane.b32.xlu0 %v972, 32
    %v1050 = vpop.permute.xlu0 %1049
    %v1051 = vsel %vm153, %v1050, 0
    %1053 = vmatprep.subr.mxu0 0.0
    %1054 = vmatpush1.msra.mxu0 %v322
    %1055 = vmatprep.subr.mxu0 0.0
    %1056 = vmatpush1.msra.mxu0 %v323
    %1057 = vmatprep.subr.mxu0 0.0
    %1058 = vmatpush1.msra.mxu0 %v324
    %1059 = vmatprep.subr.mxu0 0.0
    %1060 = vmatpush1.msra.mxu0 %v325
    %1061 = vmatprep.subr.mxu0 0.0
    %1062 = vmatpush1.msra.mxu0 0.0
    %1063 = vmatprep.subr.mxu0 0.0
    %1064 = vmatpush1.msra.mxu0 0.0
    %1065 = vmatprep.subr.mxu0 0.0
    %1066 = vmatpush1.msra.mxu0 0.0
    %1067 = vmatprep.subr.mxu0 0.0
    %1068 = vmatpush1.msra.mxu0 0.0
    %1069 = vmatprep.subr.mxu0 0.0
    %1070 = vmatpush1.msra.mxu0 0.0
    %1071 = vmatprep.subr.mxu0 0.0
    %1072 = vmatpush1.msra.mxu0 0.0
    %1073 = vmatprep.subr.mxu0 0.0
    %1074 = vmatpush1.msra.mxu0 0.0
    %1075 = vmatprep.subr.mxu0 0.0
    %1076 = vmatpush1.msra.mxu0 0.0
    %1077 = vmatprep.subr.mxu0 0.0
    %1078 = vmatpush1.msra.mxu0 0.0
    %1079 = vmatprep.subr.mxu0 0.0
    %1080 = vmatpush1.msra.mxu0 0.0
    %1081 = vmatprep.subr.mxu0 0.0
    %1082 = vmatpush1.msra.mxu0 0.0
    %1083 = vmatprep.subr.mxu0 0.0
    %1084 = vmatpush1.msra.mxu0 0.0
    %1085 = vmatprep.subr.mxu0 0.0
    %1086 = vmatpush1.msra.mxu0 0.0
    %1087 = vmatprep.subr.mxu0 0.0
    %1088 = vmatpush1.msra.mxu0 0.0
    %1089 = vmatprep.subr.mxu0 0.0
    %1090 = vmatpush1.msra.mxu0 0.0
    %1091 = vmatprep.subr.mxu0 0.0
    %1092 = vmatpush1.msra.mxu0 0.0
    %1093 = vmatprep.subr.mxu0 0.0
    %1094 = vmatpush1.msra.mxu0 0.0
    %1095 = vmatprep.subr.mxu0 0.0
    %1096 = vmatpush1.msra.mxu0 0.0
    %1097 = vmatprep.subr.mxu0 0.0
    %1098 = vmatpush1.msra.mxu0 0.0
    %1099 = vmatprep.subr.mxu0 0.0
    %1100 = vmatpush1.msra.mxu0 0.0
    %1101 = vmatprep.subr.mxu0 0.0
    %1102 = vmatpush1.msra.mxu0 0.0
    %1103 = vmatprep.subr.mxu0 0.0
    %1104 = vmatpush1.msra.mxu0 0.0
    %1105 = vmatprep.subr.mxu0 0.0
    %1106 = vmatpush1.msra.mxu0 0.0
    %1107 = vmatprep.subr.mxu0 0.0
    %1108 = vmatpush1.msra.mxu0 0.0
    %1109 = vmatprep.subr.mxu0 0.0
    %1110 = vmatpush1.msra.mxu0 0.0
    %1111 = vmatprep.subr.mxu0 0.0
    %1112 = vmatpush1.msra.mxu0 0.0
    %1113 = vmatprep.subr.mxu0 0.0
    %1114 = vmatpush1.msra.mxu0 0.0
    %1115 = vmatprep.subr.mxu0 0.0
    %1116 = vmatpush1.msra.mxu0 0.0
    %1117 = vmatprep.mubr.f32.mxu0 0.0
    %1118 = vmatmul.mubr.f32.gmra.mrb[0].mxu0 %v1051
    %v1119 = vpop.f32.mrb[0].mxu0
    %v1120 = vadd.f32 %v1045, %v1119
    %v1121 = vpop.f32.mrb[0].mxu0
    %1122 = vdwg.mxu0
    %v1123 = vadd.f32 %v1120, %v579
    %v1124 = vxor.u32 %v1123, 2147483648
    %v1125 = vmul.f32 %v1124, 1.442695
    %v1126 = vpow.pop %v1125
    %v1127 = vadd.f32 %v1126, 1.0
    %v1128 = vrcp.pop %v1127
    %v1129 = vmul.f32 1.0, %v1128
    %v1130 = vtanh.pop %v1123
    %v1131 = vmul.f32 %v1129, %v870
    %1133 = vrot.lane.b32.xlu0 %v1130, 64
    %v1134 = vpop.permute.xlu0 %1133
    %v1136 = vmul.f32 %v1129, %v1134
    %1138 = vrot.lane.b32.xlu0 %v1136, 32
    %v1139 = vpop.permute.xlu0 %1138
    %v1141 = vadd.f32 %v1131, %v1139
    %v1142 = vtanh.pop %v1141
    %1144 = vrot.lane.b32.xlu0 %v1142, 64
    %v1145 = vpop.permute.xlu0 %1144
    %v1147 = vmul.f32 %v1129, %v1145
    %v1148 = vld [vmem:[#allocation2 + $0x18] sm:$0xff]
    %1149 = vmatprep.subr.mxu0 0.0
    %1150 = vmatpush1.msra.mxu0 %v318
    %1151 = vmatprep.subr.mxu0 0.0
    %1152 = vmatpush1.msra.mxu0 %v319
    %1153 = vmatprep.subr.mxu0 0.0
    %1154 = vmatpush1.msra.mxu0 %v320
    %1155 = vmatprep.subr.mxu0 0.0
    %1156 = vmatpush1.msra.mxu0 %v321
    %1157 = vmatprep.subr.mxu0 0.0
    %1158 = vmatpush1.msra.mxu0 0.0
    %1159 = vmatprep.subr.mxu0 0.0
    %1160 = vmatpush1.msra.mxu0 0.0
    %1161 = vmatprep.subr.mxu0 0.0
    %1162 = vmatpush1.msra.mxu0 0.0
    %1163 = vmatprep.subr.mxu0 0.0
    %1164 = vmatpush1.msra.mxu0 0.0
    %1165 = vmatprep.subr.mxu0 0.0
    %1166 = vmatpush1.msra.mxu0 0.0
    %1167 = vmatprep.subr.mxu0 0.0
    %1168 = vmatpush1.msra.mxu0 0.0
    %1169 = vmatprep.subr.mxu0 0.0
    %1170 = vmatpush1.msra.mxu0 0.0
    %1171 = vmatprep.subr.mxu0 0.0
    %1172 = vmatpush1.msra.mxu0 0.0
    %1173 = vmatprep.subr.mxu0 0.0
    %1174 = vmatpush1.msra.mxu0 0.0
    %1175 = vmatprep.subr.mxu0 0.0
    %1176 = vmatpush1.msra.mxu0 0.0
    %1177 = vmatprep.subr.mxu0 0.0
    %1178 = vmatpush1.msra.mxu0 0.0
    %1179 = vmatprep.subr.mxu0 0.0
    %1180 = vmatpush1.msra.mxu0 0.0
    %1181 = vmatprep.subr.mxu0 0.0
    %1182 = vmatpush1.msra.mxu0 0.0
    %1183 = vmatprep.subr.mxu0 0.0
    %1184 = vmatpush1.msra.mxu0 0.0
    %1185 = vmatprep.subr.mxu0 0.0
    %1186 = vmatpush1.msra.mxu0 0.0
    %1187 = vmatprep.subr.mxu0 0.0
    %1188 = vmatpush1.msra.mxu0 0.0
    %1189 = vmatprep.subr.mxu0 0.0
    %1190 = vmatpush1.msra.mxu0 0.0
    %1191 = vmatprep.subr.mxu0 0.0
    %1192 = vmatpush1.msra.mxu0 0.0
    %1193 = vmatprep.subr.mxu0 0.0
    %1194 = vmatpush1.msra.mxu0 0.0
    %1195 = vmatprep.subr.mxu0 0.0
    %1196 = vmatpush1.msra.mxu0 0.0
    %1197 = vmatprep.subr.mxu0 0.0
    %1198 = vmatpush1.msra.mxu0 0.0
    %1199 = vmatprep.subr.mxu0 0.0
    %1200 = vmatpush1.msra.mxu0 0.0
    %1201 = vmatprep.subr.mxu0 0.0
    %1202 = vmatpush1.msra.mxu0 0.0
    %1203 = vmatprep.subr.mxu0 0.0
    %1204 = vmatpush1.msra.mxu0 0.0
    %1205 = vmatprep.subr.mxu0 0.0
    %1206 = vmatpush1.msra.mxu0 0.0
    %1207 = vmatprep.subr.mxu0 0.0
    %1208 = vmatpush1.msra.mxu0 0.0
    %1209 = vmatprep.subr.mxu0 0.0
    %1210 = vmatpush1.msra.mxu0 0.0
    %1211 = vmatprep.subr.mxu0 0.0
    %1212 = vmatpush1.msra.mxu0 0.0
    %1213 = vmatprep.mubr.f32.mxu0 0.0
    %1214 = vmatmul.mubr.f32.gmra.mrb[0].mxu0 %v1051
    %v1215 = vpop.f32.mrb[0].mxu0
    %v1216 = vadd.f32 0.0, %v1215
    %v1217 = vpop.f32.mrb[0].mxu0
    %1218 = vdwg.mxu0
    %v1219 = vadd.f32 %v1148, %v1216
    %v1220 = vxor.u32 %v1219, 2147483648
    %v1221 = vmul.f32 %v1220, 1.442695
    %v1222 = vpow.pop %v1221
    %v1223 = vadd.f32 %v1222, 1.0
    %v1224 = vrcp.pop %v1223
    %v1225 = vmul.f32 1.0, %v1224
    %v1226 = vtanh.pop %v1219
    %v1227 = vmul.f32 %v1225, %v966
    %1229 = vrot.lane.b32.xlu0 %v1226, 64
    %v1230 = vpop.permute.xlu0 %1229
    %v1232 = vmul.f32 %v1225, %v1230
    %1234 = vrot.lane.b32.xlu0 %v1232, 32
    %v1235 = vpop.permute.xlu0 %1234
    %v1237 = vadd.f32 %v1227, %v1235
    %v1238 = vtanh.pop %v1237
    %1240 = vrot.lane.b32.xlu0 %v1238, 64
    %v1241 = vpop.permute.xlu0 %1240
    %v1243 = vmul.f32 %v1225, %v1241
    %1245 = vrot.lane.b32.xlu0 %v1147, 32
    %v1246 = vpop.permute.xlu0 %1245
    %v1247 = vsel %vm153, %v1246, 0
    %1249 = vmatprep.subr.mxu0 0.0
    %1250 = vmatpush1.msra.mxu0 %v326
    %1251 = vmatprep.subr.mxu0 0.0
    %1252 = vmatpush1.msra.mxu0 %v327
    %1253 = vmatprep.subr.mxu0 0.0
    %1254 = vmatpush1.msra.mxu0 %v328
    %1255 = vmatprep.subr.mxu0 0.0
    %1256 = vmatpush1.msra.mxu0 %v329
    %1257 = vmatprep.subr.mxu0 0.0
    %1258 = vmatpush1.msra.mxu0 0.0
    %1259 = vmatprep.subr.mxu0 0.0
    %1260 = vmatpush1.msra.mxu0 0.0
    %1261 = vmatprep.subr.mxu0 0.0
    %1262 = vmatpush1.msra.mxu0 0.0
    %1263 = vmatprep.subr.mxu0 0.0
    %1264 = vmatpush1.msra.mxu0 0.0
    %1265 = vmatprep.subr.mxu0 0.0
    %1266 = vmatpush1.msra.mxu0 0.0
    %1267 = vmatprep.subr.mxu0 0.0
    %1268 = vmatpush1.msra.mxu0 0.0
    %1269 = vmatprep.subr.mxu0 0.0
    %1270 = vmatpush1.msra.mxu0 0.0
    %1271 = vmatprep.subr.mxu0 0.0
    %1272 = vmatpush1.msra.mxu0 0.0
    %1273 = vmatprep.subr.mxu0 0.0
    %1274 = vmatpush1.msra.mxu0 0.0
    %1275 = vmatprep.subr.mxu0 0.0
    %1276 = vmatpush1.msra.mxu0 0.0
    %1277 = vmatprep.subr.mxu0 0.0
    %1278 = vmatpush1.msra.mxu0 0.0
    %1279 = vmatprep.subr.mxu0 0.0
    %1280 = vmatpush1.msra.mxu0 0.0
    %1281 = vmatprep.subr.mxu0 0.0
    %1282 = vmatpush1.msra.mxu0 0.0
    %1283 = vmatprep.subr.mxu0 0.0
    %1284 = vmatpush1.msra.mxu0 0.0
    %1285 = vmatprep.subr.mxu0 0.0
    %1286 = vmatpush1.msra.mxu0 0.0
    %1287 = vmatprep.subr.mxu0 0.0
    %1288 = vmatpush1.msra.mxu0 0.0
    %1289 = vmatprep.subr.mxu0 0.0
    %1290 = vmatpush1.msra.mxu0 0.0
    %1291 = vmatprep.subr.mxu0 0.0
    %1292 = vmatpush1.msra.mxu0 0.0
    %1293 = vmatprep.subr.mxu0 0.0
    %1294 = vmatpush1.msra.mxu0 0.0
    %1295 = vmatprep.subr.mxu0 0.0
    %1296 = vmatpush1.msra.mxu0 0.0
    %1297 = vmatprep.subr.mxu0 0.0
    %1298 = vmatpush1.msra.mxu0 0.0
    %1299 = vmatprep.subr.mxu0 0.0
    %1300 = vmatpush1.msra.mxu0 0.0
    %1301 = vmatprep.subr.mxu0 0.0
    %1302 = vmatpush1.msra.mxu0 0.0
    %1303 = vmatprep.subr.mxu0 0.0
    %1304 = vmatpush1.msra.mxu0 0.0
    %1305 = vmatprep.subr.mxu0 0.0
    %1306 = vmatpush1.msra.mxu0 0.0
    %1307 = vmatprep.subr.mxu0 0.0
    %1308 = vmatpush1.msra.mxu0 0.0
    %1309 = vmatprep.subr.mxu0 0.0
    %1310 = vmatpush1.msra.mxu0 0.0
    %1311 = vmatprep.subr.mxu0 0.0
    %1312 = vmatpush1.msra.mxu0 0.0
    %1313 = vmatprep.mubr.f32.mxu0 0.0
    %1314 = vmatmul.mubr.f32.gmra.mrb[0].mxu0 %v1247
    %v1315 = vpop.f32.mrb[0].mxu0
    %v1316 = vadd.f32 0.0, %v1315
    %v1317 = vpop.f32.mrb[0].mxu0
    %1318 = vdwg.mxu0
    %1320 = vrot.lane.b32.xlu0 %v1243, 32
    %v1321 = vpop.permute.xlu0 %1320
    %v1322 = vsel %vm153, %v1321, 0
    %1324 = vmatprep.subr.mxu0 0.0
    %1325 = vmatpush1.msra.mxu0 %v322
    %1326 = vmatprep.subr.mxu0 0.0
    %1327 = vmatpush1.msra.mxu0 %v323
    %1328 = vmatprep.subr.mxu0 0.0
    %1329 = vmatpush1.msra.mxu0 %v324
    %1330 = vmatprep.subr.mxu0 0.0
    %1331 = vmatpush1.msra.mxu0 %v325
    %1332 = vmatprep.subr.mxu0 0.0
    %1333 = vmatpush1.msra.mxu0 0.0
    %1334 = vmatprep.subr.mxu0 0.0
    %1335 = vmatpush1.msra.mxu0 0.0
    %1336 = vmatprep.subr.mxu0 0.0
    %1337 = vmatpush1.msra.mxu0 0.0
    %1338 = vmatprep.subr.mxu0 0.0
    %1339 = vmatpush1.msra.mxu0 0.0
    %1340 = vmatprep.subr.mxu0 0.0
    %1341 = vmatpush1.msra.mxu0 0.0
    %1342 = vmatprep.subr.mxu0 0.0
    %1343 = vmatpush1.msra.mxu0 0.0
    %1344 = vmatprep.subr.mxu0 0.0
    %1345 = vmatpush1.msra.mxu0 0.0
    %1346 = vmatprep.subr.mxu0 0.0
    %1347 = vmatpush1.msra.mxu0 0.0
    %1348 = vmatprep.subr.mxu0 0.0
    %1349 = vmatpush1.msra.mxu0 0.0
    %1350 = vmatprep.subr.mxu0 0.0
    %1351 = vmatpush1.msra.mxu0 0.0
    %1352 = vmatprep.subr.mxu0 0.0
    %1353 = vmatpush1.msra.mxu0 0.0
    %1354 = vmatprep.subr.mxu0 0.0
    %1355 = vmatpush1.msra.mxu0 0.0
    %1356 = vmatprep.subr.mxu0 0.0
    %1357 = vmatpush1.msra.mxu0 0.0
    %1358 = vmatprep.subr.mxu0 0.0
    %1359 = vmatpush1.msra.mxu0 0.0
    %1360 = vmatprep.subr.mxu0 0.0
    %1361 = vmatpush1.msra.mxu0 0.0
    %1362 = vmatprep.subr.mxu0 0.0
    %1363 = vmatpush1.msra.mxu0 0.0
    %1364 = vmatprep.subr.mxu0 0.0
    %1365 = vmatpush1.msra.mxu0 0.0
    %1366 = vmatprep.subr.mxu0 0.0
    %1367 = vmatpush1.msra.mxu0 0.0
    %1368 = vmatprep.subr.mxu0 0.0
    %1369 = vmatpush1.msra.mxu0 0.0
    %1370 = vmatprep.subr.mxu0 0.0
    %1371 = vmatpush1.msra.mxu0 0.0
    %1372 = vmatprep.subr.mxu0 0.0
    %1373 = vmatpush1.msra.mxu0 0.0
    %1374 = vmatprep.subr.mxu0 0.0
    %1375 = vmatpush1.msra.mxu0 0.0
    %1376 = vmatprep.subr.mxu0 0.0
    %1377 = vmatpush1.msra.mxu0 0.0
    %1378 = vmatprep.subr.mxu0 0.0
    %1379 = vmatpush1.msra.mxu0 0.0
    %1380 = vmatprep.subr.mxu0 0.0
    %1381 = vmatpush1.msra.mxu0 0.0
    %1382 = vmatprep.subr.mxu0 0.0
    %1383 = vmatpush1.msra.mxu0 0.0
    %1384 = vmatprep.subr.mxu0 0.0
    %1385 = vmatpush1.msra.mxu0 0.0
    %1386 = vmatprep.subr.mxu0 0.0
    %1387 = vmatpush1.msra.mxu0 0.0
    %1388 = vmatprep.mubr.f32.mxu0 0.0
    %1389 = vmatmul.mubr.f32.gmra.mrb[0].mxu0 %v1322
    %v1390 = vpop.f32.mrb[0].mxu0
    %v1391 = vadd.f32 %v1316, %v1390
    %v1392 = vpop.f32.mrb[0].mxu0
    %1393 = vdwg.mxu0
    %v1394 = vadd.f32 %v1391, %v579
    %v1395 = vxor.u32 %v1394, 2147483648
    %v1396 = vmul.f32 %v1395, 1.442695
    %v1397 = vpow.pop %v1396
    %v1398 = vadd.f32 %v1397, 1.0
    %v1399 = vrcp.pop %v1398
    %v1400 = vmul.f32 1.0, %v1399
    %v1401 = vtanh.pop %v1394
    %v1402 = vmul.f32 %v1400, %v1141
    %1404 = vrot.lane.b32.xlu0 %v1401, 64
    %v1405 = vpop.permute.xlu0 %1404
    %v1407 = vmul.f32 %v1400, %v1405
    %1409 = vrot.lane.b32.xlu0 %v1407, 32
    %v1410 = vpop.permute.xlu0 %1409
    %v1412 = vadd.f32 %v1402, %v1410
    %v1413 = vtanh.pop %v1412
    %1415 = vrot.lane.b32.xlu0 %v1413, 64
    %v1416 = vpop.permute.xlu0 %1415
    %v1418 = vmul.f32 %v1400, %v1416
    %v1419 = vld [vmem:[#allocation2 + $0x20] sm:$0xff]
    %1420 = vmatprep.subr.mxu0 0.0
    %1421 = vmatpush1.msra.mxu0 %v318
    %1422 = vmatprep.subr.mxu0 0.0
    %1423 = vmatpush1.msra.mxu0 %v319
    %1424 = vmatprep.subr.mxu0 0.0
    %1425 = vmatpush1.msra.mxu0 %v320
    %1426 = vmatprep.subr.mxu0 0.0
    %1427 = vmatpush1.msra.mxu0 %v321
    %1428 = vmatprep.subr.mxu0 0.0
    %1429 = vmatpush1.msra.mxu0 0.0
    %1430 = vmatprep.subr.mxu0 0.0
    %1431 = vmatpush1.msra.mxu0 0.0
    %1432 = vmatprep.subr.mxu0 0.0
    %1433 = vmatpush1.msra.mxu0 0.0
    %1434 = vmatprep.subr.mxu0 0.0
    %1435 = vmatpush1.msra.mxu0 0.0
    %1436 = vmatprep.subr.mxu0 0.0
    %1437 = vmatpush1.msra.mxu0 0.0
    %1438 = vmatprep.subr.mxu0 0.0
    %1439 = vmatpush1.msra.mxu0 0.0
    %1440 = vmatprep.subr.mxu0 0.0
    %1441 = vmatpush1.msra.mxu0 0.0
    %1442 = vmatprep.subr.mxu0 0.0
    %1443 = vmatpush1.msra.mxu0 0.0
    %1444 = vmatprep.subr.mxu0 0.0
    %1445 = vmatpush1.msra.mxu0 0.0
    %1446 = vmatprep.subr.mxu0 0.0
    %1447 = vmatpush1.msra.mxu0 0.0
    %1448 = vmatprep.subr.mxu0 0.0
    %1449 = vmatpush1.msra.mxu0 0.0
    %1450 = vmatprep.subr.mxu0 0.0
    %1451 = vmatpush1.msra.mxu0 0.0
    %1452 = vmatprep.subr.mxu0 0.0
    %1453 = vmatpush1.msra.mxu0 0.0
    %1454 = vmatprep.subr.mxu0 0.0
    %1455 = vmatpush1.msra.mxu0 0.0
    %1456 = vmatprep.subr.mxu0 0.0
    %1457 = vmatpush1.msra.mxu0 0.0
    %1458 = vmatprep.subr.mxu0 0.0
    %1459 = vmatpush1.msra.mxu0 0.0
    %1460 = vmatprep.subr.mxu0 0.0
    %1461 = vmatpush1.msra.mxu0 0.0
    %1462 = vmatprep.subr.mxu0 0.0
    %1463 = vmatpush1.msra.mxu0 0.0
    %1464 = vmatprep.subr.mxu0 0.0
    %1465 = vmatpush1.msra.mxu0 0.0
    %1466 = vmatprep.subr.mxu0 0.0
    %1467 = vmatpush1.msra.mxu0 0.0
    %1468 = vmatprep.subr.mxu0 0.0
    %1469 = vmatpush1.msra.mxu0 0.0
    %1470 = vmatprep.subr.mxu0 0.0
    %1471 = vmatpush1.msra.mxu0 0.0
    %1472 = vmatprep.subr.mxu0 0.0
    %1473 = vmatpush1.msra.mxu0 0.0
    %1474 = vmatprep.subr.mxu0 0.0
    %1475 = vmatpush1.msra.mxu0 0.0
    %1476 = vmatprep.subr.mxu0 0.0
    %1477 = vmatpush1.msra.mxu0 0.0
    %1478 = vmatprep.subr.mxu0 0.0
    %1479 = vmatpush1.msra.mxu0 0.0
    %1480 = vmatprep.subr.mxu0 0.0
    %1481 = vmatpush1.msra.mxu0 0.0
    %1482 = vmatprep.subr.mxu0 0.0
    %1483 = vmatpush1.msra.mxu0 0.0
    %1484 = vmatprep.mubr.f32.mxu0 0.0
    %1485 = vmatmul.mubr.f32.gmra.mrb[0].mxu0 %v1322
    %v1486 = vpop.f32.mrb[0].mxu0
    %v1487 = vadd.f32 0.0, %v1486
    %v1488 = vpop.f32.mrb[0].mxu0
    %1489 = vdwg.mxu0
    %v1490 = vadd.f32 %v1419, %v1487
    %v1491 = vxor.u32 %v1490, 2147483648
    %v1492 = vmul.f32 %v1491, 1.442695
    %v1493 = vpow.pop %v1492
    %v1494 = vadd.f32 %v1493, 1.0
    %v1495 = vrcp.pop %v1494
    %v1496 = vmul.f32 1.0, %v1495
    %v1497 = vtanh.pop %v1490
    %v1498 = vmul.f32 %v1496, %v1237
    %1500 = vrot.lane.b32.xlu0 %v1497, 64
    %v1501 = vpop.permute.xlu0 %1500
    %v1503 = vmul.f32 %v1496, %v1501
    %1505 = vrot.lane.b32.xlu0 %v1503, 32
    %v1506 = vpop.permute.xlu0 %1505
    %v1508 = vadd.f32 %v1498, %v1506
    %v1509 = vtanh.pop %v1508
    %1511 = vrot.lane.b32.xlu0 %v1509, 64
    %v1512 = vpop.permute.xlu0 %1511
    %v1514 = vmul.f32 %v1496, %v1512
    %1516 = vrot.lane.b32.xlu0 %v1418, 32
    %v1517 = vpop.permute.xlu0 %1516
    %v1518 = vsel %vm153, %v1517, 0
    %1520 = vmatprep.subr.mxu0 0.0
    %1521 = vmatpush1.msra.mxu0 %v326
    %1522 = vmatprep.subr.mxu0 0.0
    %1523 = vmatpush1.msra.mxu0 %v327
    %1524 = vmatprep.subr.mxu0 0.0
    %1525 = vmatpush1.msra.mxu0 %v328
    %1526 = vmatprep.subr.mxu0 0.0
    %1527 = vmatpush1.msra.mxu0 %v329
    %1528 = vmatprep.subr.mxu0 0.0
    %1529 = vmatpush1.msra.mxu0 0.0
    %1530 = vmatprep.subr.mxu0 0.0
    %1531 = vmatpush1.msra.mxu0 0.0
    %1532 = vmatprep.subr.mxu0 0.0
    %1533 = vmatpush1.msra.mxu0 0.0
    %1534 = vmatprep.subr.mxu0 0.0
    %1535 = vmatpush1.msra.mxu0 0.0
    %1536 = vmatprep.subr.mxu0 0.0
    %1537 = vmatpush1.msra.mxu0 0.0
    %1538 = vmatprep.subr.mxu0 0.0
    %1539 = vmatpush1.msra.mxu0 0.0
    %1540 = vmatprep.subr.mxu0 0.0
    %1541 = vmatpush1.msra.mxu0 0.0
    %1542 = vmatprep.subr.mxu0 0.0
    %1543 = vmatpush1.msra.mxu0 0.0
    %1544 = vmatprep.subr.mxu0 0.0
    %1545 = vmatpush1.msra.mxu0 0.0
    %1546 = vmatprep.subr.mxu0 0.0
    %1547 = vmatpush1.msra.mxu0 0.0
    %1548 = vmatprep.subr.mxu0 0.0
    %1549 = vmatpush1.msra.mxu0 0.0
    %1550 = vmatprep.subr.mxu0 0.0
    %1551 = vmatpush1.msra.mxu0 0.0
    %1552 = vmatprep.subr.mxu0 0.0
    %1553 = vmatpush1.msra.mxu0 0.0
    %1554 = vmatprep.subr.mxu0 0.0
    %1555 = vmatpush1.msra.mxu0 0.0
    %1556 = vmatprep.subr.mxu0 0.0
    %1557 = vmatpush1.msra.mxu0 0.0
    %1558 = vmatprep.subr.mxu0 0.0
    %1559 = vmatpush1.msra.mxu0 0.0
    %1560 = vmatprep.subr.mxu0 0.0
    %1561 = vmatpush1.msra.mxu0 0.0
    %1562 = vmatprep.subr.mxu0 0.0
    %1563 = vmatpush1.msra.mxu0 0.0
    %1564 = vmatprep.subr.mxu0 0.0
    %1565 = vmatpush1.msra.mxu0 0.0
    %1566 = vmatprep.subr.mxu0 0.0
    %1567 = vmatpush1.msra.mxu0 0.0
    %1568 = vmatprep.subr.mxu0 0.0
    %1569 = vmatpush1.msra.mxu0 0.0
    %1570 = vmatprep.subr.mxu0 0.0
    %1571 = vmatpush1.msra.mxu0 0.0
    %1572 = vmatprep.subr.mxu0 0.0
    %1573 = vmatpush1.msra.mxu0 0.0
    %1574 = vmatprep.subr.mxu0 0.0
    %1575 = vmatpush1.msra.mxu0 0.0
    %1576 = vmatprep.subr.mxu0 0.0
    %1577 = vmatpush1.msra.mxu0 0.0
    %1578 = vmatprep.subr.mxu0 0.0
    %1579 = vmatpush1.msra.mxu0 0.0
    %1580 = vmatprep.subr.mxu0 0.0
    %1581 = vmatpush1.msra.mxu0 0.0
    %1582 = vmatprep.subr.mxu0 0.0
    %1583 = vmatpush1.msra.mxu0 0.0
    %1584 = vmatprep.mubr.f32.mxu0 0.0
    %1585 = vmatmul.mubr.f32.gmra.mrb[0].mxu0 %v1518
    %v1586 = vpop.f32.mrb[0].mxu0
    %v1587 = vadd.f32 0.0, %v1586
    %v1588 = vpop.f32.mrb[0].mxu0
    %1589 = vdwg.mxu0
    %1591 = vrot.lane.b32.xlu0 %v1514, 32
    %v1592 = vpop.permute.xlu0 %1591
    %v1593 = vsel %vm153, %v1592, 0
    %1595 = vmatprep.subr.mxu0 0.0
    %1596 = vmatpush1.msra.mxu0 %v322
    %1597 = vmatprep.subr.mxu0 0.0
    %1598 = vmatpush1.msra.mxu0 %v323
    %1599 = vmatprep.subr.mxu0 0.0
    %1600 = vmatpush1.msra.mxu0 %v324
    %1601 = vmatprep.subr.mxu0 0.0
    %1602 = vmatpush1.msra.mxu0 %v325
    %1603 = vmatprep.subr.mxu0 0.0
    %1604 = vmatpush1.msra.mxu0 0.0
    %1605 = vmatprep.subr.mxu0 0.0
    %1606 = vmatpush1.msra.mxu0 0.0
    %1607 = vmatprep.subr.mxu0 0.0
    %1608 = vmatpush1.msra.mxu0 0.0
    %1609 = vmatprep.subr.mxu0 0.0
    %1610 = vmatpush1.msra.mxu0 0.0
    %1611 = vmatprep.subr.mxu0 0.0
    %1612 = vmatpush1.msra.mxu0 0.0
    %1613 = vmatprep.subr.mxu0 0.0
    %1614 = vmatpush1.msra.mxu0 0.0
    %1615 = vmatprep.subr.mxu0 0.0
    %1616 = vmatpush1.msra.mxu0 0.0
    %1617 = vmatprep.subr.mxu0 0.0
    %1618 = vmatpush1.msra.mxu0 0.0
    %1619 = vmatprep.subr.mxu0 0.0
    %1620 = vmatpush1.msra.mxu0 0.0
    %1621 = vmatprep.subr.mxu0 0.0
    %1622 = vmatpush1.msra.mxu0 0.0
    %1623 = vmatprep.subr.mxu0 0.0
    %1624 = vmatpush1.msra.mxu0 0.0
    %1625 = vmatprep.subr.mxu0 0.0
    %1626 = vmatpush1.msra.mxu0 0.0
    %1627 = vmatprep.subr.mxu0 0.0
    %1628 = vmatpush1.msra.mxu0 0.0
    %1629 = vmatprep.subr.mxu0 0.0
    %1630 = vmatpush1.msra.mxu0 0.0
    %1631 = vmatprep.subr.mxu0 0.0
    %1632 = vmatpush1.msra.mxu0 0.0
    %1633 = vmatprep.subr.mxu0 0.0
    %1634 = vmatpush1.msra.mxu0 0.0
    %1635 = vmatprep.subr.mxu0 0.0
    %1636 = vmatpush1.msra.mxu0 0.0
    %1637 = vmatprep.subr.mxu0 0.0
    %1638 = vmatpush1.msra.mxu0 0.0
    %1639 = vmatprep.subr.mxu0 0.0
    %1640 = vmatpush1.msra.mxu0 0.0
    %1641 = vmatprep.subr.mxu0 0.0
    %1642 = vmatpush1.msra.mxu0 0.0
    %1643 = vmatprep.subr.mxu0 0.0
    %1644 = vmatpush1.msra.mxu0 0.0
    %1645 = vmatprep.subr.mxu0 0.0
    %1646 = vmatpush1.msra.mxu0 0.0
    %1647 = vmatprep.subr.mxu0 0.0
    %1648 = vmatpush1.msra.mxu0 0.0
    %1649 = vmatprep.subr.mxu0 0.0
    %1650 = vmatpush1.msra.mxu0 0.0
    %1651 = vmatprep.subr.mxu0 0.0
    %1652 = vmatpush1.msra.mxu0 0.0
    %1653 = vmatprep.subr.mxu0 0.0
    %1654 = vmatpush1.msra.mxu0 0.0
    %1655 = vmatprep.subr.mxu0 0.0
    %1656 = vmatpush1.msra.mxu0 0.0
    %1657 = vmatprep.subr.mxu0 0.0
    %1658 = vmatpush1.msra.mxu0 0.0
    %1659 = vmatprep.mubr.f32.mxu0 0.0
    %1660 = vmatmul.mubr.f32.gmra.mrb[0].mxu0 %v1593
    %v1661 = vpop.f32.mrb[0].mxu0
    %v1662 = vadd.f32 %v1587, %v1661
    %v1663 = vpop.f32.mrb[0].mxu0
    %1664 = vdwg.mxu0
    %v1665 = vadd.f32 %v1662, %v579
    %v1666 = vxor.u32 %v1665, 2147483648
    %v1667 = vmul.f32 %v1666, 1.442695
    %v1668 = vpow.pop %v1667
    %v1669 = vadd.f32 %v1668, 1.0
    %v1670 = vrcp.pop %v1669
    %v1671 = vmul.f32 1.0, %v1670
    %v1672 = vtanh.pop %v1665
    %v1673 = vmul.f32 %v1671, %v1412
    %1675 = vrot.lane.b32.xlu0 %v1672, 64
    %v1676 = vpop.permute.xlu0 %1675
    %v1678 = vmul.f32 %v1671, %v1676
    %1680 = vrot.lane.b32.xlu0 %v1678, 32
    %v1681 = vpop.permute.xlu0 %1680
    %v1683 = vadd.f32 %v1673, %v1681
    %v1684 = vtanh.pop %v1683
    %1686 = vrot.lane.b32.xlu0 %v1684, 64
    %v1687 = vpop.permute.xlu0 %1686
    %v1689 = vmul.f32 %v1671, %v1687
    %v1690 = vld [vmem:[#allocation2 + $0x28] sm:$0xff]
    %1691 = vmatprep.subr.mxu0 0.0
    %1692 = vmatpush1.msra.mxu0 %v318
    %1693 = vmatprep.subr.mxu0 0.0
    %1694 = vmatpush1.msra.mxu0 %v319
    %1695 = vmatprep.subr.mxu0 0.0
    %1696 = vmatpush1.msra.mxu0 %v320
    %1697 = vmatprep.subr.mxu0 0.0
    %1698 = vmatpush1.msra.mxu0 %v321
    %1699 = vmatprep.subr.mxu0 0.0
    %1700 = vmatpush1.msra.mxu0 0.0
    %1701 = vmatprep.subr.mxu0 0.0
    %1702 = vmatpush1.msra.mxu0 0.0
    %1703 = vmatprep.subr.mxu0 0.0
    %1704 = vmatpush1.msra.mxu0 0.0
    %1705 = vmatprep.subr.mxu0 0.0
    %1706 = vmatpush1.msra.mxu0 0.0
    %1707 = vmatprep.subr.mxu0 0.0
    %1708 = vmatpush1.msra.mxu0 0.0
    %1709 = vmatprep.subr.mxu0 0.0
    %1710 = vmatpush1.msra.mxu0 0.0
    %1711 = vmatprep.subr.mxu0 0.0
    %1712 = vmatpush1.msra.mxu0 0.0
    %1713 = vmatprep.subr.mxu0 0.0
    %1714 = vmatpush1.msra.mxu0 0.0
    %1715 = vmatprep.subr.mxu0 0.0
    %1716 = vmatpush1.msra.mxu0 0.0
    %1717 = vmatprep.subr.mxu0 0.0
    %1718 = vmatpush1.msra.mxu0 0.0
    %1719 = vmatprep.subr.mxu0 0.0
    %1720 = vmatpush1.msra.mxu0 0.0
    %1721 = vmatprep.subr.mxu0 0.0
    %1722 = vmatpush1.msra.mxu0 0.0
    %1723 = vmatprep.subr.mxu0 0.0
    %1724 = vmatpush1.msra.mxu0 0.0
    %1725 = vmatprep.subr.mxu0 0.0
    %1726 = vmatpush1.msra.mxu0 0.0
    %1727 = vmatprep.subr.mxu0 0.0
    %1728 = vmatpush1.msra.mxu0 0.0
    %1729 = vmatprep.subr.mxu0 0.0
    %1730 = vmatpush1.msra.mxu0 0.0
    %1731 = vmatprep.subr.mxu0 0.0
    %1732 = vmatpush1.msra.mxu0 0.0
    %1733 = vmatprep.subr.mxu0 0.0
    %1734 = vmatpush1.msra.mxu0 0.0
    %1735 = vmatprep.subr.mxu0 0.0
    %1736 = vmatpush1.msra.mxu0 0.0
    %1737 = vmatprep.subr.mxu0 0.0
    %1738 = vmatpush1.msra.mxu0 0.0
    %1739 = vmatprep.subr.mxu0 0.0
    %1740 = vmatpush1.msra.mxu0 0.0
    %1741 = vmatprep.subr.mxu0 0.0
    %1742 = vmatpush1.msra.mxu0 0.0
    %1743 = vmatprep.subr.mxu0 0.0
    %1744 = vmatpush1.msra.mxu0 0.0
    %1745 = vmatprep.subr.mxu0 0.0
    %1746 = vmatpush1.msra.mxu0 0.0
    %1747 = vmatprep.subr.mxu0 0.0
    %1748 = vmatpush1.msra.mxu0 0.0
    %1749 = vmatprep.subr.mxu0 0.0
    %1750 = vmatpush1.msra.mxu0 0.0
    %1751 = vmatprep.subr.mxu0 0.0
    %1752 = vmatpush1.msra.mxu0 0.0
    %1753 = vmatprep.subr.mxu0 0.0
    %1754 = vmatpush1.msra.mxu0 0.0
    %1755 = vmatprep.mubr.f32.mxu0 0.0
    %1756 = vmatmul.mubr.f32.gmra.mrb[0].mxu0 %v1593
    %v1757 = vpop.f32.mrb[0].mxu0
    %v1758 = vadd.f32 0.0, %v1757
    %v1759 = vpop.f32.mrb[0].mxu0
    %1760 = vdwg.mxu0
    %v1761 = vadd.f32 %v1690, %v1758
    %v1762 = vxor.u32 %v1761, 2147483648
    %v1763 = vmul.f32 %v1762, 1.442695
    %v1764 = vpow.pop %v1763
    %v1765 = vadd.f32 %v1764, 1.0
    %v1766 = vrcp.pop %v1765
    %v1767 = vmul.f32 1.0, %v1766
    %v1768 = vtanh.pop %v1761
    %v1769 = vmul.f32 %v1767, %v1508
    %1771 = vrot.lane.b32.xlu0 %v1768, 64
    %v1772 = vpop.permute.xlu0 %1771
    %v1774 = vmul.f32 %v1767, %v1772
    %1776 = vrot.lane.b32.xlu0 %v1774, 32
    %v1777 = vpop.permute.xlu0 %1776
    %v1779 = vadd.f32 %v1769, %v1777
    %v1780 = vtanh.pop %v1779
    %1782 = vrot.lane.b32.xlu0 %v1780, 64
    %v1783 = vpop.permute.xlu0 %1782
    %v1785 = vmul.f32 %v1767, %v1783
    %1787 = vrot.lane.b32.xlu0 %v1689, 32
    %v1788 = vpop.permute.xlu0 %1787
    %v1789 = vsel %vm153, %v1788, 0
    %1791 = vmatprep.subr.mxu0 0.0
    %1792 = vmatpush1.msra.mxu0 %v326
    %1793 = vmatprep.subr.mxu0 0.0
    %1794 = vmatpush1.msra.mxu0 %v327
    %1795 = vmatprep.subr.mxu0 0.0
    %1796 = vmatpush1.msra.mxu0 %v328
    %1797 = vmatprep.subr.mxu0 0.0
    %1798 = vmatpush1.msra.mxu0 %v329
    %1799 = vmatprep.subr.mxu0 0.0
    %1800 = vmatpush1.msra.mxu0 0.0
    %1801 = vmatprep.subr.mxu0 0.0
    %1802 = vmatpush1.msra.mxu0 0.0
    %1803 = vmatprep.subr.mxu0 0.0
    %1804 = vmatpush1.msra.mxu0 0.0
    %1805 = vmatprep.subr.mxu0 0.0
    %1806 = vmatpush1.msra.mxu0 0.0
    %1807 = vmatprep.subr.mxu0 0.0
    %1808 = vmatpush1.msra.mxu0 0.0
    %1809 = vmatprep.subr.mxu0 0.0
    %1810 = vmatpush1.msra.mxu0 0.0
    %1811 = vmatprep.subr.mxu0 0.0
    %1812 = vmatpush1.msra.mxu0 0.0
    %1813 = vmatprep.subr.mxu0 0.0
    %1814 = vmatpush1.msra.mxu0 0.0
    %1815 = vmatprep.subr.mxu0 0.0
    %1816 = vmatpush1.msra.mxu0 0.0
    %1817 = vmatprep.subr.mxu0 0.0
    %1818 = vmatpush1.msra.mxu0 0.0
    %1819 = vmatprep.subr.mxu0 0.0
    %1820 = vmatpush1.msra.mxu0 0.0
    %1821 = vmatprep.subr.mxu0 0.0
    %1822 = vmatpush1.msra.mxu0 0.0
    %1823 = vmatprep.subr.mxu0 0.0
    %1824 = vmatpush1.msra.mxu0 0.0
    %1825 = vmatprep.subr.mxu0 0.0
    %1826 = vmatpush1.msra.mxu0 0.0
    %1827 = vmatprep.subr.mxu0 0.0
    %1828 = vmatpush1.msra.mxu0 0.0
    %1829 = vmatprep.subr.mxu0 0.0
    %1830 = vmatpush1.msra.mxu0 0.0
    %1831 = vmatprep.subr.mxu0 0.0
    %1832 = vmatpush1.msra.mxu0 0.0
    %1833 = vmatprep.subr.mxu0 0.0
    %1834 = vmatpush1.msra.mxu0 0.0
    %1835 = vmatprep.subr.mxu0 0.0
    %1836 = vmatpush1.msra.mxu0 0.0
    %1837 = vmatprep.subr.mxu0 0.0
    %1838 = vmatpush1.msra.mxu0 0.0
    %1839 = vmatprep.subr.mxu0 0.0
    %1840 = vmatpush1.msra.mxu0 0.0
    %1841 = vmatprep.subr.mxu0 0.0
    %1842 = vmatpush1.msra.mxu0 0.0
    %1843 = vmatprep.subr.mxu0 0.0
    %1844 = vmatpush1.msra.mxu0 0.0
    %1845 = vmatprep.subr.mxu0 0.0
    %1846 = vmatpush1.msra.mxu0 0.0
    %1847 = vmatprep.subr.mxu0 0.0
    %1848 = vmatpush1.msra.mxu0 0.0
    %1849 = vmatprep.subr.mxu0 0.0
    %1850 = vmatpush1.msra.mxu0 0.0
    %1851 = vmatprep.subr.mxu0 0.0
    %1852 = vmatpush1.msra.mxu0 0.0
    %1853 = vmatprep.subr.mxu0 0.0
    %1854 = vmatpush1.msra.mxu0 0.0
    %1855 = vmatprep.mubr.f32.mxu0 0.0
    %1856 = vmatmul.mubr.f32.gmra.mrb[0].mxu0 %v1789
    %v1857 = vpop.f32.mrb[0].mxu0
    %v1858 = vadd.f32 0.0, %v1857
    %v1859 = vpop.f32.mrb[0].mxu0
    %1860 = vdwg.mxu0
    %1862 = vrot.lane.b32.xlu0 %v1785, 32
    %v1863 = vpop.permute.xlu0 %1862
    %v1864 = vsel %vm153, %v1863, 0
    %1866 = vmatprep.subr.mxu0 0.0
    %1867 = vmatpush1.msra.mxu0 %v322
    %1868 = vmatprep.subr.mxu0 0.0
    %1869 = vmatpush1.msra.mxu0 %v323
    %1870 = vmatprep.subr.mxu0 0.0
    %1871 = vmatpush1.msra.mxu0 %v324
    %1872 = vmatprep.subr.mxu0 0.0
    %1873 = vmatpush1.msra.mxu0 %v325
    %1874 = vmatprep.subr.mxu0 0.0
    %1875 = vmatpush1.msra.mxu0 0.0
    %1876 = vmatprep.subr.mxu0 0.0
    %1877 = vmatpush1.msra.mxu0 0.0
    %1878 = vmatprep.subr.mxu0 0.0
    %1879 = vmatpush1.msra.mxu0 0.0
    %1880 = vmatprep.subr.mxu0 0.0
    %1881 = vmatpush1.msra.mxu0 0.0
    %1882 = vmatprep.subr.mxu0 0.0
    %1883 = vmatpush1.msra.mxu0 0.0
    %1884 = vmatprep.subr.mxu0 0.0
    %1885 = vmatpush1.msra.mxu0 0.0
    %1886 = vmatprep.subr.mxu0 0.0
    %1887 = vmatpush1.msra.mxu0 0.0
    %1888 = vmatprep.subr.mxu0 0.0
    %1889 = vmatpush1.msra.mxu0 0.0
    %1890 = vmatprep.subr.mxu0 0.0
    %1891 = vmatpush1.msra.mxu0 0.0
    %1892 = vmatprep.subr.mxu0 0.0
    %1893 = vmatpush1.msra.mxu0 0.0
    %1894 = vmatprep.subr.mxu0 0.0
    %1895 = vmatpush1.msra.mxu0 0.0
    %1896 = vmatprep.subr.mxu0 0.0
    %1897 = vmatpush1.msra.mxu0 0.0
    %1898 = vmatprep.subr.mxu0 0.0
    %1899 = vmatpush1.msra.mxu0 0.0
    %1900 = vmatprep.subr.mxu0 0.0
    %1901 = vmatpush1.msra.mxu0 0.0
    %1902 = vmatprep.subr.mxu0 0.0
    %1903 = vmatpush1.msra.mxu0 0.0
    %1904 = vmatprep.subr.mxu0 0.0
    %1905 = vmatpush1.msra.mxu0 0.0
    %1906 = vmatprep.subr.mxu0 0.0
    %1907 = vmatpush1.msra.mxu0 0.0
    %1908 = vmatprep.subr.mxu0 0.0
    %1909 = vmatpush1.msra.mxu0 0.0
    %1910 = vmatprep.subr.mxu0 0.0
    %1911 = vmatpush1.msra.mxu0 0.0
    %1912 = vmatprep.subr.mxu0 0.0
    %1913 = vmatpush1.msra.mxu0 0.0
    %1914 = vmatprep.subr.mxu0 0.0
    %1915 = vmatpush1.msra.mxu0 0.0
    %1916 = vmatprep.subr.mxu0 0.0
    %1917 = vmatpush1.msra.mxu0 0.0
    %1918 = vmatprep.subr.mxu0 0.0
    %1919 = vmatpush1.msra.mxu0 0.0
    %1920 = vmatprep.subr.mxu0 0.0
    %1921 = vmatpush1.msra.mxu0 0.0
    %1922 = vmatprep.subr.mxu0 0.0
    %1923 = vmatpush1.msra.mxu0 0.0
    %1924 = vmatprep.subr.mxu0 0.0
    %1925 = vmatpush1.msra.mxu0 0.0
    %1926 = vmatprep.subr.mxu0 0.0
    %1927 = vmatpush1.msra.mxu0 0.0
    %1928 = vmatprep.subr.mxu0 0.0
    %1929 = vmatpush1.msra.mxu0 0.0
    %1930 = vmatprep.mubr.f32.mxu0 0.0
    %1931 = vmatmul.mubr.f32.gmra.mrb[0].mxu0 %v1864
    %v1932 = vpop.f32.mrb[0].mxu0
    %v1933 = vadd.f32 %v1858, %v1932
    %v1934 = vpop.f32.mrb[0].mxu0
    %1935 = vdwg.mxu0
    %v1936 = vadd.f32 %v1933, %v579
    %v1937 = vxor.u32 %v1936, 2147483648
    %v1938 = vmul.f32 %v1937, 1.442695
    %v1939 = vpow.pop %v1938
    %v1940 = vadd.f32 %v1939, 1.0
    %v1941 = vrcp.pop %v1940
    %v1942 = vmul.f32 1.0, %v1941
    %v1943 = vtanh.pop %v1936
    %v1944 = vmul.f32 %v1942, %v1683
    %1946 = vrot.lane.b32.xlu0 %v1943, 64
    %v1947 = vpop.permute.xlu0 %1946
    %v1949 = vmul.f32 %v1942, %v1947
    %1951 = vrot.lane.b32.xlu0 %v1949, 32
    %v1952 = vpop.permute.xlu0 %1951
    %v1954 = vadd.f32 %v1944, %v1952
    %v1955 = vtanh.pop %v1954
    %1957 = vrot.lane.b32.xlu0 %v1955, 64
    %v1958 = vpop.permute.xlu0 %1957
    %v1960 = vmul.f32 %v1942, %v1958
    %v1961 = vld [vmem:[#allocation2 + $0x30] sm:$0xff]
    %1962 = vmatprep.subr.mxu0 0.0
    %1963 = vmatpush1.msra.mxu0 %v318
    %1964 = vmatprep.subr.mxu0 0.0
    %1965 = vmatpush1.msra.mxu0 %v319
    %1966 = vmatprep.subr.mxu0 0.0
    %1967 = vmatpush1.msra.mxu0 %v320
    %1968 = vmatprep.subr.mxu0 0.0
    %1969 = vmatpush1.msra.mxu0 %v321
    %1970 = vmatprep.subr.mxu0 0.0
    %1971 = vmatpush1.msra.mxu0 0.0
    %1972 = vmatprep.subr.mxu0 0.0
    %1973 = vmatpush1.msra.mxu0 0.0
    %1974 = vmatprep.subr.mxu0 0.0
    %1975 = vmatpush1.msra.mxu0 0.0
    %1976 = vmatprep.subr.mxu0 0.0
    %1977 = vmatpush1.msra.mxu0 0.0
    %1978 = vmatprep.subr.mxu0 0.0
    %1979 = vmatpush1.msra.mxu0 0.0
    %1980 = vmatprep.subr.mxu0 0.0
    %1981 = vmatpush1.msra.mxu0 0.0
    %1982 = vmatprep.subr.mxu0 0.0
    %1983 = vmatpush1.msra.mxu0 0.0
    %1984 = vmatprep.subr.mxu0 0.0
    %1985 = vmatpush1.msra.mxu0 0.0
    %1986 = vmatprep.subr.mxu0 0.0
    %1987 = vmatpush1.msra.mxu0 0.0
    %1988 = vmatprep.subr.mxu0 0.0
    %1989 = vmatpush1.msra.mxu0 0.0
    %1990 = vmatprep.subr.mxu0 0.0
    %1991 = vmatpush1.msra.mxu0 0.0
    %1992 = vmatprep.subr.mxu0 0.0
    %1993 = vmatpush1.msra.mxu0 0.0
    %1994 = vmatprep.subr.mxu0 0.0
    %1995 = vmatpush1.msra.mxu0 0.0
    %1996 = vmatprep.subr.mxu0 0.0
    %1997 = vmatpush1.msra.mxu0 0.0
    %1998 = vmatprep.subr.mxu0 0.0
    %1999 = vmatpush1.msra.mxu0 0.0
    %2000 = vmatprep.subr.mxu0 0.0
    %2001 = vmatpush1.msra.mxu0 0.0
    %2002 = vmatprep.subr.mxu0 0.0
    %2003 = vmatpush1.msra.mxu0 0.0
    %2004 = vmatprep.subr.mxu0 0.0
    %2005 = vmatpush1.msra.mxu0 0.0
    %2006 = vmatprep.subr.mxu0 0.0
    %2007 = vmatpush1.msra.mxu0 0.0
    %2008 = vmatprep.subr.mxu0 0.0
    %2009 = vmatpush1.msra.mxu0 0.0
    %2010 = vmatprep.subr.mxu0 0.0
    %2011 = vmatpush1.msra.mxu0 0.0
    %2012 = vmatprep.subr.mxu0 0.0
    %2013 = vmatpush1.msra.mxu0 0.0
    %2014 = vmatprep.subr.mxu0 0.0
    %2015 = vmatpush1.msra.mxu0 0.0
    %2016 = vmatprep.subr.mxu0 0.0
    %2017 = vmatpush1.msra.mxu0 0.0
    %2018 = vmatprep.subr.mxu0 0.0
    %2019 = vmatpush1.msra.mxu0 0.0
    %2020 = vmatprep.subr.mxu0 0.0
    %2021 = vmatpush1.msra.mxu0 0.0
    %2022 = vmatprep.subr.mxu0 0.0
    %2023 = vmatpush1.msra.mxu0 0.0
    %2024 = vmatprep.subr.mxu0 0.0
    %2025 = vmatpush1.msra.mxu0 0.0
    %2026 = vmatprep.mubr.f32.mxu0 0.0
    %2027 = vmatmul.mubr.f32.gmra.mrb[0].mxu0 %v1864
    %v2028 = vpop.f32.mrb[0].mxu0
    %v2029 = vadd.f32 0.0, %v2028
    %v2030 = vpop.f32.mrb[0].mxu0
    %2031 = vdwg.mxu0
    %v2032 = vadd.f32 %v1961, %v2029
    %v2033 = vxor.u32 %v2032, 2147483648
    %v2034 = vmul.f32 %v2033, 1.442695
    %v2035 = vpow.pop %v2034
    %v2036 = vadd.f32 %v2035, 1.0
    %v2037 = vrcp.pop %v2036
    %v2038 = vmul.f32 1.0, %v2037
    %v2039 = vtanh.pop %v2032
    %v2040 = vmul.f32 %v2038, %v1779
    %2042 = vrot.lane.b32.xlu0 %v2039, 64
    %v2043 = vpop.permute.xlu0 %2042
    %v2045 = vmul.f32 %v2038, %v2043
    %2047 = vrot.lane.b32.xlu0 %v2045, 32
    %v2048 = vpop.permute.xlu0 %2047
    %v2050 = vadd.f32 %v2040, %v2048
    %v2051 = vtanh.pop %v2050
    %2053 = vrot.lane.b32.xlu0 %v2051, 64
    %v2054 = vpop.permute.xlu0 %2053
    %v2056 = vmul.f32 %v2038, %v2054
    %2058 = vrot.lane.b32.xlu0 %v1960, 32
    %v2059 = vpop.permute.xlu0 %2058
    %v2060 = vsel %vm153, %v2059, 0
    %2062 = vmatprep.subr.mxu0 0.0
    %2063 = vmatpush1.msra.mxu0 %v326
    %2064 = vmatprep.subr.mxu0 0.0
    %2065 = vmatpush1.msra.mxu0 %v327
    %2066 = vmatprep.subr.mxu0 0.0
    %2067 = vmatpush1.msra.mxu0 %v328
    %2068 = vmatprep.subr.mxu0 0.0
    %2069 = vmatpush1.msra.mxu0 %v329
    %2070 = vmatprep.subr.mxu0 0.0
    %2071 = vmatpush1.msra.mxu0 0.0
    %2072 = vmatprep.subr.mxu0 0.0
    %2073 = vmatpush1.msra.mxu0 0.0
    %2074 = vmatprep.subr.mxu0 0.0
    %2075 = vmatpush1.msra.mxu0 0.0
    %2076 = vmatprep.subr.mxu0 0.0
    %2077 = vmatpush1.msra.mxu0 0.0
    %2078 = vmatprep.subr.mxu0 0.0
    %2079 = vmatpush1.msra.mxu0 0.0
    %2080 = vmatprep.subr.mxu0 0.0
    %2081 = vmatpush1.msra.mxu0 0.0
    %2082 = vmatprep.subr.mxu0 0.0
    %2083 = vmatpush1.msra.mxu0 0.0
    %2084 = vmatprep.subr.mxu0 0.0
    %2085 = vmatpush1.msra.mxu0 0.0
    %2086 = vmatprep.subr.mxu0 0.0
    %2087 = vmatpush1.msra.mxu0 0.0
    %2088 = vmatprep.subr.mxu0 0.0
    %2089 = vmatpush1.msra.mxu0 0.0
    %2090 = vmatprep.subr.mxu0 0.0
    %2091 = vmatpush1.msra.mxu0 0.0
    %2092 = vmatprep.subr.mxu0 0.0
    %2093 = vmatpush1.msra.mxu0 0.0
    %2094 = vmatprep.subr.mxu0 0.0
    %2095 = vmatpush1.msra.mxu0 0.0
    %2096 = vmatprep.subr.mxu0 0.0
    %2097 = vmatpush1.msra.mxu0 0.0
    %2098 = vmatprep.subr.mxu0 0.0
    %2099 = vmatpush1.msra.mxu0 0.0
    %2100 = vmatprep.subr.mxu0 0.0
    %2101 = vmatpush1.msra.mxu0 0.0
    %2102 = vmatprep.subr.mxu0 0.0
    %2103 = vmatpush1.msra.mxu0 0.0
    %2104 = vmatprep.subr.mxu0 0.0
    %2105 = vmatpush1.msra.mxu0 0.0
    %2106 = vmatprep.subr.mxu0 0.0
    %2107 = vmatpush1.msra.mxu0 0.0
    %2108 = vmatprep.subr.mxu0 0.0
    %2109 = vmatpush1.msra.mxu0 0.0
    %2110 = vmatprep.subr.mxu0 0.0
    %2111 = vmatpush1.msra.mxu0 0.0
    %2112 = vmatprep.subr.mxu0 0.0
    %2113 = vmatpush1.msra.mxu0 0.0
    %2114 = vmatprep.subr.mxu0 0.0
    %2115 = vmatpush1.msra.mxu0 0.0
    %2116 = vmatprep.subr.mxu0 0.0
    %2117 = vmatpush1.msra.mxu0 0.0
    %2118 = vmatprep.subr.mxu0 0.0
    %2119 = vmatpush1.msra.mxu0 0.0
    %2120 = vmatprep.subr.mxu0 0.0
    %2121 = vmatpush1.msra.mxu0 0.0
    %2122 = vmatprep.subr.mxu0 0.0
    %2123 = vmatpush1.msra.mxu0 0.0
    %2124 = vmatprep.subr.mxu0 0.0
    %2125 = vmatpush1.msra.mxu0 0.0
    %2126 = vmatprep.mubr.f32.mxu0 0.0
    %2127 = vmatmul.mubr.f32.gmra.mrb[0].mxu0 %v2060
    %v2128 = vpop.f32.mrb[0].mxu0
    %v2129 = vadd.f32 0.0, %v2128
    %v2130 = vpop.f32.mrb[0].mxu0
    %2131 = vdwg.mxu0
    %2133 = vrot.lane.b32.xlu0 %v2056, 32
    %v2134 = vpop.permute.xlu0 %2133
    %v2135 = vsel %vm153, %v2134, 0
    %2137 = vmatprep.subr.mxu0 0.0
    %2138 = vmatpush1.msra.mxu0 %v322
    %2139 = vmatprep.subr.mxu0 0.0
    %2140 = vmatpush1.msra.mxu0 %v323
    %2141 = vmatprep.subr.mxu0 0.0
    %2142 = vmatpush1.msra.mxu0 %v324
    %2143 = vmatprep.subr.mxu0 0.0
    %2144 = vmatpush1.msra.mxu0 %v325
    %2145 = vmatprep.subr.mxu0 0.0
    %2146 = vmatpush1.msra.mxu0 0.0
    %2147 = vmatprep.subr.mxu0 0.0
    %2148 = vmatpush1.msra.mxu0 0.0
    %2149 = vmatprep.subr.mxu0 0.0
    %2150 = vmatpush1.msra.mxu0 0.0
    %2151 = vmatprep.subr.mxu0 0.0
    %2152 = vmatpush1.msra.mxu0 0.0
    %2153 = vmatprep.subr.mxu0 0.0
    %2154 = vmatpush1.msra.mxu0 0.0
    %2155 = vmatprep.subr.mxu0 0.0
    %2156 = vmatpush1.msra.mxu0 0.0
    %2157 = vmatprep.subr.mxu0 0.0
    %2158 = vmatpush1.msra.mxu0 0.0
    %2159 = vmatprep.subr.mxu0 0.0
    %2160 = vmatpush1.msra.mxu0 0.0
    %2161 = vmatprep.subr.mxu0 0.0
    %2162 = vmatpush1.msra.mxu0 0.0
    %2163 = vmatprep.subr.mxu0 0.0
    %2164 = vmatpush1.msra.mxu0 0.0
    %2165 = vmatprep.subr.mxu0 0.0
    %2166 = vmatpush1.msra.mxu0 0.0
    %2167 = vmatprep.subr.mxu0 0.0
    %2168 = vmatpush1.msra.mxu0 0.0
    %2169 = vmatprep.subr.mxu0 0.0
    %2170 = vmatpush1.msra.mxu0 0.0
    %2171 = vmatprep.subr.mxu0 0.0
    %2172 = vmatpush1.msra.mxu0 0.0
    %2173 = vmatprep.subr.mxu0 0.0
    %2174 = vmatpush1.msra.mxu0 0.0
    %2175 = vmatprep.subr.mxu0 0.0
    %2176 = vmatpush1.msra.mxu0 0.0
    %2177 = vmatprep.subr.mxu0 0.0
    %2178 = vmatpush1.msra.mxu0 0.0
    %2179 = vmatprep.subr.mxu0 0.0
    %2180 = vmatpush1.msra.mxu0 0.0
    %2181 = vmatprep.subr.mxu0 0.0
    %2182 = vmatpush1.msra.mxu0 0.0
    %2183 = vmatprep.subr.mxu0 0.0
    %2184 = vmatpush1.msra.mxu0 0.0
    %2185 = vmatprep.subr.mxu0 0.0
    %2186 = vmatpush1.msra.mxu0 0.0
    %2187 = vmatprep.subr.mxu0 0.0
    %2188 = vmatpush1.msra.mxu0 0.0
    %2189 = vmatprep.subr.mxu0 0.0
    %2190 = vmatpush1.msra.mxu0 0.0
    %2191 = vmatprep.subr.mxu0 0.0
    %2192 = vmatpush1.msra.mxu0 0.0
    %2193 = vmatprep.subr.mxu0 0.0
    %2194 = vmatpush1.msra.mxu0 0.0
    %2195 = vmatprep.subr.mxu0 0.0
    %2196 = vmatpush1.msra.mxu0 0.0
    %2197 = vmatprep.subr.mxu0 0.0
    %2198 = vmatpush1.msra.mxu0 0.0
    %2199 = vmatprep.subr.mxu0 0.0
    %2200 = vmatpush1.msra.mxu0 0.0
    %2201 = vmatprep.mubr.f32.mxu0 0.0
    %2202 = vmatmul.mubr.f32.gmra.mrb[0].mxu0 %v2135
    %v2203 = vpop.f32.mrb[0].mxu0
    %v2204 = vadd.f32 %v2129, %v2203
    %v2205 = vpop.f32.mrb[0].mxu0
    %2206 = vdwg.mxu0
    %v2207 = vadd.f32 %v2204, %v579
    %v2208 = vxor.u32 %v2207, 2147483648
    %v2209 = vmul.f32 %v2208, 1.442695
    %v2210 = vpow.pop %v2209
    %v2211 = vadd.f32 %v2210, 1.0
    %v2212 = vrcp.pop %v2211
    %v2213 = vmul.f32 1.0, %v2212
    %v2214 = vtanh.pop %v2207
    %v2215 = vmul.f32 %v2213, %v1954
    %2217 = vrot.lane.b32.xlu0 %v2214, 64
    %v2218 = vpop.permute.xlu0 %2217
    %v2220 = vmul.f32 %v2213, %v2218
    %2222 = vrot.lane.b32.xlu0 %v2220, 32
    %v2223 = vpop.permute.xlu0 %2222
    %v2225 = vadd.f32 %v2215, %v2223
    %v2226 = vtanh.pop %v2225
    %2228 = vrot.lane.b32.xlu0 %v2226, 64
    %v2229 = vpop.permute.xlu0 %2228
    %v2231 = vmul.f32 %v2213, %v2229
    %v2232 = vld [vmem:[#allocation2 + $0x38] sm:$0xff]
    %2233 = vmatprep.subr.mxu0 0.0
    %2234 = vmatpush1.msra.mxu0 %v318
    %2235 = vmatprep.subr.mxu0 0.0
    %2236 = vmatpush1.msra.mxu0 %v319
    %2237 = vmatprep.subr.mxu0 0.0
    %2238 = vmatpush1.msra.mxu0 %v320
    %2239 = vmatprep.subr.mxu0 0.0
    %2240 = vmatpush1.msra.mxu0 %v321
    %2241 = vmatprep.subr.mxu0 0.0
    %2242 = vmatpush1.msra.mxu0 0.0
    %2243 = vmatprep.subr.mxu0 0.0
    %2244 = vmatpush1.msra.mxu0 0.0
    %2245 = vmatprep.subr.mxu0 0.0
    %2246 = vmatpush1.msra.mxu0 0.0
    %2247 = vmatprep.subr.mxu0 0.0
    %2248 = vmatpush1.msra.mxu0 0.0
    %2249 = vmatprep.subr.mxu0 0.0
    %2250 = vmatpush1.msra.mxu0 0.0
    %2251 = vmatprep.subr.mxu0 0.0
    %2252 = vmatpush1.msra.mxu0 0.0
    %2253 = vmatprep.subr.mxu0 0.0
    %2254 = vmatpush1.msra.mxu0 0.0
    %2255 = vmatprep.subr.mxu0 0.0
    %2256 = vmatpush1.msra.mxu0 0.0
    %2257 = vmatprep.subr.mxu0 0.0
    %2258 = vmatpush1.msra.mxu0 0.0
    %2259 = vmatprep.subr.mxu0 0.0
    %2260 = vmatpush1.msra.mxu0 0.0
    %2261 = vmatprep.subr.mxu0 0.0
    %2262 = vmatpush1.msra.mxu0 0.0
    %2263 = vmatprep.subr.mxu0 0.0
    %2264 = vmatpush1.msra.mxu0 0.0
    %2265 = vmatprep.subr.mxu0 0.0
    %2266 = vmatpush1.msra.mxu0 0.0
    %2267 = vmatprep.subr.mxu0 0.0
    %2268 = vmatpush1.msra.mxu0 0.0
    %2269 = vmatprep.subr.mxu0 0.0
    %2270 = vmatpush1.msra.mxu0 0.0
    %2271 = vmatprep.subr.mxu0 0.0
    %2272 = vmatpush1.msra.mxu0 0.0
    %2273 = vmatprep.subr.mxu0 0.0
    %2274 = vmatpush1.msra.mxu0 0.0
    %2275 = vmatprep.subr.mxu0 0.0
    %2276 = vmatpush1.msra.mxu0 0.0
    %2277 = vmatprep.subr.mxu0 0.0
    %2278 = vmatpush1.msra.mxu0 0.0
    %2279 = vmatprep.subr.mxu0 0.0
    %2280 = vmatpush1.msra.mxu0 0.0
    %2281 = vmatprep.subr.mxu0 0.0
    %2282 = vmatpush1.msra.mxu0 0.0
    %2283 = vmatprep.subr.mxu0 0.0
    %2284 = vmatpush1.msra.mxu0 0.0
    %2285 = vmatprep.subr.mxu0 0.0
    %2286 = vmatpush1.msra.mxu0 0.0
    %2287 = vmatprep.subr.mxu0 0.0
    %2288 = vmatpush1.msra.mxu0 0.0
    %2289 = vmatprep.subr.mxu0 0.0
    %2290 = vmatpush1.msra.mxu0 0.0
    %2291 = vmatprep.subr.mxu0 0.0
    %2292 = vmatpush1.msra.mxu0 0.0
    %2293 = vmatprep.subr.mxu0 0.0
    %2294 = vmatpush1.msra.mxu0 0.0
    %2295 = vmatprep.subr.mxu0 0.0
    %2296 = vmatpush1.msra.mxu0 0.0
    %2297 = vmatprep.mubr.f32.mxu0 0.0
    %2298 = vmatmul.mubr.f32.gmra.mrb[0].mxu0 %v2135
    %v2299 = vpop.f32.mrb[0].mxu0
    %v2300 = vadd.f32 0.0, %v2299
    %v2301 = vpop.f32.mrb[0].mxu0
    %2302 = vdwg.mxu0
    %v2303 = vadd.f32 %v2232, %v2300
    %v2304 = vxor.u32 %v2303, 2147483648
    %v2305 = vmul.f32 %v2304, 1.442695
    %v2306 = vpow.pop %v2305
    %v2307 = vadd.f32 %v2306, 1.0
    %v2308 = vrcp.pop %v2307
    %v2309 = vmul.f32 1.0, %v2308
    %v2310 = vtanh.pop %v2303
    %v2311 = vmul.f32 %v2309, %v2050
    %2313 = vrot.lane.b32.xlu0 %v2310, 64
    %v2314 = vpop.permute.xlu0 %2313
    %v2316 = vmul.f32 %v2309, %v2314
    %2318 = vrot.lane.b32.xlu0 %v2316, 32
    %v2319 = vpop.permute.xlu0 %2318
    %v2321 = vadd.f32 %v2311, %v2319
    %v2322 = vtanh.pop %v2321
    %2324 = vrot.lane.b32.xlu0 %v2322, 64
    %v2325 = vpop.permute.xlu0 %2324
    %v2327 = vmul.f32 %v2309, %v2325
    %2329 = vrot.lane.b32.xlu0 %v2231, 32
    %v2330 = vpop.permute.xlu0 %2329
    %v2331 = vsel %vm153, %v2330, 0
    %2333 = vmatprep.subr.mxu0 0.0
    %2334 = vmatpush1.msra.mxu0 %v326
    %2335 = vmatprep.subr.mxu0 0.0
    %2336 = vmatpush1.msra.mxu0 %v327
    %2337 = vmatprep.subr.mxu0 0.0
    %2338 = vmatpush1.msra.mxu0 %v328
    %2339 = vmatprep.subr.mxu0 0.0
    %2340 = vmatpush1.msra.mxu0 %v329
    %2341 = vmatprep.subr.mxu0 0.0
    %2342 = vmatpush1.msra.mxu0 0.0
    %2343 = vmatprep.subr.mxu0 0.0
    %2344 = vmatpush1.msra.mxu0 0.0
    %2345 = vmatprep.subr.mxu0 0.0
    %2346 = vmatpush1.msra.mxu0 0.0
    %2347 = vmatprep.subr.mxu0 0.0
    %2348 = vmatpush1.msra.mxu0 0.0
    %2349 = vmatprep.subr.mxu0 0.0
    %2350 = vmatpush1.msra.mxu0 0.0
    %2351 = vmatprep.subr.mxu0 0.0
    %2352 = vmatpush1.msra.mxu0 0.0
    %2353 = vmatprep.subr.mxu0 0.0
    %2354 = vmatpush1.msra.mxu0 0.0
    %2355 = vmatprep.subr.mxu0 0.0
    %2356 = vmatpush1.msra.mxu0 0.0
    %2357 = vmatprep.subr.mxu0 0.0
    %2358 = vmatpush1.msra.mxu0 0.0
    %2359 = vmatprep.subr.mxu0 0.0
    %2360 = vmatpush1.msra.mxu0 0.0
    %2361 = vmatprep.subr.mxu0 0.0
    %2362 = vmatpush1.msra.mxu0 0.0
    %2363 = vmatprep.subr.mxu0 0.0
    %2364 = vmatpush1.msra.mxu0 0.0
    %2365 = vmatprep.subr.mxu0 0.0
    %2366 = vmatpush1.msra.mxu0 0.0
    %2367 = vmatprep.subr.mxu0 0.0
    %2368 = vmatpush1.msra.mxu0 0.0
    %2369 = vmatprep.subr.mxu0 0.0
    %2370 = vmatpush1.msra.mxu0 0.0
    %2371 = vmatprep.subr.mxu0 0.0
    %2372 = vmatpush1.msra.mxu0 0.0
    %2373 = vmatprep.subr.mxu0 0.0
    %2374 = vmatpush1.msra.mxu0 0.0
    %2375 = vmatprep.subr.mxu0 0.0
    %2376 = vmatpush1.msra.mxu0 0.0
    %2377 = vmatprep.subr.mxu0 0.0
    %2378 = vmatpush1.msra.mxu0 0.0
    %2379 = vmatprep.subr.mxu0 0.0
    %2380 = vmatpush1.msra.mxu0 0.0
    %2381 = vmatprep.subr.mxu0 0.0
    %2382 = vmatpush1.msra.mxu0 0.0
    %2383 = vmatprep.subr.mxu0 0.0
    %2384 = vmatpush1.msra.mxu0 0.0
    %2385 = vmatprep.subr.mxu0 0.0
    %2386 = vmatpush1.msra.mxu0 0.0
    %2387 = vmatprep.subr.mxu0 0.0
    %2388 = vmatpush1.msra.mxu0 0.0
    %2389 = vmatprep.subr.mxu0 0.0
    %2390 = vmatpush1.msra.mxu0 0.0
    %2391 = vmatprep.subr.mxu0 0.0
    %2392 = vmatpush1.msra.mxu0 0.0
    %2393 = vmatprep.subr.mxu0 0.0
    %2394 = vmatpush1.msra.mxu0 0.0
    %2395 = vmatprep.subr.mxu0 0.0
    %2396 = vmatpush1.msra.mxu0 0.0
    %2397 = vmatprep.mubr.f32.mxu0 0.0
    %2398 = vmatmul.mubr.f32.gmra.mrb[0].mxu0 %v2331
    %v2399 = vpop.f32.mrb[0].mxu0
    %v2400 = vadd.f32 0.0, %v2399
    %v2401 = vpop.f32.mrb[0].mxu0
    %2402 = vdwg.mxu0
    %2404 = vrot.lane.b32.xlu0 %v2327, 32
    %v2405 = vpop.permute.xlu0 %2404
    %v2406 = vsel %vm153, %v2405, 0
    %2408 = vmatprep.subr.mxu0 0.0
    %2409 = vmatpush1.msra.mxu0 %v322
    %2410 = vmatprep.subr.mxu0 0.0
    %2411 = vmatpush1.msra.mxu0 %v323
    %2412 = vmatprep.subr.mxu0 0.0
    %2413 = vmatpush1.msra.mxu0 %v324
    %2414 = vmatprep.subr.mxu0 0.0
    %2415 = vmatpush1.msra.mxu0 %v325
    %2416 = vmatprep.subr.mxu0 0.0
    %2417 = vmatpush1.msra.mxu0 0.0
    %2418 = vmatprep.subr.mxu0 0.0
    %2419 = vmatpush1.msra.mxu0 0.0
    %2420 = vmatprep.subr.mxu0 0.0
    %2421 = vmatpush1.msra.mxu0 0.0
    %2422 = vmatprep.subr.mxu0 0.0
    %2423 = vmatpush1.msra.mxu0 0.0
    %2424 = vmatprep.subr.mxu0 0.0
    %2425 = vmatpush1.msra.mxu0 0.0
    %2426 = vmatprep.subr.mxu0 0.0
    %2427 = vmatpush1.msra.mxu0 0.0
    %2428 = vmatprep.subr.mxu0 0.0
    %2429 = vmatpush1.msra.mxu0 0.0
    %2430 = vmatprep.subr.mxu0 0.0
    %2431 = vmatpush1.msra.mxu0 0.0
    %2432 = vmatprep.subr.mxu0 0.0
    %2433 = vmatpush1.msra.mxu0 0.0
    %2434 = vmatprep.subr.mxu0 0.0
    %2435 = vmatpush1.msra.mxu0 0.0
    %2436 = vmatprep.subr.mxu0 0.0
    %2437 = vmatpush1.msra.mxu0 0.0
    %2438 = vmatprep.subr.mxu0 0.0
    %2439 = vmatpush1.msra.mxu0 0.0
    %2440 = vmatprep.subr.mxu0 0.0
    %2441 = vmatpush1.msra.mxu0 0.0
    %2442 = vmatprep.subr.mxu0 0.0
    %2443 = vmatpush1.msra.mxu0 0.0
    %2444 = vmatprep.subr.mxu0 0.0
    %2445 = vmatpush1.msra.mxu0 0.0
    %2446 = vmatprep.subr.mxu0 0.0
    %2447 = vmatpush1.msra.mxu0 0.0
    %2448 = vmatprep.subr.mxu0 0.0
    %2449 = vmatpush1.msra.mxu0 0.0
    %2450 = vmatprep.subr.mxu0 0.0
    %2451 = vmatpush1.msra.mxu0 0.0
    %2452 = vmatprep.subr.mxu0 0.0
    %2453 = vmatpush1.msra.mxu0 0.0
    %2454 = vmatprep.subr.mxu0 0.0
    %2455 = vmatpush1.msra.mxu0 0.0
    %2456 = vmatprep.subr.mxu0 0.0
    %2457 = vmatpush1.msra.mxu0 0.0
    %2458 = vmatprep.subr.mxu0 0.0
    %2459 = vmatpush1.msra.mxu0 0.0
    %2460 = vmatprep.subr.mxu0 0.0
    %2461 = vmatpush1.msra.mxu0 0.0
    %2462 = vmatprep.subr.mxu0 0.0
    %2463 = vmatpush1.msra.mxu0 0.0
    %2464 = vmatprep.subr.mxu0 0.0
    %2465 = vmatpush1.msra.mxu0 0.0
    %2466 = vmatprep.subr.mxu0 0.0
    %2467 = vmatpush1.msra.mxu0 0.0
    %2468 = vmatprep.subr.mxu0 0.0
    %2469 = vmatpush1.msra.mxu0 0.0
    %2470 = vmatprep.subr.mxu0 0.0
    %2471 = vmatpush1.msra.mxu0 0.0
    %2472 = vmatprep.mubr.f32.mxu0 0.0
    %2473 = vmatmul.mubr.f32.gmra.mrb[0].mxu0 %v2406
    %v2474 = vpop.f32.mrb[0].mxu0
    %v2475 = vadd.f32 %v2400, %v2474
    %v2476 = vpop.f32.mrb[0].mxu0
    %2477 = vdwg.mxu0
    %v2478 = vadd.f32 %v2475, %v579
    %v2479 = vxor.u32 %v2478, 2147483648
    %v2480 = vmul.f32 %v2479, 1.442695
    %v2481 = vpow.pop %v2480
    %v2482 = vadd.f32 %v2481, 1.0
    %v2483 = vrcp.pop %v2482
    %v2484 = vmul.f32 1.0, %v2483
    %v2485 = vtanh.pop %v2478
    %v2486 = vmul.f32 %v2484, %v2225
    %2488 = vrot.lane.b32.xlu0 %v2485, 64
    %v2489 = vpop.permute.xlu0 %2488
    %v2491 = vmul.f32 %v2484, %v2489
    %2493 = vrot.lane.b32.xlu0 %v2491, 32
    %v2494 = vpop.permute.xlu0 %2493
    %v2496 = vadd.f32 %v2486, %v2494
    %v2497 = vtanh.pop %v2496
    %2499 = vrot.lane.b32.xlu0 %v2497, 64
    %v2500 = vpop.permute.xlu0 %2499
    %v2502 = vmul.f32 %v2484, %v2500
    %v2503 = vld [vmem:[%s9] sm:$0xff]
    %v2504 = vld [vmem:[%s9 + $0x8] sm:$0xff]
    %v2505 = vld [vmem:[%s9 + $0x10] sm:$0xff]
    %v2506 = vld [vmem:[%s9 + $0x18] sm:$0xff]
    %v2507 = vld [vmem:[%s10] sm:$0x1]
    %v2508 = vrot.slane %v876, 7
    %v2510 = vrot.slane %v1147, 6
    %v2512 = vrot.slane %v1418, 5
    %v2514 = vrot.slane %v1689, 4
    %v2516 = vrot.slane %v1960, 3
    %v2518 = vrot.slane %v2231, 2
    %v2521 = vrot.slane %v2502, 1
    %vm2523 = vcmask 1040384
    %v2524 = vsel %vm2523, %v605, %v2508
    %vm2525 = vcmask 1041408
    %v2526 = vsel %vm2525, %v2524, %v2510
    %vm2527 = vcmask 1042432
    %v2528 = vsel %vm2527, %v2526, %v2512
    %vm2529 = vcmask 1043456
    %v2530 = vsel %vm2529, %v2528, %v2514
    %vm2531 = vcmask 1044480
    %v2532 = vsel %vm2531, %v2530, %v2516
    %vm2533 = vcmask 1045504
    %v2534 = vsel %vm2533, %v2532, %v2518
    %vm2535 = vcmask 1046528
    %v2536 = vsel %vm2535, %v2534, %v2521
    %v2538 = vlaneseq
    %v2539 = vshrl.u32 %v2538, 7
    %v2540 = vsub.s32 0, %v2539
    %v2541 = vrot.slane %v2507, %v2540
    %2544 = vrot.lane.b32.xlu0 %v2536, 32
    %v2545 = vpop.permute.xlu0 %2544
    %v2546 = vsel %vm153, %v2545, 0
    %2548 = vmatprep.subr.mxu0 0.0
    %2549 = vmatpush1.msra.mxu0 %v2503
    %2550 = vmatprep.subr.mxu0 0.0
    %2551 = vmatpush1.msra.mxu0 %v2504
    %2552 = vmatprep.subr.mxu0 0.0
    %2553 = vmatpush1.msra.mxu0 %v2505
    %2554 = vmatprep.subr.mxu0 0.0
    %2555 = vmatpush1.msra.mxu0 %v2506
    %2556 = vmatprep.subr.mxu0 0.0
    %2557 = vmatpush1.msra.mxu0 0.0
    %2558 = vmatprep.subr.mxu0 0.0
    %2559 = vmatpush1.msra.mxu0 0.0
    %2560 = vmatprep.subr.mxu0 0.0
    %2561 = vmatpush1.msra.mxu0 0.0
    %2562 = vmatprep.subr.mxu0 0.0
    %2563 = vmatpush1.msra.mxu0 0.0
    %2564 = vmatprep.subr.mxu0 0.0
    %2565 = vmatpush1.msra.mxu0 0.0
    %2566 = vmatprep.subr.mxu0 0.0
    %2567 = vmatpush1.msra.mxu0 0.0
    %2568 = vmatprep.subr.mxu0 0.0
    %2569 = vmatpush1.msra.mxu0 0.0
    %2570 = vmatprep.subr.mxu0 0.0
    %2571 = vmatpush1.msra.mxu0 0.0
    %2572 = vmatprep.subr.mxu0 0.0
    %2573 = vmatpush1.msra.mxu0 0.0
    %2574 = vmatprep.subr.mxu0 0.0
    %2575 = vmatpush1.msra.mxu0 0.0
    %2576 = vmatprep.subr.mxu0 0.0
    %2577 = vmatpush1.msra.mxu0 0.0
    %2578 = vmatprep.subr.mxu0 0.0
    %2579 = vmatpush1.msra.mxu0 0.0
    %2580 = vmatprep.subr.mxu0 0.0
    %2581 = vmatpush1.msra.mxu0 0.0
    %2582 = vmatprep.subr.mxu0 0.0
    %2583 = vmatpush1.msra.mxu0 0.0
    %2584 = vmatprep.subr.mxu0 0.0
    %2585 = vmatpush1.msra.mxu0 0.0
    %2586 = vmatprep.subr.mxu0 0.0
    %2587 = vmatpush1.msra.mxu0 0.0
    %2588 = vmatprep.subr.mxu0 0.0
    %2589 = vmatpush1.msra.mxu0 0.0
    %2590 = vmatprep.subr.mxu0 0.0
    %2591 = vmatpush1.msra.mxu0 0.0
    %2592 = vmatprep.subr.mxu0 0.0
    %2593 = vmatpush1.msra.mxu0 0.0
    %2594 = vmatprep.subr.mxu0 0.0
    %2595 = vmatpush1.msra.mxu0 0.0
    %2596 = vmatprep.subr.mxu0 0.0
    %2597 = vmatpush1.msra.mxu0 0.0
    %2598 = vmatprep.subr.mxu0 0.0
    %2599 = vmatpush1.msra.mxu0 0.0
    %2600 = vmatprep.subr.mxu0 0.0
    %2601 = vmatpush1.msra.mxu0 0.0
    %2602 = vmatprep.subr.mxu0 0.0
    %2603 = vmatpush1.msra.mxu0 0.0
    %2604 = vmatprep.subr.mxu0 0.0
    %2605 = vmatpush1.msra.mxu0 0.0
    %2606 = vmatprep.subr.mxu0 0.0
    %2607 = vmatpush1.msra.mxu0 0.0
    %2608 = vmatprep.subr.mxu0 0.0
    %2609 = vmatpush1.msra.mxu0 0.0
    %2610 = vmatprep.subr.mxu0 0.0
    %2611 = vmatpush1.msra.mxu0 0.0
    %2612 = vmatprep.mubr.f32.mxu0 0.0
    %2613 = vmatmul.mubr.f32.gmra.mrb[0].mxu0 %v2546
    %v2614 = vpop.f32.mrb[0].mxu0
    %v2615 = vadd.f32 %v2541, %v2614
    %v2616 = vpop.f32.mrb[0].mxu0
    %2617 = vdwg.mxu0
    %vm2618 = vcmask 523264
    %2619 = vst.msk [vmem:[#allocation17] sm:$0xff] %vm2618, %v2615
    %v2620 = vrot.slane %v605, 1
    %v2622 = vrot.slane %v1147, 7
    %v2624 = vrot.slane %v1418, 6
    %v2626 = vrot.slane %v1689, 5
    %v2628 = vrot.slane %v1960, 4
    %v2630 = vrot.slane %v2231, 3
    %v2632 = vrot.slane %v2502, 2
    %v2634 = vsel %vm2523, %v2620, %v876
    %v2635 = vsel %vm2525, %v2634, %v2622
    %v2636 = vsel %vm2527, %v2635, %v2624
    %v2637 = vsel %vm2529, %v2636, %v2626
    %v2638 = vsel %vm2531, %v2637, %v2628
    %v2639 = vsel %vm2533, %v2638, %v2630
    %v2640 = vsel %vm2535, %v2639, %v2632
    %2642 = vrot.lane.b32.xlu0 %v2640, 32
    %v2643 = vpop.permute.xlu0 %2642
    %v2644 = vsel %vm153, %v2643, 0
    %2646 = vmatprep.subr.mxu0 0.0
    %2647 = vmatpush1.msra.mxu0 %v2503
    %2648 = vmatprep.subr.mxu0 0.0
    %2649 = vmatpush1.msra.mxu0 %v2504
    %2650 = vmatprep.subr.mxu0 0.0
    %2651 = vmatpush1.msra.mxu0 %v2505
    %2652 = vmatprep.subr.mxu0 0.0
    %2653 = vmatpush1.msra.mxu0 %v2506
    %2654 = vmatprep.subr.mxu0 0.0
    %2655 = vmatpush1.msra.mxu0 0.0
    %2656 = vmatprep.subr.mxu0 0.0
    %2657 = vmatpush1.msra.mxu0 0.0
    %2658 = vmatprep.subr.mxu0 0.0
    %2659 = vmatpush1.msra.mxu0 0.0
    %2660 = vmatprep.subr.mxu0 0.0
    %2661 = vmatpush1.msra.mxu0 0.0
    %2662 = vmatprep.subr.mxu0 0.0
    %2663 = vmatpush1.msra.mxu0 0.0
    %2664 = vmatprep.subr.mxu0 0.0
    %2665 = vmatpush1.msra.mxu0 0.0
    %2666 = vmatprep.subr.mxu0 0.0
    %2667 = vmatpush1.msra.mxu0 0.0
    %2668 = vmatprep.subr.mxu0 0.0
    %2669 = vmatpush1.msra.mxu0 0.0
    %2670 = vmatprep.subr.mxu0 0.0
    %2671 = vmatpush1.msra.mxu0 0.0
    %2672 = vmatprep.subr.mxu0 0.0
    %2673 = vmatpush1.msra.mxu0 0.0
    %2674 = vmatprep.subr.mxu0 0.0
    %2675 = vmatpush1.msra.mxu0 0.0
    %2676 = vmatprep.subr.mxu0 0.0
    %2677 = vmatpush1.msra.mxu0 0.0
    %2678 = vmatprep.subr.mxu0 0.0
    %2679 = vmatpush1.msra.mxu0 0.0
    %2680 = vmatprep.subr.mxu0 0.0
    %2681 = vmatpush1.msra.mxu0 0.0
    %2682 = vmatprep.subr.mxu0 0.0
    %2683 = vmatpush1.msra.mxu0 0.0
    %2684 = vmatprep.subr.mxu0 0.0
    %2685 = vmatpush1.msra.mxu0 0.0
    %2686 = vmatprep.subr.mxu0 0.0
    %2687 = vmatpush1.msra.mxu0 0.0
    %2688 = vmatprep.subr.mxu0 0.0
    %2689 = vmatpush1.msra.mxu0 0.0
    %2690 = vmatprep.subr.mxu0 0.0
    %2691 = vmatpush1.msra.mxu0 0.0
    %2692 = vmatprep.subr.mxu0 0.0
    %2693 = vmatpush1.msra.mxu0 0.0
    %2694 = vmatprep.subr.mxu0 0.0
    %2695 = vmatpush1.msra.mxu0 0.0
    %2696 = vmatprep.subr.mxu0 0.0
    %2697 = vmatpush1.msra.mxu0 0.0
    %2698 = vmatprep.subr.mxu0 0.0
    %2699 = vmatpush1.msra.mxu0 0.0
    %2700 = vmatprep.subr.mxu0 0.0
    %2701 = vmatpush1.msra.mxu0 0.0
    %2702 = vmatprep.subr.mxu0 0.0
    %2703 = vmatpush1.msra.mxu0 0.0
    %2704 = vmatprep.subr.mxu0 0.0
    %2705 = vmatpush1.msra.mxu0 0.0
    %2706 = vmatprep.subr.mxu0 0.0
    %2707 = vmatpush1.msra.mxu0 0.0
    %2708 = vmatprep.subr.mxu0 0.0
    %2709 = vmatpush1.msra.mxu0 0.0
    %2710 = vmatprep.mubr.f32.mxu0 0.0
    %2711 = vmatmul.mubr.f32.gmra.mrb[0].mxu0 %v2644
    %v2712 = vpop.f32.mrb[0].mxu0
    %v2713 = vadd.f32 %v2541, %v2712
    %v2714 = vpop.f32.mrb[0].mxu0
    %2715 = vdwg.mxu0
    %s2716 = scalar_lea.vmem [#allocation17], 8
    %2717 = vst.msk [vmem:[%s2716] sm:$0xff] %vm2618, %v2713
    // Predicated region
    $region78: #{tpu_custom_call.1} parent=1 // pred_check
      _
    $region79: #{tpu_custom_call.1} parent=1 // pred_check_branch
      %2719 = sbr.rel (0) target = $region81
    $region80: #{tpu_custom_call.1} parent=1 // pred_region
      %s2721 = ssub.s32 256, 256
      %2722 = vsyncadd [#allocation5], %s2721
      %s2723 = sshll.u32 [#allocation17], 4
      %s2724 = int_to_ptr.vmem [resolvable:$true] %s2723
      %2729 = dma.vmem_to_hbm [thread:$0]  %s2724, 256, %s11, [#allocation5], 128, 128, 8
    $region81: #{tpu_custom_call.1} parent=1 // pred_fallthru
      _
    // Predicated region
    $region82: #{tpu_custom_call.1} parent=1 // pred_check
      _
    $region83: #{tpu_custom_call.1} parent=1 // pred_check_branch
      %2731 = sbr.rel (0) target = $region85
    $region84: #{tpu_custom_call.1} parent=1 // pred_region
      %2732 = dma.done [#allocation5], 256
    $region85: #{tpu_custom_call.1} parent=1 // pred_fallthru
      _
    %2733 = vsyncpa [#allocation4], 1
    %2734 = vsyncpa [#allocation9], 1
    %2735 = vsyncpa [#allocation12], 1
    %2736 = vsyncpa [#allocation15], 1
    %2737 = vsyncpa [#allocation5], 1
    %2738 = vsyncpa [#allocation6], 1

</llo_original>
